<compile_context>
chip_gen: v6e
topology: v6e:2x2x1
jax: 0.10.0
libtpu: 0.0.40
codegen_flags: <defaults>
</compile_context>

<pallas_src>
import math

import jax
import jax.numpy as jnp
from jax import lax
from jax.experimental import pallas as pl
from jax.experimental.pallas import tpu as pltpu  # noqa: F401  (kept for convention)


# ----------------------------------------------------------------------------
# Fused kernel: input projection + BiLSTM recurrences + attention + convs +
# final linear score, all in one pallas_call (everything stays in VMEM/vregs).
# ----------------------------------------------------------------------------
def _make_fused_kernel(B, Bp, Lq, Lw, Lr, H):
    H1, H2, H4, H6, H8 = H, 2 * H, 4 * H, 6 * H, 8 * H
    R = Lr + Lw
    Tmin = min(Lq, Lw)
    D = abs(Lq - Lw)
    OFF_TAIL = Tmin * 2 * Bp
    OFF_RELA = OFF_TAIL + D * Bp
    inv_sqrt_r = 1.0 / math.sqrt(R)

    def kernel(emb_ref, wih_ref, bias_ref, whh_ref, W_ref,
               w1_ref, b1_ref, w2_ref, b2_ref, w3_ref, b3_ref, lin_ref,
               out_ref):
        # ---- one matmul for every sequence / step / direction (bf16 -> f32) ----
        xp = (jnp.dot(emb_ref[...], wih_ref[...],
                      preferred_element_type=jnp.float32) + bias_ref[...])
        whh = whh_ref[...]                           # (2H, 8H) bf16, gate-grouped

        def cell(xg, h, c):
            # xg: (n, 8H) f32 gate inputs; h, c: (n, 2H) f32 ([fwd H | bwd H]).
            gates = xg + jnp.dot(h.astype(jnp.bfloat16), whh,
                                 preferred_element_type=jnp.float32)
            i = jax.nn.sigmoid(gates[:, 0:H2])       # [i_f | i_b]
            f = jax.nn.sigmoid(gates[:, H2:H4])      # [f_f | f_b]
            g = jnp.tanh(gates[:, H4:H6])            # [g_f | g_b]
            o = jax.nn.sigmoid(gates[:, H6:H8])      # [o_f | o_b]
            c = f * c + i * g
            h = o * jnp.tanh(c)
            return h, c

        # ---- joint phase: question (rows 0:Bp) and word (rows Bp:2Bp) ----
        h = jnp.zeros((2 * Bp, H2), jnp.float32)
        c = jnp.zeros((2 * Bp, H2), jnp.float32)
        q_steps, w_steps = [], []
        for t in range(Tmin):                        # static -> fully unrolled
            h, c = cell(xp[t * 2 * Bp:(t + 1) * 2 * Bp, :], h, c)
            q_steps.append(h[0:Bp])
            w_steps.append(h[Bp:2 * Bp])

        h_q, c_q = h[0:Bp], c[0:Bp]
        h_w, c_w = h[Bp:2 * Bp], c[Bp:2 * Bp]

        # ---- tail phase: whichever of question / word is longer ----
        for s in range(D):
            xg = xp[OFF_TAIL + s * Bp:OFF_TAIL + (s + 1) * Bp, :]
            if Lq > Lw:
                h_q, c_q = cell(xg, h_q, c_q)
                q_steps.append(h_q)
            else:
                h_w, c_w = cell(xg, h_w, c_w)
                w_steps.append(h_w)

        # ---- rela phase, seeded with word_relation's final (h, c) ----
        h_r, c_r = h_w, c_w
        r_steps = []
        for t in range(Lr):
            xg = xp[OFF_RELA + t * Bp:OFF_RELA + (t + 1) * Bp, :]
            h_r, c_r = cell(xg, h_r, c_r)
            r_steps.append(h_r)

        # ---- assemble feature-last (Bp, T, 2H) sequence outputs (one-time) ----
        def seq_out(steps):
            out_f = jnp.stack([s[:, 0:H1] for s in steps], axis=1)           # fwd, time asc.
            out_b = jnp.stack([s[:, H1:H2] for s in reversed(steps)], axis=1)  # bwd, time asc.
            return jnp.concatenate([out_f, out_b], axis=2)                   # (Bp, T, 2H)

        q_out = seq_out(q_steps)                                             # (Bp, Lq, 2H)
        rel = jnp.concatenate([seq_out(r_steps), seq_out(w_steps)], axis=1)  # (Bp, R, 2H), rela first

        # ---- attention + convs + score (B is tiny & static -> per-example) ----
        W = W_ref[...]
        w1 = w1_ref[...]
        w2 = w2_ref[...]
        w3 = w3_ref[...]
        b1, b2, b3 = b1_ref[...], b2_ref[...], b3_ref[...]
        lin = lin_ref[...]

        scores = []
        for b in range(B):
            q = q_out[b]                                  # (Lq, 2H) f32
            r = rel[b]                                    # (R, 2H) f32
            qh = q.astype(jnp.bfloat16)
            rh = r.astype(jnp.bfloat16)

            # energy = (relation @ W) @ question_out^T; GLOBAL softmax over the
            # flattened (R, Lq) energy scaled by 1/sqrt(R) (matches reference).
            rw = jnp.dot(rh, W, preferred_element_type=jnp.float32)          # (R, 2H)
            energy = lax.dot_general(rw.astype(jnp.bfloat16), qh,
                                     (((1,), (1,)), ((), ())),
                                     preferred_element_type=jnp.float32)      # (R, Lq)
            scaled = energy * inv_sqrt_r
            m = jnp.max(jnp.max(scaled, axis=1, keepdims=True),
                        axis=0, keepdims=True)
            e = jnp.exp(scaled - m)
            ssum = jnp.sum(jnp.sum(e, axis=1, keepdims=True),
                           axis=0, keepdims=True)
            alpha = e / ssum                                                  # (R, Lq)
            atten = lax.dot_general(alpha.astype(jnp.bfloat16), rh,
                                    (((0,), (0,)), ((), ())),
                                    preferred_element_type=jnp.float32)       # (Lq, 2H)

            Mcat = jnp.concatenate([q, atten], axis=1).astype(jnp.bfloat16)   # (Lq, 4H)

            # Conv1d k=1 + ReLU + global max.
            o1 = jnp.dot(Mcat, w1, preferred_element_type=jnp.float32) + b1
            hmax = jnp.max(jax.nn.relu(o1), axis=0, keepdims=True)            # (1, F)

            # Conv1d k=3: per-tap matmuls + shifted-row accumulation ("valid").
            g3 = [jnp.dot(Mcat, w2[k], preferred_element_type=jnp.float32)
                  for k in range(3)]
            L2 = Lq - 2
            o2 = g3[0][0:L2] + g3[1][1:1 + L2] + g3[2][2:2 + L2] + b2
            hmax = jnp.maximum(hmax,
                               jnp.max(jax.nn.relu(o2), axis=0, keepdims=True))

            # Conv1d k=5.
            g5 = [jnp.dot(Mcat, w3[k], preferred_element_type=jnp.float32)
                  for k in range(5)]
            L3 = Lq - 4
            o3 = (g5[0][0:L3] + g5[1][1:1 + L3] + g5[2][2:2 + L3]
                  + g5[3][3:3 + L3] + g5[4][4:4 + L3] + b3)
            hmax = jnp.maximum(hmax,
                               jnp.max(jax.nn.relu(o3), axis=0, keepdims=True))

            # Final linear (num_filters -> 1, no bias).
            scores.append(jnp.sum(hmax * lin, axis=1, keepdims=True))         # (1, 1)

        out_ref[...] = jnp.concatenate(scores, axis=0)                        # (B, 1)

    return kernel


# ----------------------------------------------------------------------------
# Full forward pass (dropout = identity; previous-hop lists empty).
# ----------------------------------------------------------------------------
def forward(params, question, word_relation, rela_relation):
    B, Lq = question.shape
    Lw = word_relation.shape[1]
    Lr = rela_relation.shape[1]
    E = params["word_embedding"].shape[1]
    H = params["bilstm"]["w_hh_f"].shape[1]
    Bp = ((B + 7) // 8) * 8                                              # sublane-aligned batch

    # --- embedding lookups (XLA gather), time-major ---
    q_emb = jnp.take(params["word_embedding"], question.T, axis=0)       # (Lq, B, E)
    w_emb = jnp.take(params["word_embedding"], word_relation.T, axis=0)  # (Lw, B, E)
    r_emb = jnp.take(params["rela_embedding"], rela_relation.T, axis=0)  # (Lr, B, E)

    # --- "paired" rows [emb(t) | emb(T-1-t)]: one projection matmul covers
    #     both directions; batch padded to Bp so per-step slices are aligned ---
    def paired(emb_tm):
        x = jnp.concatenate([emb_tm, emb_tm[::-1]], axis=-1)             # (T, B, 2E)
        return jnp.pad(x, ((0, 0), (0, Bp - B), (0, 0)))                 # (T, Bp, 2E)

    q_sl, w_sl, r_sl = paired(q_emb), paired(w_emb), paired(r_emb)
    Tmin = min(Lq, Lw)
    joint = jnp.concatenate([q_sl[:Tmin], w_sl[:Tmin]], axis=1)          # (Tmin, 2Bp, 2E)
    tail = q_sl[Tmin:] if Lq >= Lw else w_sl[Tmin:]                      # (|Lq-Lw|, Bp, 2E)
    emb_all = jnp.concatenate(
        [joint.reshape(-1, 2 * E), tail.reshape(-1, 2 * E),
         r_sl.reshape(-1, 2 * E)], axis=0).astype(jnp.bfloat16)          # (Mpad, 2E)

    # --- gate-grouped [i_f|i_b|f_f|f_b|g_f|g_b|o_f|o_b], direction-split ---
    p = params["bilstm"]
    wf, wb = p["w_ih_f"].T, p["w_ih_b"].T                                # (E, 4H) cols [i|f|g|o]
    hf, hb = p["w_hh_f"].T, p["w_hh_b"].T                                # (H, 4H)
    bfv = p["b_ih_f"] + p["b_hh_f"]
    bbv = p["b_ih_b"] + p["b_hh_b"]
    zE = jnp.zeros((E, H), jnp.float32)
    zH = jnp.zeros((H, H), jnp.float32)
    wih_cols, whh_cols, b_cols = [], [], []
    for g in range(4):                                                   # i, f, g, o
        sl = slice(g * H, (g + 1) * H)
        wih_cols += [jnp.concatenate([wf[:, sl], zE], axis=0),           # fwd gate cols fed by emb(t)
                     jnp.concatenate([zE, wb[:, sl]], axis=0)]           # bwd gate cols fed by emb(T-1-t)
        whh_cols += [jnp.concatenate([hf[:, sl], zH], axis=0),
                     jnp.concatenate([zH, hb[:, sl]], axis=0)]
        b_cols += [bfv[sl], bbv[sl]]
    wih2 = jnp.concatenate(wih_cols, axis=1).astype(jnp.bfloat16)        # (2E, 8H)
    whh2 = jnp.concatenate(whh_cols, axis=1).astype(jnp.bfloat16)        # (2H, 8H)
    bias2 = jnp.concatenate(b_cols)[None, :]                             # (1, 8H) f32

    # --- conv weights, per-tap feature-last; channel order [question | atten] ---
    w1 = jnp.transpose(params["conv1_w"][:, :, 0]).astype(jnp.bfloat16)  # (4H, F)
    w2 = jnp.transpose(params["conv2_w"], (2, 1, 0)).astype(jnp.bfloat16)  # (3, 4H, F)
    w3 = jnp.transpose(params["conv3_w"], (2, 1, 0)).astype(jnp.bfloat16)  # (5, 4H, F)
    b1 = params["conv1_b"][None, :]
    b2 = params["conv2_b"][None, :]
    b3 = params["conv3_b"][None, :]
    Wat = params["W"].astype(jnp.bfloat16)                               # (2H, 2H)
    lin = params["linear_w"]                                             # (1, F)

    # TODO(synk): reduce_prev / linear2 / W2 / ques_bilstm / prev_linear /
    # position-embedding paths are not exercised at inference (previous-hop
    # lists are empty, no position flags) and are not implemented.

    kernel = _make_fused_kernel(B=B, Bp=Bp, Lq=Lq, Lw=Lw, Lr=Lr, H=H)
    out = pl.pallas_call(
        kernel,
        out_shape=jax.ShapeDtypeStruct((B, 1), jnp.float32),
    )(emb_all, wih2, bias2, whh2, Wat, w1, b1, w2, b2, w3, b3, lin)
    return out[:, 0]                                                     # (B,)


# ----------------------------------------------------------------------------
# Deterministic parameter initialization (shapes per Model.__init__).
# ----------------------------------------------------------------------------
def init_params(key, vocab, rela_vocab, emb, hidden, num_filters):
    H2 = 2 * hidden
    ks = iter(jax.random.split(key, 16))

    def nrm(k, shape, scale=0.1):
        return scale * jax.random.normal(k, shape, jnp.float32)

    params = {
        "word_embedding": nrm(next(ks), (vocab, emb), 0.5),
        "rela_embedding": nrm(next(ks), (rela_vocab, emb),
                              math.sqrt(2.0 / (rela_vocab + emb))),
        "W": nrm(next(ks), (H2, H2), math.sqrt(2.0 / (H2 + H2))),
        "conv1_w": nrm(next(ks), (num_filters, 2 * H2, 1)),
        "conv1_b": nrm(next(ks), (num_filters,)),
        "conv2_w": nrm(next(ks), (num_filters, 2 * H2, 3)),
        "conv2_b": nrm(next(ks), (num_filters,)),
        "conv3_w": nrm(next(ks), (num_filters, 2 * H2, 5)),
        "conv3_b": nrm(next(ks), (num_filters,)),
        "linear_w": nrm(next(ks), (1, num_filters)),
    }
    bound = 1.0 / math.sqrt(hidden)

    def uni(k, shape):
        return jax.random.uniform(k, shape, jnp.float32, -bound, bound)

    lk = jax.random.split(next(ks), 8)
    params["bilstm"] = {
        "w_ih_f": uni(lk[0], (4 * hidden, emb)),
        "w_hh_f": uni(lk[1], (4 * hidden, hidden)),
        "b_ih_f": uni(lk[2], (4 * hidden,)),
        "b_hh_f": uni(lk[3], (4 * hidden,)),
        "w_ih_b": uni(lk[4], (4 * hidden, emb)),
        "w_hh_b": uni(lk[5], (4 * hidden, hidden)),
        "b_ih_b": uni(lk[6], (4 * hidden,)),
        "b_hh_b": uni(lk[7], (4 * hidden,)),
    }
    return params


if __name__ == "__main__":
    key = jax.random.PRNGKey(0)
    pkey, qkey, wkey, rkey = jax.random.split(key, 4)

    B, Lq, Lw, Lr = 2, 8, 6, 4
    vocab, rela_vocab, emb, hidden, num_filters = 50, 12, 32, 16, 24

    params = init_params(pkey, vocab, rela_vocab, emb, hidden, num_filters)
    question = jax.random.randint(qkey, (B, Lq), 0, vocab, dtype=jnp.int32)
    word_relation = jax.random.randint(wkey, (B, Lw), 0, vocab, dtype=jnp.int32)
    rela_relation = jax.random.randint(rkey, (B, Lr), 0, rela_vocab, dtype=jnp.int32)

    fwd = jax.jit(forward)
    score = fwd(params, question, word_relation, rela_relation)
    jax.block_until_ready(score)
    assert score.shape == (B,) and score.dtype == jnp.float32
    print("KERNEL_OK")
</pallas_src>

<mosaic_0001>
module attributes {stable_mosaic.version = 11 : i64} {
  func.func @kernel(%arg0: memref<144x64xbf16, #tpu.memory_space<vmem>>, %arg1: memref<64x128xbf16, #tpu.memory_space<vmem>>, %arg2: memref<1x128xf32, #tpu.memory_space<vmem>>, %arg3: memref<32x128xbf16, #tpu.memory_space<vmem>>, %arg4: memref<32x32xbf16, #tpu.memory_space<vmem>>, %arg5: memref<64x24xbf16, #tpu.memory_space<vmem>>, %arg6: memref<1x24xf32, #tpu.memory_space<vmem>>, %arg7: memref<3x64x24xbf16, #tpu.memory_space<vmem>>, %arg8: memref<1x24xf32, #tpu.memory_space<vmem>>, %arg9: memref<5x64x24xbf16, #tpu.memory_space<vmem>>, %arg10: memref<1x24xf32, #tpu.memory_space<vmem>>, %arg11: memref<1x24xf32, #tpu.memory_space<vmem>>, %arg12: memref<2x1xf32, #tpu.memory_space<vmem>>) attributes {dimension_semantics = [], scalar_prefetch = 0 : i64, scratch_operands = 0 : i64, tpu.core_type = #tpu.core_type<tc>} {
    %c0 = arith.constant 0 : index
    %c0_0 = arith.constant 0 : index
    %0 = vector.load %arg0[%c0, %c0_0] : memref<144x64xbf16, #tpu.memory_space<vmem>>, vector<144x64xbf16>
    %c0_1 = arith.constant 0 : index
    %c0_2 = arith.constant 0 : index
    %1 = vector.load %arg1[%c0_1, %c0_2] : memref<64x128xbf16, #tpu.memory_space<vmem>>, vector<64x128xbf16>
    %cst = arith.constant dense<0.000000e+00> : vector<144x128xf32>
    %2 = tpu.matmul %0, %1, %cst {dimension_numbers = #tpu.dot_dimension_numbers<[1], [0], [0], [1], [0, 0, 1, 1], [], []>} : vector<144x64xbf16>, vector<64x128xbf16>, vector<144x128xf32> -> vector<144x128xf32>
    %c0_3 = arith.constant 0 : index
    %c0_4 = arith.constant 0 : index
    %3 = vector.load %arg2[%c0_3, %c0_4] : memref<1x128xf32, #tpu.memory_space<vmem>>, vector<1x128xf32>
    %4 = vector.broadcast %3 : vector<1x128xf32> to vector<144x128xf32>
    %5 = arith.addf %2, %4 : vector<144x128xf32>
    %c0_5 = arith.constant 0 : index
    %c0_6 = arith.constant 0 : index
    %6 = vector.load %arg3[%c0_5, %c0_6] : memref<32x128xbf16, #tpu.memory_space<vmem>>, vector<32x128xbf16>
    %cst_7 = arith.constant 0.000000e+00 : f32
    %7 = vector.broadcast %cst_7 : f32 to vector<16x32xf32>
    %cst_8 = arith.constant 0.000000e+00 : f32
    %8 = vector.broadcast %cst_8 : f32 to vector<16x32xf32>
    %9 = vector.extract_strided_slice %5 {offsets = [0, 0], sizes = [16, 128], strides = [1, 1]} : vector<144x128xf32> to vector<16x128xf32>
    %10 = arith.truncf %7 : vector<16x32xf32> to vector<16x32xbf16>
    %cst_9 = arith.constant dense<0.000000e+00> : vector<16x128xf32>
    %11 = tpu.matmul %10, %6, %cst_9 {dimension_numbers = #tpu.dot_dimension_numbers<[1], [0], [0], [1], [0, 0, 1, 1], [], []>} : vector<16x32xbf16>, vector<32x128xbf16>, vector<16x128xf32> -> vector<16x128xf32>
    %12 = arith.addf %9, %11 : vector<16x128xf32>
    %13 = vector.extract_strided_slice %12 {offsets = [0, 0], sizes = [16, 32], strides = [1, 1]} : vector<16x128xf32> to vector<16x32xf32>
    %14 = arith.negf %13 : vector<16x32xf32>
    %15 = math.exp %14 : vector<16x32xf32>
    %cst_10 = arith.constant 1.000000e+00 : f32
    %16 = vector.broadcast %cst_10 : f32 to vector<16x32xf32>
    %17 = arith.addf %16, %15 : vector<16x32xf32>
    %18 = arith.divf %16, %17 : vector<16x32xf32>
    %19 = vector.extract_strided_slice %12 {offsets = [0, 32], sizes = [16, 32], strides = [1, 1]} : vector<16x128xf32> to vector<16x32xf32>
    %20 = arith.negf %19 : vector<16x32xf32>
    %21 = math.exp %20 : vector<16x32xf32>
    %cst_11 = arith.constant 1.000000e+00 : f32
    %22 = vector.broadcast %cst_11 : f32 to vector<16x32xf32>
    %23 = arith.addf %22, %21 : vector<16x32xf32>
    %24 = arith.divf %22, %23 : vector<16x32xf32>
    %25 = vector.extract_strided_slice %12 {offsets = [0, 64], sizes = [16, 32], strides = [1, 1]} : vector<16x128xf32> to vector<16x32xf32>
    %26 = math.tanh %25 : vector<16x32xf32>
    %27 = vector.extract_strided_slice %12 {offsets = [0, 96], sizes = [16, 32], strides = [1, 1]} : vector<16x128xf32> to vector<16x32xf32>
    %28 = arith.negf %27 : vector<16x32xf32>
    %29 = math.exp %28 : vector<16x32xf32>
    %cst_12 = arith.constant 1.000000e+00 : f32
    %30 = vector.broadcast %cst_12 : f32 to vector<16x32xf32>
    %31 = arith.addf %30, %29 : vector<16x32xf32>
    %32 = arith.divf %30, %31 : vector<16x32xf32>
    %33 = arith.mulf %24, %8 : vector<16x32xf32>
    %34 = arith.mulf %18, %26 : vector<16x32xf32>
    %35 = arith.addf %33, %34 : vector<16x32xf32>
    %36 = math.tanh %35 : vector<16x32xf32>
    %37 = arith.mulf %32, %36 : vector<16x32xf32>
    %38 = vector.extract_strided_slice %37 {offsets = [0, 0], sizes = [8, 32], strides = [1, 1]} : vector<16x32xf32> to vector<8x32xf32>
    %39 = vector.extract_strided_slice %37 {offsets = [8, 0], sizes = [8, 32], strides = [1, 1]} : vector<16x32xf32> to vector<8x32xf32>
    %40 = vector.extract_strided_slice %5 {offsets = [16, 0], sizes = [16, 128], strides = [1, 1]} : vector<144x128xf32> to vector<16x128xf32>
    %41 = arith.truncf %37 : vector<16x32xf32> to vector<16x32xbf16>
    %cst_13 = arith.constant dense<0.000000e+00> : vector<16x128xf32>
    %42 = tpu.matmul %41, %6, %cst_13 {dimension_numbers = #tpu.dot_dimension_numbers<[1], [0], [0], [1], [0, 0, 1, 1], [], []>} : vector<16x32xbf16>, vector<32x128xbf16>, vector<16x128xf32> -> vector<16x128xf32>
    %43 = arith.addf %40, %42 : vector<16x128xf32>
    %44 = vector.extract_strided_slice %43 {offsets = [0, 0], sizes = [16, 32], strides = [1, 1]} : vector<16x128xf32> to vector<16x32xf32>
    %45 = arith.negf %44 : vector<16x32xf32>
    %46 = math.exp %45 : vector<16x32xf32>
    %cst_14 = arith.constant 1.000000e+00 : f32
    %47 = vector.broadcast %cst_14 : f32 to vector<16x32xf32>
    %48 = arith.addf %47, %46 : vector<16x32xf32>
    %49 = arith.divf %47, %48 : vector<16x32xf32>
    %50 = vector.extract_strided_slice %43 {offsets = [0, 32], sizes = [16, 32], strides = [1, 1]} : vector<16x128xf32> to vector<16x32xf32>
    %51 = arith.negf %50 : vector<16x32xf32>
    %52 = math.exp %51 : vector<16x32xf32>
    %cst_15 = arith.constant 1.000000e+00 : f32
    %53 = vector.broadcast %cst_15 : f32 to vector<16x32xf32>
    %54 = arith.addf %53, %52 : vector<16x32xf32>
    %55 = arith.divf %53, %54 : vector<16x32xf32>
    %56 = vector.extract_strided_slice %43 {offsets = [0, 64], sizes = [16, 32], strides = [1, 1]} : vector<16x128xf32> to vector<16x32xf32>
    %57 = math.tanh %56 : vector<16x32xf32>
    %58 = vector.extract_strided_slice %43 {offsets = [0, 96], sizes = [16, 32], strides = [1, 1]} : vector<16x128xf32> to vector<16x32xf32>
    %59 = arith.negf %58 : vector<16x32xf32>
    %60 = math.exp %59 : vector<16x32xf32>
    %cst_16 = arith.constant 1.000000e+00 : f32
    %61 = vector.broadcast %cst_16 : f32 to vector<16x32xf32>
    %62 = arith.addf %61, %60 : vector<16x32xf32>
    %63 = arith.divf %61, %62 : vector<16x32xf32>
    %64 = arith.mulf %55, %35 : vector<16x32xf32>
    %65 = arith.mulf %49, %57 : vector<16x32xf32>
    %66 = arith.addf %64, %65 : vector<16x32xf32>
    %67 = math.tanh %66 : vector<16x32xf32>
    %68 = arith.mulf %63, %67 : vector<16x32xf32>
    %69 = vector.extract_strided_slice %68 {offsets = [0, 0], sizes = [8, 32], strides = [1, 1]} : vector<16x32xf32> to vector<8x32xf32>
    %70 = vector.extract_strided_slice %68 {offsets = [8, 0], sizes = [8, 32], strides = [1, 1]} : vector<16x32xf32> to vector<8x32xf32>
    %71 = vector.extract_strided_slice %5 {offsets = [32, 0], sizes = [16, 128], strides = [1, 1]} : vector<144x128xf32> to vector<16x128xf32>
    %72 = arith.truncf %68 : vector<16x32xf32> to vector<16x32xbf16>
    %cst_17 = arith.constant dense<0.000000e+00> : vector<16x128xf32>
    %73 = tpu.matmul %72, %6, %cst_17 {dimension_numbers = #tpu.dot_dimension_numbers<[1], [0], [0], [1], [0, 0, 1, 1], [], []>} : vector<16x32xbf16>, vector<32x128xbf16>, vector<16x128xf32> -> vector<16x128xf32>
    %74 = arith.addf %71, %73 : vector<16x128xf32>
    %75 = vector.extract_strided_slice %74 {offsets = [0, 0], sizes = [16, 32], strides = [1, 1]} : vector<16x128xf32> to vector<16x32xf32>
    %76 = arith.negf %75 : vector<16x32xf32>
    %77 = math.exp %76 : vector<16x32xf32>
    %cst_18 = arith.constant 1.000000e+00 : f32
    %78 = vector.broadcast %cst_18 : f32 to vector<16x32xf32>
    %79 = arith.addf %78, %77 : vector<16x32xf32>
    %80 = arith.divf %78, %79 : vector<16x32xf32>
    %81 = vector.extract_strided_slice %74 {offsets = [0, 32], sizes = [16, 32], strides = [1, 1]} : vector<16x128xf32> to vector<16x32xf32>
    %82 = arith.negf %81 : vector<16x32xf32>
    %83 = math.exp %82 : vector<16x32xf32>
    %cst_19 = arith.constant 1.000000e+00 : f32
    %84 = vector.broadcast %cst_19 : f32 to vector<16x32xf32>
    %85 = arith.addf %84, %83 : vector<16x32xf32>
    %86 = arith.divf %84, %85 : vector<16x32xf32>
    %87 = vector.extract_strided_slice %74 {offsets = [0, 64], sizes = [16, 32], strides = [1, 1]} : vector<16x128xf32> to vector<16x32xf32>
    %88 = math.tanh %87 : vector<16x32xf32>
    %89 = vector.extract_strided_slice %74 {offsets = [0, 96], sizes = [16, 32], strides = [1, 1]} : vector<16x128xf32> to vector<16x32xf32>
    %90 = arith.negf %89 : vector<16x32xf32>
    %91 = math.exp %90 : vector<16x32xf32>
    %cst_20 = arith.constant 1.000000e+00 : f32
    %92 = vector.broadcast %cst_20 : f32 to vector<16x32xf32>
    %93 = arith.addf %92, %91 : vector<16x32xf32>
    %94 = arith.divf %92, %93 : vector<16x32xf32>
    %95 = arith.mulf %86, %66 : vector<16x32xf32>
    %96 = arith.mulf %80, %88 : vector<16x32xf32>
    %97 = arith.addf %95, %96 : vector<16x32xf32>
    %98 = math.tanh %97 : vector<16x32xf32>
    %99 = arith.mulf %94, %98 : vector<16x32xf32>
    %100 = vector.extract_strided_slice %99 {offsets = [0, 0], sizes = [8, 32], strides = [1, 1]} : vector<16x32xf32> to vector<8x32xf32>
    %101 = vector.extract_strided_slice %99 {offsets = [8, 0], sizes = [8, 32], strides = [1, 1]} : vector<16x32xf32> to vector<8x32xf32>
    %102 = vector.extract_strided_slice %5 {offsets = [48, 0], sizes = [16, 128], strides = [1, 1]} : vector<144x128xf32> to vector<16x128xf32>
    %103 = arith.truncf %99 : vector<16x32xf32> to vector<16x32xbf16>
    %cst_21 = arith.constant dense<0.000000e+00> : vector<16x128xf32>
    %104 = tpu.matmul %103, %6, %cst_21 {dimension_numbers = #tpu.dot_dimension_numbers<[1], [0], [0], [1], [0, 0, 1, 1], [], []>} : vector<16x32xbf16>, vector<32x128xbf16>, vector<16x128xf32> -> vector<16x128xf32>
    %105 = arith.addf %102, %104 : vector<16x128xf32>
    %106 = vector.extract_strided_slice %105 {offsets = [0, 0], sizes = [16, 32], strides = [1, 1]} : vector<16x128xf32> to vector<16x32xf32>
    %107 = arith.negf %106 : vector<16x32xf32>
    %108 = math.exp %107 : vector<16x32xf32>
    %cst_22 = arith.constant 1.000000e+00 : f32
    %109 = vector.broadcast %cst_22 : f32 to vector<16x32xf32>
    %110 = arith.addf %109, %108 : vector<16x32xf32>
    %111 = arith.divf %109, %110 : vector<16x32xf32>
    %112 = vector.extract_strided_slice %105 {offsets = [0, 32], sizes = [16, 32], strides = [1, 1]} : vector<16x128xf32> to vector<16x32xf32>
    %113 = arith.negf %112 : vector<16x32xf32>
    %114 = math.exp %113 : vector<16x32xf32>
    %cst_23 = arith.constant 1.000000e+00 : f32
    %115 = vector.broadcast %cst_23 : f32 to vector<16x32xf32>
    %116 = arith.addf %115, %114 : vector<16x32xf32>
    %117 = arith.divf %115, %116 : vector<16x32xf32>
    %118 = vector.extract_strided_slice %105 {offsets = [0, 64], sizes = [16, 32], strides = [1, 1]} : vector<16x128xf32> to vector<16x32xf32>
    %119 = math.tanh %118 : vector<16x32xf32>
    %120 = vector.extract_strided_slice %105 {offsets = [0, 96], sizes = [16, 32], strides = [1, 1]} : vector<16x128xf32> to vector<16x32xf32>
    %121 = arith.negf %120 : vector<16x32xf32>
    %122 = math.exp %121 : vector<16x32xf32>
    %cst_24 = arith.constant 1.000000e+00 : f32
    %123 = vector.broadcast %cst_24 : f32 to vector<16x32xf32>
    %124 = arith.addf %123, %122 : vector<16x32xf32>
    %125 = arith.divf %123, %124 : vector<16x32xf32>
    %126 = arith.mulf %117, %97 : vector<16x32xf32>
    %127 = arith.mulf %111, %119 : vector<16x32xf32>
    %128 = arith.addf %126, %127 : vector<16x32xf32>
    %129 = math.tanh %128 : vector<16x32xf32>
    %130 = arith.mulf %125, %129 : vector<16x32xf32>
    %131 = vector.extract_strided_slice %130 {offsets = [0, 0], sizes = [8, 32], strides = [1, 1]} : vector<16x32xf32> to vector<8x32xf32>
    %132 = vector.extract_strided_slice %130 {offsets = [8, 0], sizes = [8, 32], strides = [1, 1]} : vector<16x32xf32> to vector<8x32xf32>
    %133 = vector.extract_strided_slice %5 {offsets = [64, 0], sizes = [16, 128], strides = [1, 1]} : vector<144x128xf32> to vector<16x128xf32>
    %134 = arith.truncf %130 : vector<16x32xf32> to vector<16x32xbf16>
    %cst_25 = arith.constant dense<0.000000e+00> : vector<16x128xf32>
    %135 = tpu.matmul %134, %6, %cst_25 {dimension_numbers = #tpu.dot_dimension_numbers<[1], [0], [0], [1], [0, 0, 1, 1], [], []>} : vector<16x32xbf16>, vector<32x128xbf16>, vector<16x128xf32> -> vector<16x128xf32>
    %136 = arith.addf %133, %135 : vector<16x128xf32>
    %137 = vector.extract_strided_slice %136 {offsets = [0, 0], sizes = [16, 32], strides = [1, 1]} : vector<16x128xf32> to vector<16x32xf32>
    %138 = arith.negf %137 : vector<16x32xf32>
    %139 = math.exp %138 : vector<16x32xf32>
    %cst_26 = arith.constant 1.000000e+00 : f32
    %140 = vector.broadcast %cst_26 : f32 to vector<16x32xf32>
    %141 = arith.addf %140, %139 : vector<16x32xf32>
    %142 = arith.divf %140, %141 : vector<16x32xf32>
    %143 = vector.extract_strided_slice %136 {offsets = [0, 32], sizes = [16, 32], strides = [1, 1]} : vector<16x128xf32> to vector<16x32xf32>
    %144 = arith.negf %143 : vector<16x32xf32>
    %145 = math.exp %144 : vector<16x32xf32>
    %cst_27 = arith.constant 1.000000e+00 : f32
    %146 = vector.broadcast %cst_27 : f32 to vector<16x32xf32>
    %147 = arith.addf %146, %145 : vector<16x32xf32>
    %148 = arith.divf %146, %147 : vector<16x32xf32>
    %149 = vector.extract_strided_slice %136 {offsets = [0, 64], sizes = [16, 32], strides = [1, 1]} : vector<16x128xf32> to vector<16x32xf32>
    %150 = math.tanh %149 : vector<16x32xf32>
    %151 = vector.extract_strided_slice %136 {offsets = [0, 96], sizes = [16, 32], strides = [1, 1]} : vector<16x128xf32> to vector<16x32xf32>
    %152 = arith.negf %151 : vector<16x32xf32>
    %153 = math.exp %152 : vector<16x32xf32>
    %cst_28 = arith.constant 1.000000e+00 : f32
    %154 = vector.broadcast %cst_28 : f32 to vector<16x32xf32>
    %155 = arith.addf %154, %153 : vector<16x32xf32>
    %156 = arith.divf %154, %155 : vector<16x32xf32>
    %157 = arith.mulf %148, %128 : vector<16x32xf32>
    %158 = arith.mulf %142, %150 : vector<16x32xf32>
    %159 = arith.addf %157, %158 : vector<16x32xf32>
    %160 = math.tanh %159 : vector<16x32xf32>
    %161 = arith.mulf %156, %160 : vector<16x32xf32>
    %162 = vector.extract_strided_slice %161 {offsets = [0, 0], sizes = [8, 32], strides = [1, 1]} : vector<16x32xf32> to vector<8x32xf32>
    %163 = vector.extract_strided_slice %161 {offsets = [8, 0], sizes = [8, 32], strides = [1, 1]} : vector<16x32xf32> to vector<8x32xf32>
    %164 = vector.extract_strided_slice %5 {offsets = [80, 0], sizes = [16, 128], strides = [1, 1]} : vector<144x128xf32> to vector<16x128xf32>
    %165 = arith.truncf %161 : vector<16x32xf32> to vector<16x32xbf16>
    %cst_29 = arith.constant dense<0.000000e+00> : vector<16x128xf32>
    %166 = tpu.matmul %165, %6, %cst_29 {dimension_numbers = #tpu.dot_dimension_numbers<[1], [0], [0], [1], [0, 0, 1, 1], [], []>} : vector<16x32xbf16>, vector<32x128xbf16>, vector<16x128xf32> -> vector<16x128xf32>
    %167 = arith.addf %164, %166 : vector<16x128xf32>
    %168 = vector.extract_strided_slice %167 {offsets = [0, 0], sizes = [16, 32], strides = [1, 1]} : vector<16x128xf32> to vector<16x32xf32>
    %169 = arith.negf %168 : vector<16x32xf32>
    %170 = math.exp %169 : vector<16x32xf32>
    %cst_30 = arith.constant 1.000000e+00 : f32
    %171 = vector.broadcast %cst_30 : f32 to vector<16x32xf32>
    %172 = arith.addf %171, %170 : vector<16x32xf32>
    %173 = arith.divf %171, %172 : vector<16x32xf32>
    %174 = vector.extract_strided_slice %167 {offsets = [0, 32], sizes = [16, 32], strides = [1, 1]} : vector<16x128xf32> to vector<16x32xf32>
    %175 = arith.negf %174 : vector<16x32xf32>
    %176 = math.exp %175 : vector<16x32xf32>
    %cst_31 = arith.constant 1.000000e+00 : f32
    %177 = vector.broadcast %cst_31 : f32 to vector<16x32xf32>
    %178 = arith.addf %177, %176 : vector<16x32xf32>
    %179 = arith.divf %177, %178 : vector<16x32xf32>
    %180 = vector.extract_strided_slice %167 {offsets = [0, 64], sizes = [16, 32], strides = [1, 1]} : vector<16x128xf32> to vector<16x32xf32>
    %181 = math.tanh %180 : vector<16x32xf32>
    %182 = vector.extract_strided_slice %167 {offsets = [0, 96], sizes = [16, 32], strides = [1, 1]} : vector<16x128xf32> to vector<16x32xf32>
    %183 = arith.negf %182 : vector<16x32xf32>
    %184 = math.exp %183 : vector<16x32xf32>
    %cst_32 = arith.constant 1.000000e+00 : f32
    %185 = vector.broadcast %cst_32 : f32 to vector<16x32xf32>
    %186 = arith.addf %185, %184 : vector<16x32xf32>
    %187 = arith.divf %185, %186 : vector<16x32xf32>
    %188 = arith.mulf %179, %159 : vector<16x32xf32>
    %189 = arith.mulf %173, %181 : vector<16x32xf32>
    %190 = arith.addf %188, %189 : vector<16x32xf32>
    %191 = math.tanh %190 : vector<16x32xf32>
    %192 = arith.mulf %187, %191 : vector<16x32xf32>
    %193 = vector.extract_strided_slice %192 {offsets = [0, 0], sizes = [8, 32], strides = [1, 1]} : vector<16x32xf32> to vector<8x32xf32>
    %194 = vector.extract_strided_slice %192 {offsets = [8, 0], sizes = [8, 32], strides = [1, 1]} : vector<16x32xf32> to vector<8x32xf32>
    %195 = vector.extract_strided_slice %192 {offsets = [0, 0], sizes = [8, 32], strides = [1, 1]} : vector<16x32xf32> to vector<8x32xf32>
    %196 = vector.extract_strided_slice %190 {offsets = [0, 0], sizes = [8, 32], strides = [1, 1]} : vector<16x32xf32> to vector<8x32xf32>
    %197 = vector.extract_strided_slice %192 {offsets = [8, 0], sizes = [8, 32], strides = [1, 1]} : vector<16x32xf32> to vector<8x32xf32>
    %198 = vector.extract_strided_slice %190 {offsets = [8, 0], sizes = [8, 32], strides = [1, 1]} : vector<16x32xf32> to vector<8x32xf32>
    %199 = vector.extract_strided_slice %5 {offsets = [96, 0], sizes = [8, 128], strides = [1, 1]} : vector<144x128xf32> to vector<8x128xf32>
    %200 = arith.truncf %195 : vector<8x32xf32> to vector<8x32xbf16>
    %cst_33 = arith.constant dense<0.000000e+00> : vector<8x128xf32>
    %201 = tpu.matmul %200, %6, %cst_33 {dimension_numbers = #tpu.dot_dimension_numbers<[1], [0], [0], [1], [0, 0, 1, 1], [], []>} : vector<8x32xbf16>, vector<32x128xbf16>, vector<8x128xf32> -> vector<8x128xf32>
    %202 = arith.addf %199, %201 : vector<8x128xf32>
    %203 = vector.extract_strided_slice %202 {offsets = [0, 0], sizes = [8, 32], strides = [1, 1]} : vector<8x128xf32> to vector<8x32xf32>
    %204 = arith.negf %203 : vector<8x32xf32>
    %205 = math.exp %204 : vector<8x32xf32>
    %cst_34 = arith.constant 1.000000e+00 : f32
    %206 = vector.broadcast %cst_34 : f32 to vector<8x32xf32>
    %207 = arith.addf %206, %205 : vector<8x32xf32>
    %208 = arith.divf %206, %207 : vector<8x32xf32>
    %209 = vector.extract_strided_slice %202 {offsets = [0, 32], sizes = [8, 32], strides = [1, 1]} : vector<8x128xf32> to vector<8x32xf32>
    %210 = arith.negf %209 : vector<8x32xf32>
    %211 = math.exp %210 : vector<8x32xf32>
    %cst_35 = arith.constant 1.000000e+00 : f32
    %212 = vector.broadcast %cst_35 : f32 to vector<8x32xf32>
    %213 = arith.addf %212, %211 : vector<8x32xf32>
    %214 = arith.divf %212, %213 : vector<8x32xf32>
    %215 = vector.extract_strided_slice %202 {offsets = [0, 64], sizes = [8, 32], strides = [1, 1]} : vector<8x128xf32> to vector<8x32xf32>
    %216 = math.tanh %215 : vector<8x32xf32>
    %217 = vector.extract_strided_slice %202 {offsets = [0, 96], sizes = [8, 32], strides = [1, 1]} : vector<8x128xf32> to vector<8x32xf32>
    %218 = arith.negf %217 : vector<8x32xf32>
    %219 = math.exp %218 : vector<8x32xf32>
    %cst_36 = arith.constant 1.000000e+00 : f32
    %220 = vector.broadcast %cst_36 : f32 to vector<8x32xf32>
    %221 = arith.addf %220, %219 : vector<8x32xf32>
    %222 = arith.divf %220, %221 : vector<8x32xf32>
    %223 = arith.mulf %214, %196 : vector<8x32xf32>
    %224 = arith.mulf %208, %216 : vector<8x32xf32>
    %225 = arith.addf %223, %224 : vector<8x32xf32>
    %226 = math.tanh %225 : vector<8x32xf32>
    %227 = arith.mulf %222, %226 : vector<8x32xf32>
    %228 = vector.extract_strided_slice %5 {offsets = [104, 0], sizes = [8, 128], strides = [1, 1]} : vector<144x128xf32> to vector<8x128xf32>
    %229 = arith.truncf %227 : vector<8x32xf32> to vector<8x32xbf16>
    %cst_37 = arith.constant dense<0.000000e+00> : vector<8x128xf32>
    %230 = tpu.matmul %229, %6, %cst_37 {dimension_numbers = #tpu.dot_dimension_numbers<[1], [0], [0], [1], [0, 0, 1, 1], [], []>} : vector<8x32xbf16>, vector<32x128xbf16>, vector<8x128xf32> -> vector<8x128xf32>
    %231 = arith.addf %228, %230 : vector<8x128xf32>
    %232 = vector.extract_strided_slice %231 {offsets = [0, 0], sizes = [8, 32], strides = [1, 1]} : vector<8x128xf32> to vector<8x32xf32>
    %233 = arith.negf %232 : vector<8x32xf32>
    %234 = math.exp %233 : vector<8x32xf32>
    %cst_38 = arith.constant 1.000000e+00 : f32
    %235 = vector.broadcast %cst_38 : f32 to vector<8x32xf32>
    %236 = arith.addf %235, %234 : vector<8x32xf32>
    %237 = arith.divf %235, %236 : vector<8x32xf32>
    %238 = vector.extract_strided_slice %231 {offsets = [0, 32], sizes = [8, 32], strides = [1, 1]} : vector<8x128xf32> to vector<8x32xf32>
    %239 = arith.negf %238 : vector<8x32xf32>
    %240 = math.exp %239 : vector<8x32xf32>
    %cst_39 = arith.constant 1.000000e+00 : f32
    %241 = vector.broadcast %cst_39 : f32 to vector<8x32xf32>
    %242 = arith.addf %241, %240 : vector<8x32xf32>
    %243 = arith.divf %241, %242 : vector<8x32xf32>
    %244 = vector.extract_strided_slice %231 {offsets = [0, 64], sizes = [8, 32], strides = [1, 1]} : vector<8x128xf32> to vector<8x32xf32>
    %245 = math.tanh %244 : vector<8x32xf32>
    %246 = vector.extract_strided_slice %231 {offsets = [0, 96], sizes = [8, 32], strides = [1, 1]} : vector<8x128xf32> to vector<8x32xf32>
    %247 = arith.negf %246 : vector<8x32xf32>
    %248 = math.exp %247 : vector<8x32xf32>
    %cst_40 = arith.constant 1.000000e+00 : f32
    %249 = vector.broadcast %cst_40 : f32 to vector<8x32xf32>
    %250 = arith.addf %249, %248 : vector<8x32xf32>
    %251 = arith.divf %249, %250 : vector<8x32xf32>
    %252 = arith.mulf %243, %225 : vector<8x32xf32>
    %253 = arith.mulf %237, %245 : vector<8x32xf32>
    %254 = arith.addf %252, %253 : vector<8x32xf32>
    %255 = math.tanh %254 : vector<8x32xf32>
    %256 = arith.mulf %251, %255 : vector<8x32xf32>
    %257 = vector.extract_strided_slice %5 {offsets = [112, 0], sizes = [8, 128], strides = [1, 1]} : vector<144x128xf32> to vector<8x128xf32>
    %258 = arith.truncf %197 : vector<8x32xf32> to vector<8x32xbf16>
    %cst_41 = arith.constant dense<0.000000e+00> : vector<8x128xf32>
    %259 = tpu.matmul %258, %6, %cst_41 {dimension_numbers = #tpu.dot_dimension_numbers<[1], [0], [0], [1], [0, 0, 1, 1], [], []>} : vector<8x32xbf16>, vector<32x128xbf16>, vector<8x128xf32> -> vector<8x128xf32>
    %260 = arith.addf %257, %259 : vector<8x128xf32>
    %261 = vector.extract_strided_slice %260 {offsets = [0, 0], sizes = [8, 32], strides = [1, 1]} : vector<8x128xf32> to vector<8x32xf32>
    %262 = arith.negf %261 : vector<8x32xf32>
    %263 = math.exp %262 : vector<8x32xf32>
    %cst_42 = arith.constant 1.000000e+00 : f32
    %264 = vector.broadcast %cst_42 : f32 to vector<8x32xf32>
    %265 = arith.addf %264, %263 : vector<8x32xf32>
    %266 = arith.divf %264, %265 : vector<8x32xf32>
    %267 = vector.extract_strided_slice %260 {offsets = [0, 32], sizes = [8, 32], strides = [1, 1]} : vector<8x128xf32> to vector<8x32xf32>
    %268 = arith.negf %267 : vector<8x32xf32>
    %269 = math.exp %268 : vector<8x32xf32>
    %cst_43 = arith.constant 1.000000e+00 : f32
    %270 = vector.broadcast %cst_43 : f32 to vector<8x32xf32>
    %271 = arith.addf %270, %269 : vector<8x32xf32>
    %272 = arith.divf %270, %271 : vector<8x32xf32>
    %273 = vector.extract_strided_slice %260 {offsets = [0, 64], sizes = [8, 32], strides = [1, 1]} : vector<8x128xf32> to vector<8x32xf32>
    %274 = math.tanh %273 : vector<8x32xf32>
    %275 = vector.extract_strided_slice %260 {offsets = [0, 96], sizes = [8, 32], strides = [1, 1]} : vector<8x128xf32> to vector<8x32xf32>
    %276 = arith.negf %275 : vector<8x32xf32>
    %277 = math.exp %276 : vector<8x32xf32>
    %cst_44 = arith.constant 1.000000e+00 : f32
    %278 = vector.broadcast %cst_44 : f32 to vector<8x32xf32>
    %279 = arith.addf %278, %277 : vector<8x32xf32>
    %280 = arith.divf %278, %279 : vector<8x32xf32>
    %281 = arith.mulf %272, %198 : vector<8x32xf32>
    %282 = arith.mulf %266, %274 : vector<8x32xf32>
    %283 = arith.addf %281, %282 : vector<8x32xf32>
    %284 = math.tanh %283 : vector<8x32xf32>
    %285 = arith.mulf %280, %284 : vector<8x32xf32>
    %286 = vector.extract_strided_slice %5 {offsets = [120, 0], sizes = [8, 128], strides = [1, 1]} : vector<144x128xf32> to vector<8x128xf32>
    %287 = arith.truncf %285 : vector<8x32xf32> to vector<8x32xbf16>
    %cst_45 = arith.constant dense<0.000000e+00> : vector<8x128xf32>
    %288 = tpu.matmul %287, %6, %cst_45 {dimension_numbers = #tpu.dot_dimension_numbers<[1], [0], [0], [1], [0, 0, 1, 1], [], []>} : vector<8x32xbf16>, vector<32x128xbf16>, vector<8x128xf32> -> vector<8x128xf32>
    %289 = arith.addf %286, %288 : vector<8x128xf32>
    %290 = vector.extract_strided_slice %289 {offsets = [0, 0], sizes = [8, 32], strides = [1, 1]} : vector<8x128xf32> to vector<8x32xf32>
    %291 = arith.negf %290 : vector<8x32xf32>
    %292 = math.exp %291 : vector<8x32xf32>
    %cst_46 = arith.constant 1.000000e+00 : f32
    %293 = vector.broadcast %cst_46 : f32 to vector<8x32xf32>
    %294 = arith.addf %293, %292 : vector<8x32xf32>
    %295 = arith.divf %293, %294 : vector<8x32xf32>
    %296 = vector.extract_strided_slice %289 {offsets = [0, 32], sizes = [8, 32], strides = [1, 1]} : vector<8x128xf32> to vector<8x32xf32>
    %297 = arith.negf %296 : vector<8x32xf32>
    %298 = math.exp %297 : vector<8x32xf32>
    %cst_47 = arith.constant 1.000000e+00 : f32
    %299 = vector.broadcast %cst_47 : f32 to vector<8x32xf32>
    %300 = arith.addf %299, %298 : vector<8x32xf32>
    %301 = arith.divf %299, %300 : vector<8x32xf32>
    %302 = vector.extract_strided_slice %289 {offsets = [0, 64], sizes = [8, 32], strides = [1, 1]} : vector<8x128xf32> to vector<8x32xf32>
    %303 = math.tanh %302 : vector<8x32xf32>
    %304 = vector.extract_strided_slice %289 {offsets = [0, 96], sizes = [8, 32], strides = [1, 1]} : vector<8x128xf32> to vector<8x32xf32>
    %305 = arith.negf %304 : vector<8x32xf32>
    %306 = math.exp %305 : vector<8x32xf32>
    %cst_48 = arith.constant 1.000000e+00 : f32
    %307 = vector.broadcast %cst_48 : f32 to vector<8x32xf32>
    %308 = arith.addf %307, %306 : vector<8x32xf32>
    %309 = arith.divf %307, %308 : vector<8x32xf32>
    %310 = arith.mulf %301, %283 : vector<8x32xf32>
    %311 = arith.mulf %295, %303 : vector<8x32xf32>
    %312 = arith.addf %310, %311 : vector<8x32xf32>
    %313 = math.tanh %312 : vector<8x32xf32>
    %314 = arith.mulf %309, %313 : vector<8x32xf32>
    %315 = vector.extract_strided_slice %5 {offsets = [128, 0], sizes = [8, 128], strides = [1, 1]} : vector<144x128xf32> to vector<8x128xf32>
    %316 = arith.truncf %314 : vector<8x32xf32> to vector<8x32xbf16>
    %cst_49 = arith.constant dense<0.000000e+00> : vector<8x128xf32>
    %317 = tpu.matmul %316, %6, %cst_49 {dimension_numbers = #tpu.dot_dimension_numbers<[1], [0], [0], [1], [0, 0, 1, 1], [], []>} : vector<8x32xbf16>, vector<32x128xbf16>, vector<8x128xf32> -> vector<8x128xf32>
    %318 = arith.addf %315, %317 : vector<8x128xf32>
    %319 = vector.extract_strided_slice %318 {offsets = [0, 0], sizes = [8, 32], strides = [1, 1]} : vector<8x128xf32> to vector<8x32xf32>
    %320 = arith.negf %319 : vector<8x32xf32>
    %321 = math.exp %320 : vector<8x32xf32>
    %cst_50 = arith.constant 1.000000e+00 : f32
    %322 = vector.broadcast %cst_50 : f32 to vector<8x32xf32>
    %323 = arith.addf %322, %321 : vector<8x32xf32>
    %324 = arith.divf %322, %323 : vector<8x32xf32>
    %325 = vector.extract_strided_slice %318 {offsets = [0, 32], sizes = [8, 32], strides = [1, 1]} : vector<8x128xf32> to vector<8x32xf32>
    %326 = arith.negf %325 : vector<8x32xf32>
    %327 = math.exp %326 : vector<8x32xf32>
    %cst_51 = arith.constant 1.000000e+00 : f32
    %328 = vector.broadcast %cst_51 : f32 to vector<8x32xf32>
    %329 = arith.addf %328, %327 : vector<8x32xf32>
    %330 = arith.divf %328, %329 : vector<8x32xf32>
    %331 = vector.extract_strided_slice %318 {offsets = [0, 64], sizes = [8, 32], strides = [1, 1]} : vector<8x128xf32> to vector<8x32xf32>
    %332 = math.tanh %331 : vector<8x32xf32>
    %333 = vector.extract_strided_slice %318 {offsets = [0, 96], sizes = [8, 32], strides = [1, 1]} : vector<8x128xf32> to vector<8x32xf32>
    %334 = arith.negf %333 : vector<8x32xf32>
    %335 = math.exp %334 : vector<8x32xf32>
    %cst_52 = arith.constant 1.000000e+00 : f32
    %336 = vector.broadcast %cst_52 : f32 to vector<8x32xf32>
    %337 = arith.addf %336, %335 : vector<8x32xf32>
    %338 = arith.divf %336, %337 : vector<8x32xf32>
    %339 = arith.mulf %330, %312 : vector<8x32xf32>
    %340 = arith.mulf %324, %332 : vector<8x32xf32>
    %341 = arith.addf %339, %340 : vector<8x32xf32>
    %342 = math.tanh %341 : vector<8x32xf32>
    %343 = arith.mulf %338, %342 : vector<8x32xf32>
    %344 = vector.extract_strided_slice %5 {offsets = [136, 0], sizes = [8, 128], strides = [1, 1]} : vector<144x128xf32> to vector<8x128xf32>
    %345 = arith.truncf %343 : vector<8x32xf32> to vector<8x32xbf16>
    %cst_53 = arith.constant dense<0.000000e+00> : vector<8x128xf32>
    %346 = tpu.matmul %345, %6, %cst_53 {dimension_numbers = #tpu.dot_dimension_numbers<[1], [0], [0], [1], [0, 0, 1, 1], [], []>} : vector<8x32xbf16>, vector<32x128xbf16>, vector<8x128xf32> -> vector<8x128xf32>
    %347 = arith.addf %344, %346 : vector<8x128xf32>
    %348 = vector.extract_strided_slice %347 {offsets = [0, 0], sizes = [8, 32], strides = [1, 1]} : vector<8x128xf32> to vector<8x32xf32>
    %349 = arith.negf %348 : vector<8x32xf32>
    %350 = math.exp %349 : vector<8x32xf32>
    %cst_54 = arith.constant 1.000000e+00 : f32
    %351 = vector.broadcast %cst_54 : f32 to vector<8x32xf32>
    %352 = arith.addf %351, %350 : vector<8x32xf32>
    %353 = arith.divf %351, %352 : vector<8x32xf32>
    %354 = vector.extract_strided_slice %347 {offsets = [0, 32], sizes = [8, 32], strides = [1, 1]} : vector<8x128xf32> to vector<8x32xf32>
    %355 = arith.negf %354 : vector<8x32xf32>
    %356 = math.exp %355 : vector<8x32xf32>
    %cst_55 = arith.constant 1.000000e+00 : f32
    %357 = vector.broadcast %cst_55 : f32 to vector<8x32xf32>
    %358 = arith.addf %357, %356 : vector<8x32xf32>
    %359 = arith.divf %357, %358 : vector<8x32xf32>
    %360 = vector.extract_strided_slice %347 {offsets = [0, 64], sizes = [8, 32], strides = [1, 1]} : vector<8x128xf32> to vector<8x32xf32>
    %361 = math.tanh %360 : vector<8x32xf32>
    %362 = vector.extract_strided_slice %347 {offsets = [0, 96], sizes = [8, 32], strides = [1, 1]} : vector<8x128xf32> to vector<8x32xf32>
    %363 = arith.negf %362 : vector<8x32xf32>
    %364 = math.exp %363 : vector<8x32xf32>
    %cst_56 = arith.constant 1.000000e+00 : f32
    %365 = vector.broadcast %cst_56 : f32 to vector<8x32xf32>
    %366 = arith.addf %365, %364 : vector<8x32xf32>
    %367 = arith.divf %365, %366 : vector<8x32xf32>
    %368 = arith.mulf %359, %341 : vector<8x32xf32>
    %369 = arith.mulf %353, %361 : vector<8x32xf32>
    %370 = arith.addf %368, %369 : vector<8x32xf32>
    %371 = math.tanh %370 : vector<8x32xf32>
    %372 = arith.mulf %367, %371 : vector<8x32xf32>
    %373 = vector.extract_strided_slice %38 {offsets = [0, 0], sizes = [8, 16], strides = [1, 1]} : vector<8x32xf32> to vector<8x16xf32>
    %374 = vector.extract_strided_slice %69 {offsets = [0, 0], sizes = [8, 16], strides = [1, 1]} : vector<8x32xf32> to vector<8x16xf32>
    %375 = vector.extract_strided_slice %100 {offsets = [0, 0], sizes = [8, 16], strides = [1, 1]} : vector<8x32xf32> to vector<8x16xf32>
    %376 = vector.extract_strided_slice %131 {offsets = [0, 0], sizes = [8, 16], strides = [1, 1]} : vector<8x32xf32> to vector<8x16xf32>
    %377 = vector.extract_strided_slice %162 {offsets = [0, 0], sizes = [8, 16], strides = [1, 1]} : vector<8x32xf32> to vector<8x16xf32>
    %378 = vector.extract_strided_slice %193 {offsets = [0, 0], sizes = [8, 16], strides = [1, 1]} : vector<8x32xf32> to vector<8x16xf32>
    %379 = vector.extract_strided_slice %227 {offsets = [0, 0], sizes = [8, 16], strides = [1, 1]} : vector<8x32xf32> to vector<8x16xf32>
    %380 = vector.extract_strided_slice %256 {offsets = [0, 0], sizes = [8, 16], strides = [1, 1]} : vector<8x32xf32> to vector<8x16xf32>
    %381 = vector.shape_cast %373 : vector<8x16xf32> to vector<8x1x16xf32>
    %382 = vector.shape_cast %374 : vector<8x16xf32> to vector<8x1x16xf32>
    %383 = vector.shape_cast %375 : vector<8x16xf32> to vector<8x1x16xf32>
    %384 = vector.shape_cast %376 : vector<8x16xf32> to vector<8x1x16xf32>
    %385 = vector.shape_cast %377 : vector<8x16xf32> to vector<8x1x16xf32>
    %386 = vector.shape_cast %378 : vector<8x16xf32> to vector<8x1x16xf32>
    %387 = vector.shape_cast %379 : vector<8x16xf32> to vector<8x1x16xf32>
    %388 = vector.shape_cast %380 : vector<8x16xf32> to vector<8x1x16xf32>
    %389 = tpu.concatenate %381, %382, %383, %384, %385, %386, %387, %388 in 1 : vector<8x1x16xf32>, vector<8x1x16xf32>, vector<8x1x16xf32>, vector<8x1x16xf32>, vector<8x1x16xf32>, vector<8x1x16xf32>, vector<8x1x16xf32>, vector<8x1x16xf32> -> vector<8x8x16xf32>
    %390 = vector.extract_strided_slice %256 {offsets = [0, 16], sizes = [8, 16], strides = [1, 1]} : vector<8x32xf32> to vector<8x16xf32>
    %391 = vector.extract_strided_slice %227 {offsets = [0, 16], sizes = [8, 16], strides = [1, 1]} : vector<8x32xf32> to vector<8x16xf32>
    %392 = vector.extract_strided_slice %193 {offsets = [0, 16], sizes = [8, 16], strides = [1, 1]} : vector<8x32xf32> to vector<8x16xf32>
    %393 = vector.extract_strided_slice %162 {offsets = [0, 16], sizes = [8, 16], strides = [1, 1]} : vector<8x32xf32> to vector<8x16xf32>
    %394 = vector.extract_strided_slice %131 {offsets = [0, 16], sizes = [8, 16], strides = [1, 1]} : vector<8x32xf32> to vector<8x16xf32>
    %395 = vector.extract_strided_slice %100 {offsets = [0, 16], sizes = [8, 16], strides = [1, 1]} : vector<8x32xf32> to vector<8x16xf32>
    %396 = vector.extract_strided_slice %69 {offsets = [0, 16], sizes = [8, 16], strides = [1, 1]} : vector<8x32xf32> to vector<8x16xf32>
    %397 = vector.extract_strided_slice %38 {offsets = [0, 16], sizes = [8, 16], strides = [1, 1]} : vector<8x32xf32> to vector<8x16xf32>
    %398 = vector.shape_cast %390 : vector<8x16xf32> to vector<8x1x16xf32>
    %399 = vector.shape_cast %391 : vector<8x16xf32> to vector<8x1x16xf32>
    %400 = vector.shape_cast %392 : vector<8x16xf32> to vector<8x1x16xf32>
    %401 = vector.shape_cast %393 : vector<8x16xf32> to vector<8x1x16xf32>
    %402 = vector.shape_cast %394 : vector<8x16xf32> to vector<8x1x16xf32>
    %403 = vector.shape_cast %395 : vector<8x16xf32> to vector<8x1x16xf32>
    %404 = vector.shape_cast %396 : vector<8x16xf32> to vector<8x1x16xf32>
    %405 = vector.shape_cast %397 : vector<8x16xf32> to vector<8x1x16xf32>
    %406 = tpu.concatenate %398, %399, %400, %401, %402, %403, %404, %405 in 1 : vector<8x1x16xf32>, vector<8x1x16xf32>, vector<8x1x16xf32>, vector<8x1x16xf32>, vector<8x1x16xf32>, vector<8x1x16xf32>, vector<8x1x16xf32>, vector<8x1x16xf32> -> vector<8x8x16xf32>
    %407 = tpu.concatenate %389, %406 in 2 : vector<8x8x16xf32>, vector<8x8x16xf32> -> vector<8x8x32xf32>
    %408 = vector.extract_strided_slice %285 {offsets = [0, 0], sizes = [8, 16], strides = [1, 1]} : vector<8x32xf32> to vector<8x16xf32>
    %409 = vector.extract_strided_slice %314 {offsets = [0, 0], sizes = [8, 16], strides = [1, 1]} : vector<8x32xf32> to vector<8x16xf32>
    %410 = vector.extract_strided_slice %343 {offsets = [0, 0], sizes = [8, 16], strides = [1, 1]} : vector<8x32xf32> to vector<8x16xf32>
    %411 = vector.extract_strided_slice %372 {offsets = [0, 0], sizes = [8, 16], strides = [1, 1]} : vector<8x32xf32> to vector<8x16xf32>
    %412 = vector.shape_cast %408 : vector<8x16xf32> to vector<8x1x16xf32>
    %413 = vector.shape_cast %409 : vector<8x16xf32> to vector<8x1x16xf32>
    %414 = vector.shape_cast %410 : vector<8x16xf32> to vector<8x1x16xf32>
    %415 = vector.shape_cast %411 : vector<8x16xf32> to vector<8x1x16xf32>
    %416 = tpu.concatenate %412, %413, %414, %415 in 1 : vector<8x1x16xf32>, vector<8x1x16xf32>, vector<8x1x16xf32>, vector<8x1x16xf32> -> vector<8x4x16xf32>
    %417 = vector.extract_strided_slice %372 {offsets = [0, 16], sizes = [8, 16], strides = [1, 1]} : vector<8x32xf32> to vector<8x16xf32>
    %418 = vector.extract_strided_slice %343 {offsets = [0, 16], sizes = [8, 16], strides = [1, 1]} : vector<8x32xf32> to vector<8x16xf32>
    %419 = vector.extract_strided_slice %314 {offsets = [0, 16], sizes = [8, 16], strides = [1, 1]} : vector<8x32xf32> to vector<8x16xf32>
    %420 = vector.extract_strided_slice %285 {offsets = [0, 16], sizes = [8, 16], strides = [1, 1]} : vector<8x32xf32> to vector<8x16xf32>
    %421 = vector.shape_cast %417 : vector<8x16xf32> to vector<8x1x16xf32>
    %422 = vector.shape_cast %418 : vector<8x16xf32> to vector<8x1x16xf32>
    %423 = vector.shape_cast %419 : vector<8x16xf32> to vector<8x1x16xf32>
    %424 = vector.shape_cast %420 : vector<8x16xf32> to vector<8x1x16xf32>
    %425 = tpu.concatenate %421, %422, %423, %424 in 1 : vector<8x1x16xf32>, vector<8x1x16xf32>, vector<8x1x16xf32>, vector<8x1x16xf32> -> vector<8x4x16xf32>
    %426 = tpu.concatenate %416, %425 in 2 : vector<8x4x16xf32>, vector<8x4x16xf32> -> vector<8x4x32xf32>
    %427 = vector.extract_strided_slice %39 {offsets = [0, 0], sizes = [8, 16], strides = [1, 1]} : vector<8x32xf32> to vector<8x16xf32>
    %428 = vector.extract_strided_slice %70 {offsets = [0, 0], sizes = [8, 16], strides = [1, 1]} : vector<8x32xf32> to vector<8x16xf32>
    %429 = vector.extract_strided_slice %101 {offsets = [0, 0], sizes = [8, 16], strides = [1, 1]} : vector<8x32xf32> to vector<8x16xf32>
    %430 = vector.extract_strided_slice %132 {offsets = [0, 0], sizes = [8, 16], strides = [1, 1]} : vector<8x32xf32> to vector<8x16xf32>
    %431 = vector.extract_strided_slice %163 {offsets = [0, 0], sizes = [8, 16], strides = [1, 1]} : vector<8x32xf32> to vector<8x16xf32>
    %432 = vector.extract_strided_slice %194 {offsets = [0, 0], sizes = [8, 16], strides = [1, 1]} : vector<8x32xf32> to vector<8x16xf32>
    %433 = vector.shape_cast %427 : vector<8x16xf32> to vector<8x1x16xf32>
    %434 = vector.shape_cast %428 : vector<8x16xf32> to vector<8x1x16xf32>
    %435 = vector.shape_cast %429 : vector<8x16xf32> to vector<8x1x16xf32>
    %436 = vector.shape_cast %430 : vector<8x16xf32> to vector<8x1x16xf32>
    %437 = vector.shape_cast %431 : vector<8x16xf32> to vector<8x1x16xf32>
    %438 = vector.shape_cast %432 : vector<8x16xf32> to vector<8x1x16xf32>
    %439 = tpu.concatenate %433, %434, %435, %436, %437, %438 in 1 : vector<8x1x16xf32>, vector<8x1x16xf32>, vector<8x1x16xf32>, vector<8x1x16xf32>, vector<8x1x16xf32>, vector<8x1x16xf32> -> vector<8x6x16xf32>
    %440 = vector.extract_strided_slice %194 {offsets = [0, 16], sizes = [8, 16], strides = [1, 1]} : vector<8x32xf32> to vector<8x16xf32>
    %441 = vector.extract_strided_slice %163 {offsets = [0, 16], sizes = [8, 16], strides = [1, 1]} : vector<8x32xf32> to vector<8x16xf32>
    %442 = vector.extract_strided_slice %132 {offsets = [0, 16], sizes = [8, 16], strides = [1, 1]} : vector<8x32xf32> to vector<8x16xf32>
    %443 = vector.extract_strided_slice %101 {offsets = [0, 16], sizes = [8, 16], strides = [1, 1]} : vector<8x32xf32> to vector<8x16xf32>
    %444 = vector.extract_strided_slice %70 {offsets = [0, 16], sizes = [8, 16], strides = [1, 1]} : vector<8x32xf32> to vector<8x16xf32>
    %445 = vector.extract_strided_slice %39 {offsets = [0, 16], sizes = [8, 16], strides = [1, 1]} : vector<8x32xf32> to vector<8x16xf32>
    %446 = vector.shape_cast %440 : vector<8x16xf32> to vector<8x1x16xf32>
    %447 = vector.shape_cast %441 : vector<8x16xf32> to vector<8x1x16xf32>
    %448 = vector.shape_cast %442 : vector<8x16xf32> to vector<8x1x16xf32>
    %449 = vector.shape_cast %443 : vector<8x16xf32> to vector<8x1x16xf32>
    %450 = vector.shape_cast %444 : vector<8x16xf32> to vector<8x1x16xf32>
    %451 = vector.shape_cast %445 : vector<8x16xf32> to vector<8x1x16xf32>
    %452 = tpu.concatenate %446, %447, %448, %449, %450, %451 in 1 : vector<8x1x16xf32>, vector<8x1x16xf32>, vector<8x1x16xf32>, vector<8x1x16xf32>, vector<8x1x16xf32>, vector<8x1x16xf32> -> vector<8x6x16xf32>
    %453 = tpu.concatenate %439, %452 in 2 : vector<8x6x16xf32>, vector<8x6x16xf32> -> vector<8x6x32xf32>
    %454 = tpu.concatenate %426, %453 in 1 : vector<8x4x32xf32>, vector<8x6x32xf32> -> vector<8x10x32xf32>
    %c0_57 = arith.constant 0 : index
    %c0_58 = arith.constant 0 : index
    %455 = vector.load %arg4[%c0_57, %c0_58] : memref<32x32xbf16, #tpu.memory_space<vmem>>, vector<32x32xbf16>
    %c0_59 = arith.constant 0 : index
    %c0_60 = arith.constant 0 : index
    %456 = vector.load %arg5[%c0_59, %c0_60] : memref<64x24xbf16, #tpu.memory_space<vmem>>, vector<64x24xbf16>
    %c0_61 = arith.constant 0 : index
    %c0_62 = arith.constant 0 : index
    %c0_63 = arith.constant 0 : index
    %457 = vector.load %arg7[%c0_61, %c0_62, %c0_63] : memref<3x64x24xbf16, #tpu.memory_space<vmem>>, vector<3x64x24xbf16>
    %c0_64 = arith.constant 0 : index
    %c0_65 = arith.constant 0 : index
    %c0_66 = arith.constant 0 : index
    %458 = vector.load %arg9[%c0_64, %c0_65, %c0_66] : memref<5x64x24xbf16, #tpu.memory_space<vmem>>, vector<5x64x24xbf16>
    %c0_67 = arith.constant 0 : index
    %c0_68 = arith.constant 0 : index
    %459 = vector.load %arg6[%c0_67, %c0_68] : memref<1x24xf32, #tpu.memory_space<vmem>>, vector<1x24xf32>
    %c0_69 = arith.constant 0 : index
    %c0_70 = arith.constant 0 : index
    %460 = vector.load %arg8[%c0_69, %c0_70] : memref<1x24xf32, #tpu.memory_space<vmem>>, vector<1x24xf32>
    %c0_71 = arith.constant 0 : index
    %c0_72 = arith.constant 0 : index
    %461 = vector.load %arg10[%c0_71, %c0_72] : memref<1x24xf32, #tpu.memory_space<vmem>>, vector<1x24xf32>
    %c0_73 = arith.constant 0 : index
    %c0_74 = arith.constant 0 : index
    %462 = vector.load %arg11[%c0_73, %c0_74] : memref<1x24xf32, #tpu.memory_space<vmem>>, vector<1x24xf32>
    %463 = vector.extract_strided_slice %407 {offsets = [0, 0, 0], sizes = [1, 8, 32], strides = [1, 1, 1]} : vector<8x8x32xf32> to vector<1x8x32xf32>
    %464 = vector.shape_cast %463 : vector<1x8x32xf32> to vector<8x32xf32>
    %465 = vector.extract_strided_slice %454 {offsets = [0, 0, 0], sizes = [1, 10, 32], strides = [1, 1, 1]} : vector<8x10x32xf32> to vector<1x10x32xf32>
    %466 = vector.shape_cast %465 : vector<1x10x32xf32> to vector<10x32xf32>
    %467 = arith.truncf %464 : vector<8x32xf32> to vector<8x32xbf16>
    %468 = arith.truncf %466 : vector<10x32xf32> to vector<10x32xbf16>
    %cst_75 = arith.constant dense<0.000000e+00> : vector<10x32xf32>
    %469 = tpu.matmul %468, %455, %cst_75 {dimension_numbers = #tpu.dot_dimension_numbers<[1], [0], [0], [1], [0, 0, 1, 1], [], []>} : vector<10x32xbf16>, vector<32x32xbf16>, vector<10x32xf32> -> vector<10x32xf32>
    %470 = arith.truncf %469 : vector<10x32xf32> to vector<10x32xbf16>
    %cst_76 = arith.constant dense<0.000000e+00> : vector<10x8xf32>
    %471 = tpu.matmul %470, %467, %cst_76 {dimension_numbers = #tpu.dot_dimension_numbers<[1], [1], [0], [0], [0, 0, 1, 0], [], []>} : vector<10x32xbf16>, vector<8x32xbf16>, vector<10x8xf32> -> vector<10x8xf32>
    %cst_77 = arith.constant 0.316227764 : f32
    %472 = vector.broadcast %cst_77 : f32 to vector<10x8xf32>
    %473 = arith.mulf %471, %472 : vector<10x8xf32>
    %cst_78 = arith.constant dense<0xFF800000> : vector<10xf32>
    %474 = vector.multi_reduction <maximumf>, %473, %cst_78 [1] : vector<10x8xf32> to vector<10xf32>
    %475 = vector.shape_cast %474 : vector<10xf32> to vector<10x1xf32>
    %cst_79 = arith.constant dense<0xFF800000> : vector<1xf32>
    %476 = vector.multi_reduction <maximumf>, %475, %cst_79 [0] : vector<10x1xf32> to vector<1xf32>
    %477 = vector.shape_cast %476 : vector<1xf32> to vector<1x1xf32>
    %478 = vector.broadcast %477 : vector<1x1xf32> to vector<10x8xf32>
    %479 = arith.subf %473, %478 : vector<10x8xf32>
    %480 = math.exp %479 : vector<10x8xf32>
    %cst_80 = arith.constant dense<0.000000e+00> : vector<10xf32>
    %481 = vector.multi_reduction <add>, %480, %cst_80 [1] : vector<10x8xf32> to vector<10xf32>
    %482 = vector.shape_cast %481 : vector<10xf32> to vector<10x1xf32>
    %cst_81 = arith.constant dense<0.000000e+00> : vector<1xf32>
    %483 = vector.multi_reduction <add>, %482, %cst_81 [0] : vector<10x1xf32> to vector<1xf32>
    %484 = vector.shape_cast %483 : vector<1xf32> to vector<1x1xf32>
    %485 = vector.broadcast %484 : vector<1x1xf32> to vector<10x8xf32>
    %486 = arith.divf %480, %485 : vector<10x8xf32>
    %487 = arith.truncf %486 : vector<10x8xf32> to vector<10x8xbf16>
    %cst_82 = arith.constant dense<0.000000e+00> : vector<8x32xf32>
    %488 = tpu.matmul %487, %468, %cst_82 {dimension_numbers = #tpu.dot_dimension_numbers<[0], [0], [1], [1], [0, 1, 1, 1], [], []>} : vector<10x8xbf16>, vector<10x32xbf16>, vector<8x32xf32> -> vector<8x32xf32>
    %489 = tpu.concatenate %464, %488 in 1 : vector<8x32xf32>, vector<8x32xf32> -> vector<8x64xf32>
    %490 = arith.truncf %489 : vector<8x64xf32> to vector<8x64xbf16>
    %cst_83 = arith.constant dense<0.000000e+00> : vector<8x24xf32>
    %491 = tpu.matmul %490, %456, %cst_83 {dimension_numbers = #tpu.dot_dimension_numbers<[1], [0], [0], [1], [0, 0, 1, 1], [], []>} : vector<8x64xbf16>, vector<64x24xbf16>, vector<8x24xf32> -> vector<8x24xf32>
    %492 = vector.broadcast %459 : vector<1x24xf32> to vector<8x24xf32>
    %493 = arith.addf %491, %492 : vector<8x24xf32>
    %cst_84 = arith.constant 0.000000e+00 : f32
    %494 = vector.broadcast %cst_84 : f32 to vector<8x24xf32>
    %495 = arith.maximumf %493, %494 : vector<8x24xf32>
    %cst_85 = arith.constant dense<0xFF800000> : vector<24xf32>
    %496 = vector.multi_reduction <maximumf>, %495, %cst_85 [0] : vector<8x24xf32> to vector<24xf32>
    %497 = vector.shape_cast %496 : vector<24xf32> to vector<1x24xf32>
    %498 = vector.extract_strided_slice %457 {offsets = [0, 0, 0], sizes = [1, 64, 24], strides = [1, 1, 1]} : vector<3x64x24xbf16> to vector<1x64x24xbf16>
    %499 = vector.shape_cast %498 : vector<1x64x24xbf16> to vector<64x24xbf16>
    %cst_86 = arith.constant dense<0.000000e+00> : vector<8x24xf32>
    %500 = tpu.matmul %490, %499, %cst_86 {dimension_numbers = #tpu.dot_dimension_numbers<[1], [0], [0], [1], [0, 0, 1, 1], [], []>} : vector<8x64xbf16>, vector<64x24xbf16>, vector<8x24xf32> -> vector<8x24xf32>
    %501 = vector.extract_strided_slice %457 {offsets = [1, 0, 0], sizes = [1, 64, 24], strides = [1, 1, 1]} : vector<3x64x24xbf16> to vector<1x64x24xbf16>
    %502 = vector.shape_cast %501 : vector<1x64x24xbf16> to vector<64x24xbf16>
    %cst_87 = arith.constant dense<0.000000e+00> : vector<8x24xf32>
    %503 = tpu.matmul %490, %502, %cst_87 {dimension_numbers = #tpu.dot_dimension_numbers<[1], [0], [0], [1], [0, 0, 1, 1], [], []>} : vector<8x64xbf16>, vector<64x24xbf16>, vector<8x24xf32> -> vector<8x24xf32>
    %504 = vector.extract_strided_slice %457 {offsets = [2, 0, 0], sizes = [1, 64, 24], strides = [1, 1, 1]} : vector<3x64x24xbf16> to vector<1x64x24xbf16>
    %505 = vector.shape_cast %504 : vector<1x64x24xbf16> to vector<64x24xbf16>
    %cst_88 = arith.constant dense<0.000000e+00> : vector<8x24xf32>
    %506 = tpu.matmul %490, %505, %cst_88 {dimension_numbers = #tpu.dot_dimension_numbers<[1], [0], [0], [1], [0, 0, 1, 1], [], []>} : vector<8x64xbf16>, vector<64x24xbf16>, vector<8x24xf32> -> vector<8x24xf32>
    %507 = vector.extract_strided_slice %500 {offsets = [0, 0], sizes = [6, 24], strides = [1, 1]} : vector<8x24xf32> to vector<6x24xf32>
    %508 = vector.extract_strided_slice %503 {offsets = [1, 0], sizes = [6, 24], strides = [1, 1]} : vector<8x24xf32> to vector<6x24xf32>
    %509 = arith.addf %507, %508 : vector<6x24xf32>
    %510 = vector.extract_strided_slice %506 {offsets = [2, 0], sizes = [6, 24], strides = [1, 1]} : vector<8x24xf32> to vector<6x24xf32>
    %511 = arith.addf %509, %510 : vector<6x24xf32>
    %512 = vector.broadcast %460 : vector<1x24xf32> to vector<6x24xf32>
    %513 = arith.addf %511, %512 : vector<6x24xf32>
    %cst_89 = arith.constant 0.000000e+00 : f32
    %514 = vector.broadcast %cst_89 : f32 to vector<6x24xf32>
    %515 = arith.maximumf %513, %514 : vector<6x24xf32>
    %cst_90 = arith.constant dense<0xFF800000> : vector<24xf32>
    %516 = vector.multi_reduction <maximumf>, %515, %cst_90 [0] : vector<6x24xf32> to vector<24xf32>
    %517 = vector.shape_cast %516 : vector<24xf32> to vector<1x24xf32>
    %518 = arith.maximumf %497, %517 : vector<1x24xf32>
    %519 = vector.extract_strided_slice %458 {offsets = [0, 0, 0], sizes = [1, 64, 24], strides = [1, 1, 1]} : vector<5x64x24xbf16> to vector<1x64x24xbf16>
    %520 = vector.shape_cast %519 : vector<1x64x24xbf16> to vector<64x24xbf16>
    %cst_91 = arith.constant dense<0.000000e+00> : vector<8x24xf32>
    %521 = tpu.matmul %490, %520, %cst_91 {dimension_numbers = #tpu.dot_dimension_numbers<[1], [0], [0], [1], [0, 0, 1, 1], [], []>} : vector<8x64xbf16>, vector<64x24xbf16>, vector<8x24xf32> -> vector<8x24xf32>
    %522 = vector.extract_strided_slice %458 {offsets = [1, 0, 0], sizes = [1, 64, 24], strides = [1, 1, 1]} : vector<5x64x24xbf16> to vector<1x64x24xbf16>
    %523 = vector.shape_cast %522 : vector<1x64x24xbf16> to vector<64x24xbf16>
    %cst_92 = arith.constant dense<0.000000e+00> : vector<8x24xf32>
    %524 = tpu.matmul %490, %523, %cst_92 {dimension_numbers = #tpu.dot_dimension_numbers<[1], [0], [0], [1], [0, 0, 1, 1], [], []>} : vector<8x64xbf16>, vector<64x24xbf16>, vector<8x24xf32> -> vector<8x24xf32>
    %525 = vector.extract_strided_slice %458 {offsets = [2, 0, 0], sizes = [1, 64, 24], strides = [1, 1, 1]} : vector<5x64x24xbf16> to vector<1x64x24xbf16>
    %526 = vector.shape_cast %525 : vector<1x64x24xbf16> to vector<64x24xbf16>
    %cst_93 = arith.constant dense<0.000000e+00> : vector<8x24xf32>
    %527 = tpu.matmul %490, %526, %cst_93 {dimension_numbers = #tpu.dot_dimension_numbers<[1], [0], [0], [1], [0, 0, 1, 1], [], []>} : vector<8x64xbf16>, vector<64x24xbf16>, vector<8x24xf32> -> vector<8x24xf32>
    %528 = vector.extract_strided_slice %458 {offsets = [3, 0, 0], sizes = [1, 64, 24], strides = [1, 1, 1]} : vector<5x64x24xbf16> to vector<1x64x24xbf16>
    %529 = vector.shape_cast %528 : vector<1x64x24xbf16> to vector<64x24xbf16>
    %cst_94 = arith.constant dense<0.000000e+00> : vector<8x24xf32>
    %530 = tpu.matmul %490, %529, %cst_94 {dimension_numbers = #tpu.dot_dimension_numbers<[1], [0], [0], [1], [0, 0, 1, 1], [], []>} : vector<8x64xbf16>, vector<64x24xbf16>, vector<8x24xf32> -> vector<8x24xf32>
    %531 = vector.extract_strided_slice %458 {offsets = [4, 0, 0], sizes = [1, 64, 24], strides = [1, 1, 1]} : vector<5x64x24xbf16> to vector<1x64x24xbf16>
    %532 = vector.shape_cast %531 : vector<1x64x24xbf16> to vector<64x24xbf16>
    %cst_95 = arith.constant dense<0.000000e+00> : vector<8x24xf32>
    %533 = tpu.matmul %490, %532, %cst_95 {dimension_numbers = #tpu.dot_dimension_numbers<[1], [0], [0], [1], [0, 0, 1, 1], [], []>} : vector<8x64xbf16>, vector<64x24xbf16>, vector<8x24xf32> -> vector<8x24xf32>
    %534 = vector.extract_strided_slice %521 {offsets = [0, 0], sizes = [4, 24], strides = [1, 1]} : vector<8x24xf32> to vector<4x24xf32>
    %535 = vector.extract_strided_slice %524 {offsets = [1, 0], sizes = [4, 24], strides = [1, 1]} : vector<8x24xf32> to vector<4x24xf32>
    %536 = arith.addf %534, %535 : vector<4x24xf32>
    %537 = vector.extract_strided_slice %527 {offsets = [2, 0], sizes = [4, 24], strides = [1, 1]} : vector<8x24xf32> to vector<4x24xf32>
    %538 = arith.addf %536, %537 : vector<4x24xf32>
    %539 = vector.extract_strided_slice %530 {offsets = [3, 0], sizes = [4, 24], strides = [1, 1]} : vector<8x24xf32> to vector<4x24xf32>
    %540 = arith.addf %538, %539 : vector<4x24xf32>
    %541 = vector.extract_strided_slice %533 {offsets = [4, 0], sizes = [4, 24], strides = [1, 1]} : vector<8x24xf32> to vector<4x24xf32>
    %542 = arith.addf %540, %541 : vector<4x24xf32>
    %543 = vector.broadcast %461 : vector<1x24xf32> to vector<4x24xf32>
    %544 = arith.addf %542, %543 : vector<4x24xf32>
    %cst_96 = arith.constant 0.000000e+00 : f32
    %545 = vector.broadcast %cst_96 : f32 to vector<4x24xf32>
    %546 = arith.maximumf %544, %545 : vector<4x24xf32>
    %cst_97 = arith.constant dense<0xFF800000> : vector<24xf32>
    %547 = vector.multi_reduction <maximumf>, %546, %cst_97 [0] : vector<4x24xf32> to vector<24xf32>
    %548 = vector.shape_cast %547 : vector<24xf32> to vector<1x24xf32>
    %549 = arith.maximumf %518, %548 : vector<1x24xf32>
    %550 = arith.mulf %549, %462 : vector<1x24xf32>
    %cst_98 = arith.constant dense<0.000000e+00> : vector<1xf32>
    %551 = vector.multi_reduction <add>, %550, %cst_98 [1] : vector<1x24xf32> to vector<1xf32>
    %552 = vector.shape_cast %551 : vector<1xf32> to vector<1x1xf32>
    %553 = vector.extract_strided_slice %407 {offsets = [1, 0, 0], sizes = [1, 8, 32], strides = [1, 1, 1]} : vector<8x8x32xf32> to vector<1x8x32xf32>
    %554 = vector.shape_cast %553 : vector<1x8x32xf32> to vector<8x32xf32>
    %555 = vector.extract_strided_slice %454 {offsets = [1, 0, 0], sizes = [1, 10, 32], strides = [1, 1, 1]} : vector<8x10x32xf32> to vector<1x10x32xf32>
    %556 = vector.shape_cast %555 : vector<1x10x32xf32> to vector<10x32xf32>
    %557 = arith.truncf %554 : vector<8x32xf32> to vector<8x32xbf16>
    %558 = arith.truncf %556 : vector<10x32xf32> to vector<10x32xbf16>
    %cst_99 = arith.constant dense<0.000000e+00> : vector<10x32xf32>
    %559 = tpu.matmul %558, %455, %cst_99 {dimension_numbers = #tpu.dot_dimension_numbers<[1], [0], [0], [1], [0, 0, 1, 1], [], []>} : vector<10x32xbf16>, vector<32x32xbf16>, vector<10x32xf32> -> vector<10x32xf32>
    %560 = arith.truncf %559 : vector<10x32xf32> to vector<10x32xbf16>
    %cst_100 = arith.constant dense<0.000000e+00> : vector<10x8xf32>
    %561 = tpu.matmul %560, %557, %cst_100 {dimension_numbers = #tpu.dot_dimension_numbers<[1], [1], [0], [0], [0, 0, 1, 0], [], []>} : vector<10x32xbf16>, vector<8x32xbf16>, vector<10x8xf32> -> vector<10x8xf32>
    %cst_101 = arith.constant 0.316227764 : f32
    %562 = vector.broadcast %cst_101 : f32 to vector<10x8xf32>
    %563 = arith.mulf %561, %562 : vector<10x8xf32>
    %cst_102 = arith.constant dense<0xFF800000> : vector<10xf32>
    %564 = vector.multi_reduction <maximumf>, %563, %cst_102 [1] : vector<10x8xf32> to vector<10xf32>
    %565 = vector.shape_cast %564 : vector<10xf32> to vector<10x1xf32>
    %cst_103 = arith.constant dense<0xFF800000> : vector<1xf32>
    %566 = vector.multi_reduction <maximumf>, %565, %cst_103 [0] : vector<10x1xf32> to vector<1xf32>
    %567 = vector.shape_cast %566 : vector<1xf32> to vector<1x1xf32>
    %568 = vector.broadcast %567 : vector<1x1xf32> to vector<10x8xf32>
    %569 = arith.subf %563, %568 : vector<10x8xf32>
    %570 = math.exp %569 : vector<10x8xf32>
    %cst_104 = arith.constant dense<0.000000e+00> : vector<10xf32>
    %571 = vector.multi_reduction <add>, %570, %cst_104 [1] : vector<10x8xf32> to vector<10xf32>
    %572 = vector.shape_cast %571 : vector<10xf32> to vector<10x1xf32>
    %cst_105 = arith.constant dense<0.000000e+00> : vector<1xf32>
    %573 = vector.multi_reduction <add>, %572, %cst_105 [0] : vector<10x1xf32> to vector<1xf32>
    %574 = vector.shape_cast %573 : vector<1xf32> to vector<1x1xf32>
    %575 = vector.broadcast %574 : vector<1x1xf32> to vector<10x8xf32>
    %576 = arith.divf %570, %575 : vector<10x8xf32>
    %577 = arith.truncf %576 : vector<10x8xf32> to vector<10x8xbf16>
    %cst_106 = arith.constant dense<0.000000e+00> : vector<8x32xf32>
    %578 = tpu.matmul %577, %558, %cst_106 {dimension_numbers = #tpu.dot_dimension_numbers<[0], [0], [1], [1], [0, 1, 1, 1], [], []>} : vector<10x8xbf16>, vector<10x32xbf16>, vector<8x32xf32> -> vector<8x32xf32>
    %579 = tpu.concatenate %554, %578 in 1 : vector<8x32xf32>, vector<8x32xf32> -> vector<8x64xf32>
    %580 = arith.truncf %579 : vector<8x64xf32> to vector<8x64xbf16>
    %cst_107 = arith.constant dense<0.000000e+00> : vector<8x24xf32>
    %581 = tpu.matmul %580, %456, %cst_107 {dimension_numbers = #tpu.dot_dimension_numbers<[1], [0], [0], [1], [0, 0, 1, 1], [], []>} : vector<8x64xbf16>, vector<64x24xbf16>, vector<8x24xf32> -> vector<8x24xf32>
    %582 = vector.broadcast %459 : vector<1x24xf32> to vector<8x24xf32>
    %583 = arith.addf %581, %582 : vector<8x24xf32>
    %cst_108 = arith.constant 0.000000e+00 : f32
    %584 = vector.broadcast %cst_108 : f32 to vector<8x24xf32>
    %585 = arith.maximumf %583, %584 : vector<8x24xf32>
    %cst_109 = arith.constant dense<0xFF800000> : vector<24xf32>
    %586 = vector.multi_reduction <maximumf>, %585, %cst_109 [0] : vector<8x24xf32> to vector<24xf32>
    %587 = vector.shape_cast %586 : vector<24xf32> to vector<1x24xf32>
    %588 = vector.extract_strided_slice %457 {offsets = [0, 0, 0], sizes = [1, 64, 24], strides = [1, 1, 1]} : vector<3x64x24xbf16> to vector<1x64x24xbf16>
    %589 = vector.shape_cast %588 : vector<1x64x24xbf16> to vector<64x24xbf16>
    %cst_110 = arith.constant dense<0.000000e+00> : vector<8x24xf32>
    %590 = tpu.matmul %580, %589, %cst_110 {dimension_numbers = #tpu.dot_dimension_numbers<[1], [0], [0], [1], [0, 0, 1, 1], [], []>} : vector<8x64xbf16>, vector<64x24xbf16>, vector<8x24xf32> -> vector<8x24xf32>
    %591 = vector.extract_strided_slice %457 {offsets = [1, 0, 0], sizes = [1, 64, 24], strides = [1, 1, 1]} : vector<3x64x24xbf16> to vector<1x64x24xbf16>
    %592 = vector.shape_cast %591 : vector<1x64x24xbf16> to vector<64x24xbf16>
    %cst_111 = arith.constant dense<0.000000e+00> : vector<8x24xf32>
    %593 = tpu.matmul %580, %592, %cst_111 {dimension_numbers = #tpu.dot_dimension_numbers<[1], [0], [0], [1], [0, 0, 1, 1], [], []>} : vector<8x64xbf16>, vector<64x24xbf16>, vector<8x24xf32> -> vector<8x24xf32>
    %594 = vector.extract_strided_slice %457 {offsets = [2, 0, 0], sizes = [1, 64, 24], strides = [1, 1, 1]} : vector<3x64x24xbf16> to vector<1x64x24xbf16>
    %595 = vector.shape_cast %594 : vector<1x64x24xbf16> to vector<64x24xbf16>
    %cst_112 = arith.constant dense<0.000000e+00> : vector<8x24xf32>
    %596 = tpu.matmul %580, %595, %cst_112 {dimension_numbers = #tpu.dot_dimension_numbers<[1], [0], [0], [1], [0, 0, 1, 1], [], []>} : vector<8x64xbf16>, vector<64x24xbf16>, vector<8x24xf32> -> vector<8x24xf32>
    %597 = vector.extract_strided_slice %590 {offsets = [0, 0], sizes = [6, 24], strides = [1, 1]} : vector<8x24xf32> to vector<6x24xf32>
    %598 = vector.extract_strided_slice %593 {offsets = [1, 0], sizes = [6, 24], strides = [1, 1]} : vector<8x24xf32> to vector<6x24xf32>
    %599 = arith.addf %597, %598 : vector<6x24xf32>
    %600 = vector.extract_strided_slice %596 {offsets = [2, 0], sizes = [6, 24], strides = [1, 1]} : vector<8x24xf32> to vector<6x24xf32>
    %601 = arith.addf %599, %600 : vector<6x24xf32>
    %602 = vector.broadcast %460 : vector<1x24xf32> to vector<6x24xf32>
    %603 = arith.addf %601, %602 : vector<6x24xf32>
    %cst_113 = arith.constant 0.000000e+00 : f32
    %604 = vector.broadcast %cst_113 : f32 to vector<6x24xf32>
    %605 = arith.maximumf %603, %604 : vector<6x24xf32>
    %cst_114 = arith.constant dense<0xFF800000> : vector<24xf32>
    %606 = vector.multi_reduction <maximumf>, %605, %cst_114 [0] : vector<6x24xf32> to vector<24xf32>
    %607 = vector.shape_cast %606 : vector<24xf32> to vector<1x24xf32>
    %608 = arith.maximumf %587, %607 : vector<1x24xf32>
    %609 = vector.extract_strided_slice %458 {offsets = [0, 0, 0], sizes = [1, 64, 24], strides = [1, 1, 1]} : vector<5x64x24xbf16> to vector<1x64x24xbf16>
    %610 = vector.shape_cast %609 : vector<1x64x24xbf16> to vector<64x24xbf16>
    %cst_115 = arith.constant dense<0.000000e+00> : vector<8x24xf32>
    %611 = tpu.matmul %580, %610, %cst_115 {dimension_numbers = #tpu.dot_dimension_numbers<[1], [0], [0], [1], [0, 0, 1, 1], [], []>} : vector<8x64xbf16>, vector<64x24xbf16>, vector<8x24xf32> -> vector<8x24xf32>
    %612 = vector.extract_strided_slice %458 {offsets = [1, 0, 0], sizes = [1, 64, 24], strides = [1, 1, 1]} : vector<5x64x24xbf16> to vector<1x64x24xbf16>
    %613 = vector.shape_cast %612 : vector<1x64x24xbf16> to vector<64x24xbf16>
    %cst_116 = arith.constant dense<0.000000e+00> : vector<8x24xf32>
    %614 = tpu.matmul %580, %613, %cst_116 {dimension_numbers = #tpu.dot_dimension_numbers<[1], [0], [0], [1], [0, 0, 1, 1], [], []>} : vector<8x64xbf16>, vector<64x24xbf16>, vector<8x24xf32> -> vector<8x24xf32>
    %615 = vector.extract_strided_slice %458 {offsets = [2, 0, 0], sizes = [1, 64, 24], strides = [1, 1, 1]} : vector<5x64x24xbf16> to vector<1x64x24xbf16>
    %616 = vector.shape_cast %615 : vector<1x64x24xbf16> to vector<64x24xbf16>
    %cst_117 = arith.constant dense<0.000000e+00> : vector<8x24xf32>
    %617 = tpu.matmul %580, %616, %cst_117 {dimension_numbers = #tpu.dot_dimension_numbers<[1], [0], [0], [1], [0, 0, 1, 1], [], []>} : vector<8x64xbf16>, vector<64x24xbf16>, vector<8x24xf32> -> vector<8x24xf32>
    %618 = vector.extract_strided_slice %458 {offsets = [3, 0, 0], sizes = [1, 64, 24], strides = [1, 1, 1]} : vector<5x64x24xbf16> to vector<1x64x24xbf16>
    %619 = vector.shape_cast %618 : vector<1x64x24xbf16> to vector<64x24xbf16>
    %cst_118 = arith.constant dense<0.000000e+00> : vector<8x24xf32>
    %620 = tpu.matmul %580, %619, %cst_118 {dimension_numbers = #tpu.dot_dimension_numbers<[1], [0], [0], [1], [0, 0, 1, 1], [], []>} : vector<8x64xbf16>, vector<64x24xbf16>, vector<8x24xf32> -> vector<8x24xf32>
    %621 = vector.extract_strided_slice %458 {offsets = [4, 0, 0], sizes = [1, 64, 24], strides = [1, 1, 1]} : vector<5x64x24xbf16> to vector<1x64x24xbf16>
    %622 = vector.shape_cast %621 : vector<1x64x24xbf16> to vector<64x24xbf16>
    %cst_119 = arith.constant dense<0.000000e+00> : vector<8x24xf32>
    %623 = tpu.matmul %580, %622, %cst_119 {dimension_numbers = #tpu.dot_dimension_numbers<[1], [0], [0], [1], [0, 0, 1, 1], [], []>} : vector<8x64xbf16>, vector<64x24xbf16>, vector<8x24xf32> -> vector<8x24xf32>
    %624 = vector.extract_strided_slice %611 {offsets = [0, 0], sizes = [4, 24], strides = [1, 1]} : vector<8x24xf32> to vector<4x24xf32>
    %625 = vector.extract_strided_slice %614 {offsets = [1, 0], sizes = [4, 24], strides = [1, 1]} : vector<8x24xf32> to vector<4x24xf32>
    %626 = arith.addf %624, %625 : vector<4x24xf32>
    %627 = vector.extract_strided_slice %617 {offsets = [2, 0], sizes = [4, 24], strides = [1, 1]} : vector<8x24xf32> to vector<4x24xf32>
    %628 = arith.addf %626, %627 : vector<4x24xf32>
    %629 = vector.extract_strided_slice %620 {offsets = [3, 0], sizes = [4, 24], strides = [1, 1]} : vector<8x24xf32> to vector<4x24xf32>
    %630 = arith.addf %628, %629 : vector<4x24xf32>
    %631 = vector.extract_strided_slice %623 {offsets = [4, 0], sizes = [4, 24], strides = [1, 1]} : vector<8x24xf32> to vector<4x24xf32>
    %632 = arith.addf %630, %631 : vector<4x24xf32>
    %633 = vector.broadcast %461 : vector<1x24xf32> to vector<4x24xf32>
    %634 = arith.addf %632, %633 : vector<4x24xf32>
    %cst_120 = arith.constant 0.000000e+00 : f32
    %635 = vector.broadcast %cst_120 : f32 to vector<4x24xf32>
    %636 = arith.maximumf %634, %635 : vector<4x24xf32>
    %cst_121 = arith.constant dense<0xFF800000> : vector<24xf32>
    %637 = vector.multi_reduction <maximumf>, %636, %cst_121 [0] : vector<4x24xf32> to vector<24xf32>
    %638 = vector.shape_cast %637 : vector<24xf32> to vector<1x24xf32>
    %639 = arith.maximumf %608, %638 : vector<1x24xf32>
    %640 = arith.mulf %639, %462 : vector<1x24xf32>
    %cst_122 = arith.constant dense<0.000000e+00> : vector<1xf32>
    %641 = vector.multi_reduction <add>, %640, %cst_122 [1] : vector<1x24xf32> to vector<1xf32>
    %642 = vector.shape_cast %641 : vector<1xf32> to vector<1x1xf32>
    %643 = tpu.concatenate %552, %642 in 0 : vector<1x1xf32>, vector<1x1xf32> -> vector<2x1xf32>
    %c0_123 = arith.constant 0 : index
    %c0_124 = arith.constant 0 : index
    %644 = vector.load %arg12[%c0_123, %c0_124] : memref<2x1xf32, #tpu.memory_space<vmem>>, vector<2x1xf32>
    tpu.vector_store %arg12[%c0_123, %c0_124], %643 {strides = array<i32>} : memref<2x1xf32, #tpu.memory_space<vmem>>, vector<2x1xf32>,
    return
  }
}

</mosaic_0001>

<llo_original>
// kernel: forward.1
$region0: #{forward.1}
  #allocation0 [shape = 'u32[]', space=smem, size = 0x4, offset = 0x4, fixed_abs, tag = 'smem constant byte address 0x4 - core index']
  #allocation1 [shape = 'u32[144,128]{1,0:T(1,128)}', space=vmem, size = 0x12000, scoped, tag = 'internal scratch']
  %s0 = inlined_call_operand.vmem [shape: bf16[144,64], index: 0, kind: input, shape index: {}]
  %s1 = inlined_call_operand.vmem [shape: bf16[64,128], index: 1, kind: input, shape index: {}]
  %s2 = inlined_call_operand.vmem [shape: f32[1,128], index: 2, kind: input, shape index: {}]
  %s3 = inlined_call_operand.vmem [shape: bf16[32,128], index: 3, kind: input, shape index: {}]
  %s4 = inlined_call_operand.vmem [shape: bf16[32,32], index: 4, kind: input, shape index: {}]
  %s5 = inlined_call_operand.vmem [shape: bf16[64,24], index: 5, kind: input, shape index: {}]
  %s6 = inlined_call_operand.vmem [shape: f32[1,24], index: 6, kind: input, shape index: {}]
  %s7 = inlined_call_operand.vmem [shape: bf16[3,64,24], index: 7, kind: input, shape index: {}]
  %s8 = inlined_call_operand.vmem [shape: f32[1,24], index: 8, kind: input, shape index: {}]
  %s9 = inlined_call_operand.vmem [shape: bf16[5,64,24], index: 9, kind: input, shape index: {}]
  %s10 = inlined_call_operand.vmem [shape: f32[1,24], index: 10, kind: input, shape index: {}]
  %s11 = inlined_call_operand.vmem [shape: f32[1,24], index: 11, kind: input, shape index: {}]
  %s12 = inlined_call_operand.vmem [shape: f32[2,1], index: 12, kind: output, shape index: {}]
  %s13 = sld [smem:[#allocation0]]
  $region58: #{forward.1} parent=0
    _
  %s15 = ssub.s32 1, %s13
  %s16 = scalar_select 0, %s15, %s13
  // Predicated region
  $region2: #{forward.1} parent=0 // pred_check
    _
  $region3: #{forward.1} parent=0 // pred_check_branch
    %18 = sbr.rel (0) target = $region5
  $region4: #{forward.1} parent=0 // pred_region
    _
  $region5: #{forward.1} parent=0 // pred_fallthru
    _
  // Predicated region
  $region6: #{forward.1} parent=0 // pred_check
    _
  $region7: #{forward.1} parent=0 // pred_check_branch
    %20 = sbr.rel (0) target = $region9
  $region8: #{forward.1} parent=0 // pred_region
    _
  $region9: #{forward.1} parent=0 // pred_fallthru
    _
  // Predicated region
  $region10: #{forward.1} parent=0 // pred_check
    _
  $region11: #{forward.1} parent=0 // pred_check_branch
    %22 = sbr.rel (0) target = $region13
  $region12: #{forward.1} parent=0 // pred_region
    _
  $region13: #{forward.1} parent=0 // pred_fallthru
    _
  // Predicated region
  $region14: #{forward.1} parent=0 // pred_check
    _
  $region15: #{forward.1} parent=0 // pred_check_branch
    %24 = sbr.rel (0) target = $region17
  $region16: #{forward.1} parent=0 // pred_region
    _
  $region17: #{forward.1} parent=0 // pred_fallthru
    _
  // Predicated region
  $region18: #{forward.1} parent=0 // pred_check
    _
  $region19: #{forward.1} parent=0 // pred_check_branch
    %26 = sbr.rel (0) target = $region21
  $region20: #{forward.1} parent=0 // pred_region
    _
  $region21: #{forward.1} parent=0 // pred_fallthru
    _
  // Predicated region
  $region22: #{forward.1} parent=0 // pred_check
    _
  $region23: #{forward.1} parent=0 // pred_check_branch
    %28 = sbr.rel (0) target = $region25
  $region24: #{forward.1} parent=0 // pred_region
    _
  $region25: #{forward.1} parent=0 // pred_fallthru
    _
  // Predicated region
  $region26: #{forward.1} parent=0 // pred_check
    _
  $region27: #{forward.1} parent=0 // pred_check_branch
    %30 = sbr.rel (0) target = $region29
  $region28: #{forward.1} parent=0 // pred_region
    _
  $region29: #{forward.1} parent=0 // pred_fallthru
    _
  // Predicated region
  $region30: #{forward.1} parent=0 // pred_check
    _
  $region31: #{forward.1} parent=0 // pred_check_branch
    %32 = sbr.rel (0) target = $region33
  $region32: #{forward.1} parent=0 // pred_region
    _
  $region33: #{forward.1} parent=0 // pred_fallthru
    _
  // Predicated region
  $region34: #{forward.1} parent=0 // pred_check
    _
  $region35: #{forward.1} parent=0 // pred_check_branch
    %34 = sbr.rel (0) target = $region37
  $region36: #{forward.1} parent=0 // pred_region
    _
  $region37: #{forward.1} parent=0 // pred_fallthru
    _
  // Predicated region
  $region38: #{forward.1} parent=0 // pred_check
    _
  $region39: #{forward.1} parent=0 // pred_check_branch
    %36 = sbr.rel (0) target = $region41
  $region40: #{forward.1} parent=0 // pred_region
    _
  $region41: #{forward.1} parent=0 // pred_fallthru
    _
  // Predicated region
  $region42: #{forward.1} parent=0 // pred_check
    _
  $region43: #{forward.1} parent=0 // pred_check_branch
    %38 = sbr.rel (0) target = $region45
  $region44: #{forward.1} parent=0 // pred_region
    _
  $region45: #{forward.1} parent=0 // pred_fallthru
    _
  // Predicated region
  $region46: #{forward.1} parent=0 // pred_check
    _
  $region47: #{forward.1} parent=0 // pred_check_branch
    %40 = sbr.rel (0) target = $region49
  $region48: #{forward.1} parent=0 // pred_region
    _
  $region49: #{forward.1} parent=0 // pred_fallthru
    _
  %v42 = vld [vmem:[%s0] sm:$0xf]
  %v43 = vld [vmem:[%s0 + $0x4] sm:$0xf]
  %v44 = vld [vmem:[%s0 + $0x8] sm:$0xf]
  %v45 = vld [vmem:[%s0 + $0xc] sm:$0xf]
  %v46 = vld [vmem:[%s0 + $0x10] sm:$0xf]
  %v47 = vld [vmem:[%s0 + $0x14] sm:$0xf]
  %v48 = vld [vmem:[%s0 + $0x18] sm:$0xf]
  %v49 = vld [vmem:[%s0 + $0x1c] sm:$0xf]
  %v50 = vld [vmem:[%s0 + $0x20] sm:$0xf]
  %v51 = vld [vmem:[%s0 + $0x24] sm:$0xf]
  %v52 = vld [vmem:[%s0 + $0x28] sm:$0xf]
  %v53 = vld [vmem:[%s0 + $0x2c] sm:$0xf]
  %v54 = vld [vmem:[%s0 + $0x30] sm:$0xf]
  %v55 = vld [vmem:[%s0 + $0x34] sm:$0xf]
  %v56 = vld [vmem:[%s0 + $0x38] sm:$0xf]
  %v57 = vld [vmem:[%s0 + $0x3c] sm:$0xf]
  %v58 = vld [vmem:[%s0 + $0x40] sm:$0xf]
  %v59 = vld [vmem:[%s0 + $0x44] sm:$0xf]
  %v60 = vld [vmem:[%s1] sm:$0xf]
  %v61 = vld [vmem:[%s1 + $0x4] sm:$0xf]
  %v62 = vld [vmem:[%s1 + $0x8] sm:$0xf]
  %v63 = vld [vmem:[%s1 + $0xc] sm:$0xf]
  %v64 = vld [vmem:[%s1 + $0x10] sm:$0xf]
  %v65 = vld [vmem:[%s1 + $0x14] sm:$0xf]
  %v66 = vld [vmem:[%s1 + $0x18] sm:$0xf]
  %v67 = vld [vmem:[%s1 + $0x1c] sm:$0xf]
  %v68 = vld [vmem:[%s2] sm:$0x1]
  %v70 = vlaneseq
  %v71 = vshrl.u32 %v70, 7
  %v72 = vsub.s32 0, %v71
  %v73 = vrot.slane %v68, %v72
  %v93 = vunpack.c.l.b16 %v42
  %v94 = vunpack.c.l.b16 %v43
  %v95 = vunpack.c.l.b16 %v44
  %v96 = vunpack.c.l.b16 %v45
  %v97 = vunpack.c.l.b16 %v46
  %v98 = vunpack.c.l.b16 %v47
  %v99 = vunpack.c.l.b16 %v48
  %v100 = vunpack.c.l.b16 %v49
  %v101 = vunpack.c.l.b16 %v50
  %v102 = vunpack.c.l.b16 %v51
  %v103 = vunpack.c.l.b16 %v52
  %v104 = vunpack.c.l.b16 %v53
  %v105 = vunpack.c.l.b16 %v54
  %v106 = vunpack.c.l.b16 %v55
  %v107 = vunpack.c.l.b16 %v56
  %v108 = vunpack.c.l.b16 %v57
  %v109 = vunpack.c.l.b16 %v58
  %v110 = vunpack.c.l.b16 %v59
  %v111 = vpack.c.b16 %v94, %v93
  %v112 = vpack.c.b16 %v96, %v95
  %v113 = vpack.c.b16 %v98, %v97
  %v114 = vpack.c.b16 %v100, %v99
  %v115 = vpack.c.b16 %v102, %v101
  %v116 = vpack.c.b16 %v104, %v103
  %v117 = vpack.c.b16 %v106, %v105
  %v118 = vpack.c.b16 %v108, %v107
  %v119 = vpack.c.b16 %v110, %v109
  %v128 = vunpack.c.l.b16 %v60
  %v129 = vunpack.c.l.b16 %v61
  %v130 = vunpack.c.l.b16 %v62
  %v131 = vunpack.c.l.b16 %v63
  %v132 = vunpack.c.l.b16 %v64
  %v133 = vunpack.c.l.b16 %v65
  %v134 = vunpack.c.l.b16 %v66
  %v135 = vunpack.c.l.b16 %v67
  %v136 = vpack.c.b16 %v129, %v128
  %v137 = vpack.c.b16 %v131, %v130
  %v138 = vpack.c.b16 %v133, %v132
  %v139 = vpack.c.b16 %v135, %v134
  %vm144 = vcmask 523264
  %v146 = vsel %vm144, %v111, 0
  %v149 = vsel %vm144, %v112, 0
  %v152 = vsel %vm144, %v113, 0
  %v155 = vsel %vm144, %v114, 0
  %v158 = vsel %vm144, %v115, 0
  %v161 = vsel %vm144, %v116, 0
  %v164 = vsel %vm144, %v117, 0
  %v167 = vsel %vm144, %v118, 0
  %v170 = vsel %vm144, %v119, 0
  %172 = vmatprep.subr.bf16.mxu0 0
  %173 = vmatpush1.bf16.msra.mxu0 0
  %174 = vmatprep.subr.bf16.mxu0 0
  %175 = vmatpush1.bf16.msra.mxu0 0
  %176 = vmatprep.subr.bf16.mxu0 0
  %177 = vmatpush1.bf16.msra.mxu0 0
  %178 = vmatprep.subr.bf16.mxu0 0
  %179 = vmatpush1.bf16.msra.mxu0 0
  %180 = vmatprep.subr.bf16.mxu0 0
  %181 = vmatpush1.bf16.msra.mxu0 %v139
  %182 = vmatprep.subr.bf16.mxu0 0
  %183 = vmatpush1.bf16.msra.mxu0 %v138
  %184 = vmatprep.subr.bf16.mxu0 0
  %185 = vmatpush1.bf16.msra.mxu0 %v137
  %186 = vmatprep.subr.bf16.mxu0 0
  %187 = vmatpush1.bf16.msra.mxu0 %v136
  %188 = vmatprep.subr.bf16.mxu0 0
  %189 = vmatpush2.bf16.msra.mxu0 0
  %190 = vmatprep.subr.bf16.mxu0 0
  %191 = vmatpush2.bf16.msra.mxu0 0
  %192 = vmatprep.subr.bf16.mxu0 0
  %193 = vmatpush2.bf16.msra.mxu0 0
  %194 = vmatprep.subr.bf16.mxu0 0
  %195 = vmatpush2.bf16.msra.mxu0 0
  %196 = vmatprep.subr.bf16.mxu0 0
  %197 = vmatpush2.bf16.msra.mxu0 0
  %198 = vmatprep.subr.bf16.mxu0 0
  %199 = vmatpush2.bf16.msra.mxu0 0
  %200 = vmatprep.subr.bf16.mxu0 0
  %201 = vmatpush2.bf16.msra.mxu0 0
  %202 = vmatprep.subr.bf16.mxu0 0
  %203 = vmatpush2.bf16.msra.mxu0 0
  %204 = vmatprep.mubr.bf16.mxu0 0
  %205 = vmatmul.mubr.bf16.gmra.mxu0 %v146
  %v206 = vpop.f32.mrf.mxu0
  %v207 = vadd.f32 %v73, %v206
  %v208 = vpop.f32.mrf.mxu0
  %v209 = vpop.f32.mrf.mxu0
  %v210 = vadd.f32 %v73, %v209
  %v211 = vpop.f32.mrf.mxu0
  %212 = vmatprep.mubr.bf16.mxu0 0
  %213 = vmatmul.mubr.bf16.gmra.mxu0 %v149
  %v214 = vpop.f32.mrf.mxu0
  %v215 = vadd.f32 %v73, %v214
  %v216 = vpop.f32.mrf.mxu0
  %v217 = vpop.f32.mrf.mxu0
  %v218 = vadd.f32 %v73, %v217
  %v219 = vpop.f32.mrf.mxu0
  %220 = vmatprep.mubr.bf16.mxu0 0
  %221 = vmatmul.mubr.bf16.gmra.mxu0 %v152
  %v222 = vpop.f32.mrf.mxu0
  %v223 = vadd.f32 %v73, %v222
  %v224 = vpop.f32.mrf.mxu0
  %v225 = vpop.f32.mrf.mxu0
  %v226 = vadd.f32 %v73, %v225
  %v227 = vpop.f32.mrf.mxu0
  %228 = vmatprep.mubr.bf16.mxu0 0
  %229 = vmatmul.mubr.bf16.gmra.mxu0 %v155
  %v230 = vpop.f32.mrf.mxu0
  %v231 = vadd.f32 %v73, %v230
  %v232 = vpop.f32.mrf.mxu0
  %v233 = vpop.f32.mrf.mxu0
  %v234 = vadd.f32 %v73, %v233
  %v235 = vpop.f32.mrf.mxu0
  %236 = vmatprep.mubr.bf16.mxu0 0
  %237 = vmatmul.mubr.bf16.gmra.mxu0 %v158
  %v238 = vpop.f32.mrf.mxu0
  %v239 = vadd.f32 %v73, %v238
  %v240 = vpop.f32.mrf.mxu0
  %v241 = vpop.f32.mrf.mxu0
  %v242 = vadd.f32 %v73, %v241
  %v243 = vpop.f32.mrf.mxu0
  %244 = vmatprep.mubr.bf16.mxu0 0
  %245 = vmatmul.mubr.bf16.gmra.mxu0 %v161
  %v246 = vpop.f32.mrf.mxu0
  %v247 = vadd.f32 %v73, %v246
  %v248 = vpop.f32.mrf.mxu0
  %v249 = vpop.f32.mrf.mxu0
  %v250 = vadd.f32 %v73, %v249
  %v251 = vpop.f32.mrf.mxu0
  %252 = vmatprep.mubr.bf16.mxu0 0
  %253 = vmatmul.mubr.bf16.gmra.mxu0 %v164
  %v254 = vpop.f32.mrf.mxu0
  %v255 = vadd.f32 %v73, %v254
  %v256 = vpop.f32.mrf.mxu0
  %v257 = vpop.f32.mrf.mxu0
  %v258 = vadd.f32 %v73, %v257
  %v259 = vpop.f32.mrf.mxu0
  %260 = vmatprep.mubr.bf16.mxu0 0
  %261 = vmatmul.mubr.bf16.gmra.mxu0 %v167
  %v262 = vpop.f32.mrf.mxu0
  %v263 = vadd.f32 %v73, %v262
  %v264 = vpop.f32.mrf.mxu0
  %v265 = vpop.f32.mrf.mxu0
  %v266 = vadd.f32 %v73, %v265
  %v267 = vpop.f32.mrf.mxu0
  %268 = vmatprep.mubr.bf16.mxu0 0
  %269 = vmatmul.mubr.bf16.gmra.mxu0 %v170
  %v270 = vpop.f32.mrf.mxu0
  %v271 = vadd.f32 %v73, %v270
  %v272 = vpop.f32.mrf.mxu0
  %v273 = vpop.f32.mrf.mxu0
  %v274 = vadd.f32 %v73, %v273
  %v275 = vpop.f32.mrf.mxu0
  %276 = vdwg.mxu0
  %v277 = vld [vmem:[%s3] sm:$0xf]
  %v278 = vld [vmem:[%s3 + $0x4] sm:$0xf]
  %v279 = vld [vmem:[%s3 + $0x8] sm:$0xf]
  %v280 = vld [vmem:[%s3 + $0xc] sm:$0xf]
  %v285 = vunpack.c.l.b16 %v277
  %v286 = vunpack.c.l.b16 %v278
  %v287 = vunpack.c.l.b16 %v279
  %v288 = vunpack.c.l.b16 %v280
  %v289 = vpack.c.b16 %v286, %v285
  %v290 = vpack.c.b16 %v288, %v287
  %vm293 = vcmask 261120
  %v295 = vsel %vm293, 0, 0
  %297 = vmatprep.subr.bf16.mxu0 0
  %298 = vmatpush1.bf16.msra.mxu0 0
  %299 = vmatprep.subr.bf16.mxu0 0
  %300 = vmatpush1.bf16.msra.mxu0 0
  %301 = vmatprep.subr.bf16.mxu0 0
  %302 = vmatpush1.bf16.msra.mxu0 0
  %303 = vmatprep.subr.bf16.mxu0 0
  %304 = vmatpush1.bf16.msra.mxu0 0
  %305 = vmatprep.subr.bf16.mxu0 0
  %306 = vmatpush1.bf16.msra.mxu0 0
  %307 = vmatprep.subr.bf16.mxu0 0
  %308 = vmatpush1.bf16.msra.mxu0 0
  %309 = vmatprep.subr.bf16.mxu0 0
  %310 = vmatpush1.bf16.msra.mxu0 %v290
  %311 = vmatprep.subr.bf16.mxu0 0
  %312 = vmatpush1.bf16.msra.mxu0 %v289
  %313 = vmatprep.subr.bf16.mxu0 0
  %314 = vmatpush2.bf16.msra.mxu0 0
  %315 = vmatprep.subr.bf16.mxu0 0
  %316 = vmatpush2.bf16.msra.mxu0 0
  %317 = vmatprep.subr.bf16.mxu0 0
  %318 = vmatpush2.bf16.msra.mxu0 0
  %319 = vmatprep.subr.bf16.mxu0 0
  %320 = vmatpush2.bf16.msra.mxu0 0
  %321 = vmatprep.subr.bf16.mxu0 0
  %322 = vmatpush2.bf16.msra.mxu0 0
  %323 = vmatprep.subr.bf16.mxu0 0
  %324 = vmatpush2.bf16.msra.mxu0 0
  %325 = vmatprep.subr.bf16.mxu0 0
  %326 = vmatpush2.bf16.msra.mxu0 0
  %327 = vmatprep.subr.bf16.mxu0 0
  %328 = vmatpush2.bf16.msra.mxu0 0
  %329 = vmatprep.mubr.bf16.mxu0 0
  %330 = vmatmul.mubr.bf16.gmra.mxu0 %v295
  %v331 = vpop.f32.mrf.mxu0
  %v332 = vadd.f32 0.0, %v331
  %v333 = vpop.f32.mrf.mxu0
  %v334 = vpop.f32.mrf.mxu0
  %v335 = vadd.f32 0.0, %v334
  %v336 = vpop.f32.mrf.mxu0
  %337 = vdwg.mxu0
  %v338 = vadd.f32 %v207, %v332
  %v339 = vadd.f32 %v210, %v335
  %v340 = vxor.u32 %v338, 2147483648
  %v341 = vxor.u32 %v339, 2147483648
  %v342 = vmul.f32 %v340, 1.442695
  %v343 = vpow.pop %v342
  %v344 = vmul.f32 %v341, 1.442695
  %v345 = vpow.pop %v344
  %v346 = vadd.f32 %v343, 1.0
  %v347 = vadd.f32 %v345, 1.0
  %v348 = vrcp.pop %v346
  %v349 = vmul.f32 1.0, %v348
  %v350 = vrcp.pop %v347
  %v351 = vmul.f32 1.0, %v350
  %v352 = vtanh.pop %v338
  %v353 = vtanh.pop %v339
  %v354 = vmul.f32 %v349, 0.0
  %v355 = vmul.f32 %v351, 0.0
  %358 = vrot.lane.b32.xlu0 %v352, 64
  %v359 = vpop.permute.xlu0 %358
  %360 = vrot.lane.b32.xlu0 %v353, 64
  %v361 = vpop.permute.xlu0 %360
  %v364 = vmul.f32 %v349, %v359
  %v365 = vmul.f32 %v351, %v361
  %368 = vrot.lane.b32.xlu0 %v364, 32
  %v369 = vpop.permute.xlu0 %368
  %370 = vrot.lane.b32.xlu0 %v365, 32
  %v371 = vpop.permute.xlu0 %370
  %v374 = vadd.f32 %v354, %v369
  %v375 = vadd.f32 %v355, %v371
  %v376 = vtanh.pop %v374
  %v377 = vtanh.pop %v375
  %380 = vrot.lane.b32.xlu0 %v376, 64
  %v381 = vpop.permute.xlu0 %380
  %382 = vrot.lane.b32.xlu0 %v377, 64
  %v383 = vpop.permute.xlu0 %382
  %v386 = vmul.f32 %v349, %v381
  %v387 = vmul.f32 %v351, %v383
  %v388 = vpack.c.bf16 %v387, %v386
  %390 = vrot.lane.b32.xlu0 %v388, 32
  %v391 = vpop.permute.xlu0 %390
  %v393 = vsel %vm293, %v391, 0
  %395 = vmatprep.subr.bf16.mxu0 0
  %396 = vmatpush1.bf16.msra.mxu0 0
  %397 = vmatprep.subr.bf16.mxu0 0
  %398 = vmatpush1.bf16.msra.mxu0 0
  %399 = vmatprep.subr.bf16.mxu0 0
  %400 = vmatpush1.bf16.msra.mxu0 0
  %401 = vmatprep.subr.bf16.mxu0 0
  %402 = vmatpush1.bf16.msra.mxu0 0
  %403 = vmatprep.subr.bf16.mxu0 0
  %404 = vmatpush1.bf16.msra.mxu0 0
  %405 = vmatprep.subr.bf16.mxu0 0
  %406 = vmatpush1.bf16.msra.mxu0 0
  %407 = vmatprep.subr.bf16.mxu0 0
  %408 = vmatpush1.bf16.msra.mxu0 %v290
  %409 = vmatprep.subr.bf16.mxu0 0
  %410 = vmatpush1.bf16.msra.mxu0 %v289
  %411 = vmatprep.subr.bf16.mxu0 0
  %412 = vmatpush2.bf16.msra.mxu0 0
  %413 = vmatprep.subr.bf16.mxu0 0
  %414 = vmatpush2.bf16.msra.mxu0 0
  %415 = vmatprep.subr.bf16.mxu0 0
  %416 = vmatpush2.bf16.msra.mxu0 0
  %417 = vmatprep.subr.bf16.mxu0 0
  %418 = vmatpush2.bf16.msra.mxu0 0
  %419 = vmatprep.subr.bf16.mxu0 0
  %420 = vmatpush2.bf16.msra.mxu0 0
  %421 = vmatprep.subr.bf16.mxu0 0
  %422 = vmatpush2.bf16.msra.mxu0 0
  %423 = vmatprep.subr.bf16.mxu0 0
  %424 = vmatpush2.bf16.msra.mxu0 0
  %425 = vmatprep.subr.bf16.mxu0 0
  %426 = vmatpush2.bf16.msra.mxu0 0
  %427 = vmatprep.mubr.bf16.mxu0 0
  %428 = vmatmul.mubr.bf16.gmra.mxu0 %v393
  %v429 = vpop.f32.mrf.mxu0
  %v430 = vadd.f32 0.0, %v429
  %v431 = vpop.f32.mrf.mxu0
  %v432 = vpop.f32.mrf.mxu0
  %v433 = vadd.f32 0.0, %v432
  %v434 = vpop.f32.mrf.mxu0
  %435 = vdwg.mxu0
  %v436 = vadd.f32 %v215, %v430
  %v437 = vadd.f32 %v218, %v433
  %v438 = vxor.u32 %v436, 2147483648
  %v439 = vxor.u32 %v437, 2147483648
  %v440 = vmul.f32 %v438, 1.442695
  %v441 = vpow.pop %v440
  %v442 = vmul.f32 %v439, 1.442695
  %v443 = vpow.pop %v442
  %v444 = vadd.f32 %v441, 1.0
  %v445 = vadd.f32 %v443, 1.0
  %v446 = vrcp.pop %v444
  %v447 = vmul.f32 1.0, %v446
  %v448 = vrcp.pop %v445
  %v449 = vmul.f32 1.0, %v448
  %v450 = vtanh.pop %v436
  %v451 = vtanh.pop %v437
  %v452 = vmul.f32 %v447, %v374
  %v453 = vmul.f32 %v449, %v375
  %456 = vrot.lane.b32.xlu0 %v450, 64
  %v457 = vpop.permute.xlu0 %456
  %458 = vrot.lane.b32.xlu0 %v451, 64
  %v459 = vpop.permute.xlu0 %458
  %v462 = vmul.f32 %v447, %v457
  %v463 = vmul.f32 %v449, %v459
  %466 = vrot.lane.b32.xlu0 %v462, 32
  %v467 = vpop.permute.xlu0 %466
  %468 = vrot.lane.b32.xlu0 %v463, 32
  %v469 = vpop.permute.xlu0 %468
  %v472 = vadd.f32 %v452, %v467
  %v473 = vadd.f32 %v453, %v469
  %v474 = vtanh.pop %v472
  %v475 = vtanh.pop %v473
  %478 = vrot.lane.b32.xlu0 %v474, 64
  %v479 = vpop.permute.xlu0 %478
  %480 = vrot.lane.b32.xlu0 %v475, 64
  %v481 = vpop.permute.xlu0 %480
  %v484 = vmul.f32 %v447, %v479
  %v485 = vmul.f32 %v449, %v481
  %v486 = vpack.c.bf16 %v485, %v484
  %488 = vrot.lane.b32.xlu0 %v486, 32
  %v489 = vpop.permute.xlu0 %488
  %v491 = vsel %vm293, %v489, 0
  %493 = vmatprep.subr.bf16.mxu0 0
  %494 = vmatpush1.bf16.msra.mxu0 0
  %495 = vmatprep.subr.bf16.mxu0 0
  %496 = vmatpush1.bf16.msra.mxu0 0
  %497 = vmatprep.subr.bf16.mxu0 0
  %498 = vmatpush1.bf16.msra.mxu0 0
  %499 = vmatprep.subr.bf16.mxu0 0
  %500 = vmatpush1.bf16.msra.mxu0 0
  %501 = vmatprep.subr.bf16.mxu0 0
  %502 = vmatpush1.bf16.msra.mxu0 0
  %503 = vmatprep.subr.bf16.mxu0 0
  %504 = vmatpush1.bf16.msra.mxu0 0
  %505 = vmatprep.subr.bf16.mxu0 0
  %506 = vmatpush1.bf16.msra.mxu0 %v290
  %507 = vmatprep.subr.bf16.mxu0 0
  %508 = vmatpush1.bf16.msra.mxu0 %v289
  %509 = vmatprep.subr.bf16.mxu0 0
  %510 = vmatpush2.bf16.msra.mxu0 0
  %511 = vmatprep.subr.bf16.mxu0 0
  %512 = vmatpush2.bf16.msra.mxu0 0
  %513 = vmatprep.subr.bf16.mxu0 0
  %514 = vmatpush2.bf16.msra.mxu0 0
  %515 = vmatprep.subr.bf16.mxu0 0
  %516 = vmatpush2.bf16.msra.mxu0 0
  %517 = vmatprep.subr.bf16.mxu0 0
  %518 = vmatpush2.bf16.msra.mxu0 0
  %519 = vmatprep.subr.bf16.mxu0 0
  %520 = vmatpush2.bf16.msra.mxu0 0
  %521 = vmatprep.subr.bf16.mxu0 0
  %522 = vmatpush2.bf16.msra.mxu0 0
  %523 = vmatprep.subr.bf16.mxu0 0
  %524 = vmatpush2.bf16.msra.mxu0 0
  %525 = vmatprep.mubr.bf16.mxu0 0
  %526 = vmatmul.mubr.bf16.gmra.mxu0 %v491
  %v527 = vpop.f32.mrf.mxu0
  %v528 = vadd.f32 0.0, %v527
  %v529 = vpop.f32.mrf.mxu0
  %v530 = vpop.f32.mrf.mxu0
  %v531 = vadd.f32 0.0, %v530
  %v532 = vpop.f32.mrf.mxu0
  %533 = vdwg.mxu0
  %v534 = vadd.f32 %v223, %v528
  %v535 = vadd.f32 %v226, %v531
  %v536 = vxor.u32 %v534, 2147483648
  %v537 = vxor.u32 %v535, 2147483648
  %v538 = vmul.f32 %v536, 1.442695
  %v539 = vpow.pop %v538
  %v540 = vmul.f32 %v537, 1.442695
  %v541 = vpow.pop %v540
  %v542 = vadd.f32 %v539, 1.0
  %v543 = vadd.f32 %v541, 1.0
  %v544 = vrcp.pop %v542
  %v545 = vmul.f32 1.0, %v544
  %v546 = vrcp.pop %v543
  %v547 = vmul.f32 1.0, %v546
  %v548 = vtanh.pop %v534
  %v549 = vtanh.pop %v535
  %v550 = vmul.f32 %v545, %v472
  %v551 = vmul.f32 %v547, %v473
  %554 = vrot.lane.b32.xlu0 %v548, 64
  %v555 = vpop.permute.xlu0 %554
  %556 = vrot.lane.b32.xlu0 %v549, 64
  %v557 = vpop.permute.xlu0 %556
  %v560 = vmul.f32 %v545, %v555
  %v561 = vmul.f32 %v547, %v557
  %564 = vrot.lane.b32.xlu0 %v560, 32
  %v565 = vpop.permute.xlu0 %564
  %566 = vrot.lane.b32.xlu0 %v561, 32
  %v567 = vpop.permute.xlu0 %566
  %v570 = vadd.f32 %v550, %v565
  %v571 = vadd.f32 %v551, %v567
  %v572 = vtanh.pop %v570
  %v573 = vtanh.pop %v571
  %576 = vrot.lane.b32.xlu0 %v572, 64
  %v577 = vpop.permute.xlu0 %576
  %578 = vrot.lane.b32.xlu0 %v573, 64
  %v579 = vpop.permute.xlu0 %578
  %v582 = vmul.f32 %v545, %v577
  %v583 = vmul.f32 %v547, %v579
  %v584 = vpack.c.bf16 %v583, %v582
  %586 = vrot.lane.b32.xlu0 %v584, 32
  %v587 = vpop.permute.xlu0 %586
  %v589 = vsel %vm293, %v587, 0
  %591 = vmatprep.subr.bf16.mxu0 0
  %592 = vmatpush1.bf16.msra.mxu0 0
  %593 = vmatprep.subr.bf16.mxu0 0
  %594 = vmatpush1.bf16.msra.mxu0 0
  %595 = vmatprep.subr.bf16.mxu0 0
  %596 = vmatpush1.bf16.msra.mxu0 0
  %597 = vmatprep.subr.bf16.mxu0 0
  %598 = vmatpush1.bf16.msra.mxu0 0
  %599 = vmatprep.subr.bf16.mxu0 0
  %600 = vmatpush1.bf16.msra.mxu0 0
  %601 = vmatprep.subr.bf16.mxu0 0
  %602 = vmatpush1.bf16.msra.mxu0 0
  %603 = vmatprep.subr.bf16.mxu0 0
  %604 = vmatpush1.bf16.msra.mxu0 %v290
  %605 = vmatprep.subr.bf16.mxu0 0
  %606 = vmatpush1.bf16.msra.mxu0 %v289
  %607 = vmatprep.subr.bf16.mxu0 0
  %608 = vmatpush2.bf16.msra.mxu0 0
  %609 = vmatprep.subr.bf16.mxu0 0
  %610 = vmatpush2.bf16.msra.mxu0 0
  %611 = vmatprep.subr.bf16.mxu0 0
  %612 = vmatpush2.bf16.msra.mxu0 0
  %613 = vmatprep.subr.bf16.mxu0 0
  %614 = vmatpush2.bf16.msra.mxu0 0
  %615 = vmatprep.subr.bf16.mxu0 0
  %616 = vmatpush2.bf16.msra.mxu0 0
  %617 = vmatprep.subr.bf16.mxu0 0
  %618 = vmatpush2.bf16.msra.mxu0 0
  %619 = vmatprep.subr.bf16.mxu0 0
  %620 = vmatpush2.bf16.msra.mxu0 0
  %621 = vmatprep.subr.bf16.mxu0 0
  %622 = vmatpush2.bf16.msra.mxu0 0
  %623 = vmatprep.mubr.bf16.mxu0 0
  %624 = vmatmul.mubr.bf16.gmra.mxu0 %v589
  %v625 = vpop.f32.mrf.mxu0
  %v626 = vadd.f32 0.0, %v625
  %v627 = vpop.f32.mrf.mxu0
  %v628 = vpop.f32.mrf.mxu0
  %v629 = vadd.f32 0.0, %v628
  %v630 = vpop.f32.mrf.mxu0
  %631 = vdwg.mxu0
  %v632 = vadd.f32 %v231, %v626
  %v633 = vadd.f32 %v234, %v629
  %v634 = vxor.u32 %v632, 2147483648
  %v635 = vxor.u32 %v633, 2147483648
  %v636 = vmul.f32 %v634, 1.442695
  %v637 = vpow.pop %v636
  %v638 = vmul.f32 %v635, 1.442695
  %v639 = vpow.pop %v638
  %v640 = vadd.f32 %v637, 1.0
  %v641 = vadd.f32 %v639, 1.0
  %v642 = vrcp.pop %v640
  %v643 = vmul.f32 1.0, %v642
  %v644 = vrcp.pop %v641
  %v645 = vmul.f32 1.0, %v644
  %v646 = vtanh.pop %v632
  %v647 = vtanh.pop %v633
  %v648 = vmul.f32 %v643, %v570
  %v649 = vmul.f32 %v645, %v571
  %652 = vrot.lane.b32.xlu0 %v646, 64
  %v653 = vpop.permute.xlu0 %652
  %654 = vrot.lane.b32.xlu0 %v647, 64
  %v655 = vpop.permute.xlu0 %654
  %v658 = vmul.f32 %v643, %v653
  %v659 = vmul.f32 %v645, %v655
  %662 = vrot.lane.b32.xlu0 %v658, 32
  %v663 = vpop.permute.xlu0 %662
  %664 = vrot.lane.b32.xlu0 %v659, 32
  %v665 = vpop.permute.xlu0 %664
  %v668 = vadd.f32 %v648, %v663
  %v669 = vadd.f32 %v649, %v665
  %v670 = vtanh.pop %v668
  %v671 = vtanh.pop %v669
  %674 = vrot.lane.b32.xlu0 %v670, 64
  %v675 = vpop.permute.xlu0 %674
  %676 = vrot.lane.b32.xlu0 %v671, 64
  %v677 = vpop.permute.xlu0 %676
  %v680 = vmul.f32 %v643, %v675
  %v681 = vmul.f32 %v645, %v677
  %v682 = vpack.c.bf16 %v681, %v680
  %684 = vrot.lane.b32.xlu0 %v682, 32
  %v685 = vpop.permute.xlu0 %684
  %v687 = vsel %vm293, %v685, 0
  %689 = vmatprep.subr.bf16.mxu0 0
  %690 = vmatpush1.bf16.msra.mxu0 0
  %691 = vmatprep.subr.bf16.mxu0 0
  %692 = vmatpush1.bf16.msra.mxu0 0
  %693 = vmatprep.subr.bf16.mxu0 0
  %694 = vmatpush1.bf16.msra.mxu0 0
  %695 = vmatprep.subr.bf16.mxu0 0
  %696 = vmatpush1.bf16.msra.mxu0 0
  %697 = vmatprep.subr.bf16.mxu0 0
  %698 = vmatpush1.bf16.msra.mxu0 0
  %699 = vmatprep.subr.bf16.mxu0 0
  %700 = vmatpush1.bf16.msra.mxu0 0
  %701 = vmatprep.subr.bf16.mxu0 0
  %702 = vmatpush1.bf16.msra.mxu0 %v290
  %703 = vmatprep.subr.bf16.mxu0 0
  %704 = vmatpush1.bf16.msra.mxu0 %v289
  %705 = vmatprep.subr.bf16.mxu0 0
  %706 = vmatpush2.bf16.msra.mxu0 0
  %707 = vmatprep.subr.bf16.mxu0 0
  %708 = vmatpush2.bf16.msra.mxu0 0
  %709 = vmatprep.subr.bf16.mxu0 0
  %710 = vmatpush2.bf16.msra.mxu0 0
  %711 = vmatprep.subr.bf16.mxu0 0
  %712 = vmatpush2.bf16.msra.mxu0 0
  %713 = vmatprep.subr.bf16.mxu0 0
  %714 = vmatpush2.bf16.msra.mxu0 0
  %715 = vmatprep.subr.bf16.mxu0 0
  %716 = vmatpush2.bf16.msra.mxu0 0
  %717 = vmatprep.subr.bf16.mxu0 0
  %718 = vmatpush2.bf16.msra.mxu0 0
  %719 = vmatprep.subr.bf16.mxu0 0
  %720 = vmatpush2.bf16.msra.mxu0 0
  %721 = vmatprep.mubr.bf16.mxu0 0
  %722 = vmatmul.mubr.bf16.gmra.mxu0 %v687
  %v723 = vpop.f32.mrf.mxu0
  %v724 = vadd.f32 0.0, %v723
  %v725 = vpop.f32.mrf.mxu0
  %v726 = vpop.f32.mrf.mxu0
  %v727 = vadd.f32 0.0, %v726
  %v728 = vpop.f32.mrf.mxu0
  %729 = vdwg.mxu0
  %v730 = vadd.f32 %v239, %v724
  %v731 = vadd.f32 %v242, %v727
  %v732 = vxor.u32 %v730, 2147483648
  %v733 = vxor.u32 %v731, 2147483648
  %v734 = vmul.f32 %v732, 1.442695
  %v735 = vpow.pop %v734
  %v736 = vmul.f32 %v733, 1.442695
  %v737 = vpow.pop %v736
  %v738 = vadd.f32 %v735, 1.0
  %v739 = vadd.f32 %v737, 1.0
  %v740 = vrcp.pop %v738
  %v741 = vmul.f32 1.0, %v740
  %v742 = vrcp.pop %v739
  %v743 = vmul.f32 1.0, %v742
  %v744 = vtanh.pop %v730
  %v745 = vtanh.pop %v731
  %v746 = vmul.f32 %v741, %v668
  %v747 = vmul.f32 %v743, %v669
  %750 = vrot.lane.b32.xlu0 %v744, 64
  %v751 = vpop.permute.xlu0 %750
  %752 = vrot.lane.b32.xlu0 %v745, 64
  %v753 = vpop.permute.xlu0 %752
  %v756 = vmul.f32 %v741, %v751
  %v757 = vmul.f32 %v743, %v753
  %760 = vrot.lane.b32.xlu0 %v756, 32
  %v761 = vpop.permute.xlu0 %760
  %762 = vrot.lane.b32.xlu0 %v757, 32
  %v763 = vpop.permute.xlu0 %762
  %v766 = vadd.f32 %v746, %v761
  %v767 = vadd.f32 %v747, %v763
  %v768 = vtanh.pop %v766
  %v769 = vtanh.pop %v767
  %772 = vrot.lane.b32.xlu0 %v768, 64
  %v773 = vpop.permute.xlu0 %772
  %774 = vrot.lane.b32.xlu0 %v769, 64
  %v775 = vpop.permute.xlu0 %774
  %v778 = vmul.f32 %v741, %v773
  %v779 = vmul.f32 %v743, %v775
  %v780 = vpack.c.bf16 %v779, %v778
  %782 = vrot.lane.b32.xlu0 %v780, 32
  %v783 = vpop.permute.xlu0 %782
  %v785 = vsel %vm293, %v783, 0
  %787 = vmatprep.subr.bf16.mxu0 0
  %788 = vmatpush1.bf16.msra.mxu0 0
  %789 = vmatprep.subr.bf16.mxu0 0
  %790 = vmatpush1.bf16.msra.mxu0 0
  %791 = vmatprep.subr.bf16.mxu0 0
  %792 = vmatpush1.bf16.msra.mxu0 0
  %793 = vmatprep.subr.bf16.mxu0 0
  %794 = vmatpush1.bf16.msra.mxu0 0
  %795 = vmatprep.subr.bf16.mxu0 0
  %796 = vmatpush1.bf16.msra.mxu0 0
  %797 = vmatprep.subr.bf16.mxu0 0
  %798 = vmatpush1.bf16.msra.mxu0 0
  %799 = vmatprep.subr.bf16.mxu0 0
  %800 = vmatpush1.bf16.msra.mxu0 %v290
  %801 = vmatprep.subr.bf16.mxu0 0
  %802 = vmatpush1.bf16.msra.mxu0 %v289
  %803 = vmatprep.subr.bf16.mxu0 0
  %804 = vmatpush2.bf16.msra.mxu0 0
  %805 = vmatprep.subr.bf16.mxu0 0
  %806 = vmatpush2.bf16.msra.mxu0 0
  %807 = vmatprep.subr.bf16.mxu0 0
  %808 = vmatpush2.bf16.msra.mxu0 0
  %809 = vmatprep.subr.bf16.mxu0 0
  %810 = vmatpush2.bf16.msra.mxu0 0
  %811 = vmatprep.subr.bf16.mxu0 0
  %812 = vmatpush2.bf16.msra.mxu0 0
  %813 = vmatprep.subr.bf16.mxu0 0
  %814 = vmatpush2.bf16.msra.mxu0 0
  %815 = vmatprep.subr.bf16.mxu0 0
  %816 = vmatpush2.bf16.msra.mxu0 0
  %817 = vmatprep.subr.bf16.mxu0 0
  %818 = vmatpush2.bf16.msra.mxu0 0
  %819 = vmatprep.mubr.bf16.mxu0 0
  %820 = vmatmul.mubr.bf16.gmra.mxu0 %v785
  %v821 = vpop.f32.mrf.mxu0
  %v822 = vadd.f32 0.0, %v821
  %v823 = vpop.f32.mrf.mxu0
  %v824 = vpop.f32.mrf.mxu0
  %v825 = vadd.f32 0.0, %v824
  %v826 = vpop.f32.mrf.mxu0
  %827 = vdwg.mxu0
  %v828 = vadd.f32 %v247, %v822
  %v829 = vadd.f32 %v250, %v825
  %v830 = vxor.u32 %v828, 2147483648
  %v831 = vxor.u32 %v829, 2147483648
  %v832 = vmul.f32 %v830, 1.442695
  %v833 = vpow.pop %v832
  %v834 = vmul.f32 %v831, 1.442695
  %v835 = vpow.pop %v834
  %v836 = vadd.f32 %v833, 1.0
  %v837 = vadd.f32 %v835, 1.0
  %v838 = vrcp.pop %v836
  %v839 = vmul.f32 1.0, %v838
  %v840 = vrcp.pop %v837
  %v841 = vmul.f32 1.0, %v840
  %v842 = vtanh.pop %v828
  %v843 = vtanh.pop %v829
  %v844 = vmul.f32 %v839, %v766
  %v845 = vmul.f32 %v841, %v767
  %848 = vrot.lane.b32.xlu0 %v842, 64
  %v849 = vpop.permute.xlu0 %848
  %850 = vrot.lane.b32.xlu0 %v843, 64
  %v851 = vpop.permute.xlu0 %850
  %v854 = vmul.f32 %v839, %v849
  %v855 = vmul.f32 %v841, %v851
  %858 = vrot.lane.b32.xlu0 %v854, 32
  %v859 = vpop.permute.xlu0 %858
  %860 = vrot.lane.b32.xlu0 %v855, 32
  %v861 = vpop.permute.xlu0 %860
  %v864 = vadd.f32 %v844, %v859
  %v865 = vadd.f32 %v845, %v861
  %v866 = vtanh.pop %v864
  %v867 = vtanh.pop %v865
  %870 = vrot.lane.b32.xlu0 %v866, 64
  %v871 = vpop.permute.xlu0 %870
  %872 = vrot.lane.b32.xlu0 %v867, 64
  %v873 = vpop.permute.xlu0 %872
  %v876 = vmul.f32 %v839, %v871
  %v877 = vmul.f32 %v841, %v873
  %v878 = vpack.c.bf16 %v876, %v876
  %880 = vrot.lane.b32.xlu0 %v878, 32
  %v881 = vpop.permute.xlu0 %880
  %v883 = vsel %vm293, %v881, 0
  %885 = vmatprep.subr.bf16.mxu0 0
  %886 = vmatpush1.bf16.msra.mxu0 0
  %887 = vmatprep.subr.bf16.mxu0 0
  %888 = vmatpush1.bf16.msra.mxu0 0
  %889 = vmatprep.subr.bf16.mxu0 0
  %890 = vmatpush1.bf16.msra.mxu0 0
  %891 = vmatprep.subr.bf16.mxu0 0
  %892 = vmatpush1.bf16.msra.mxu0 0
  %893 = vmatprep.subr.bf16.mxu0 0
  %894 = vmatpush1.bf16.msra.mxu0 0
  %895 = vmatprep.subr.bf16.mxu0 0
  %896 = vmatpush1.bf16.msra.mxu0 0
  %897 = vmatprep.subr.bf16.mxu0 0
  %898 = vmatpush1.bf16.msra.mxu0 %v290
  %899 = vmatprep.subr.bf16.mxu0 0
  %900 = vmatpush1.bf16.msra.mxu0 %v289
  %901 = vmatprep.subr.bf16.mxu0 0
  %902 = vmatpush2.bf16.msra.mxu0 0
  %903 = vmatprep.subr.bf16.mxu0 0
  %904 = vmatpush2.bf16.msra.mxu0 0
  %905 = vmatprep.subr.bf16.mxu0 0
  %906 = vmatpush2.bf16.msra.mxu0 0
  %907 = vmatprep.subr.bf16.mxu0 0
  %908 = vmatpush2.bf16.msra.mxu0 0
  %909 = vmatprep.subr.bf16.mxu0 0
  %910 = vmatpush2.bf16.msra.mxu0 0
  %911 = vmatprep.subr.bf16.mxu0 0
  %912 = vmatpush2.bf16.msra.mxu0 0
  %913 = vmatprep.subr.bf16.mxu0 0
  %914 = vmatpush2.bf16.msra.mxu0 0
  %915 = vmatprep.subr.bf16.mxu0 0
  %916 = vmatpush2.bf16.msra.mxu0 0
  %917 = vmatprep.mubr.bf16.mxu0 0
  %918 = vmatmul.mubr.bf16.gmra.mxu0 %v883
  %v919 = vpop.f32.mrf.mxu0
  %v920 = vadd.f32 0.0, %v919
  %v921 = vpop.f32.mrf.mxu0
  %v922 = vpop.f32.mrf.mxu0
  %v923 = vpop.f32.mrf.mxu0
  %924 = vdwg.mxu0
  %v925 = vadd.f32 %v255, %v920
  %v926 = vxor.u32 %v925, 2147483648
  %v927 = vmul.f32 %v926, 1.442695
  %v928 = vpow.pop %v927
  %v929 = vadd.f32 %v928, 1.0
  %v930 = vrcp.pop %v929
  %v931 = vmul.f32 1.0, %v930
  %v932 = vtanh.pop %v925
  %v933 = vmul.f32 %v931, %v864
  %935 = vrot.lane.b32.xlu0 %v932, 64
  %v936 = vpop.permute.xlu0 %935
  %v938 = vmul.f32 %v931, %v936
  %940 = vrot.lane.b32.xlu0 %v938, 32
  %v941 = vpop.permute.xlu0 %940
  %v943 = vadd.f32 %v933, %v941
  %v944 = vtanh.pop %v943
  %946 = vrot.lane.b32.xlu0 %v944, 64
  %v947 = vpop.permute.xlu0 %946
  %v949 = vmul.f32 %v931, %v947
  %v950 = vpack.c.bf16 %v949, %v949
  %952 = vrot.lane.b32.xlu0 %v950, 32
  %v953 = vpop.permute.xlu0 %952
  %v955 = vsel %vm293, %v953, 0
  %957 = vmatprep.subr.bf16.mxu0 0
  %958 = vmatpush1.bf16.msra.mxu0 0
  %959 = vmatprep.subr.bf16.mxu0 0
  %960 = vmatpush1.bf16.msra.mxu0 0
  %961 = vmatprep.subr.bf16.mxu0 0
  %962 = vmatpush1.bf16.msra.mxu0 0
  %963 = vmatprep.subr.bf16.mxu0 0
  %964 = vmatpush1.bf16.msra.mxu0 0
  %965 = vmatprep.subr.bf16.mxu0 0
  %966 = vmatpush1.bf16.msra.mxu0 0
  %967 = vmatprep.subr.bf16.mxu0 0
  %968 = vmatpush1.bf16.msra.mxu0 0
  %969 = vmatprep.subr.bf16.mxu0 0
  %970 = vmatpush1.bf16.msra.mxu0 %v290
  %971 = vmatprep.subr.bf16.mxu0 0
  %972 = vmatpush1.bf16.msra.mxu0 %v289
  %973 = vmatprep.subr.bf16.mxu0 0
  %974 = vmatpush2.bf16.msra.mxu0 0
  %975 = vmatprep.subr.bf16.mxu0 0
  %976 = vmatpush2.bf16.msra.mxu0 0
  %977 = vmatprep.subr.bf16.mxu0 0
  %978 = vmatpush2.bf16.msra.mxu0 0
  %979 = vmatprep.subr.bf16.mxu0 0
  %980 = vmatpush2.bf16.msra.mxu0 0
  %981 = vmatprep.subr.bf16.mxu0 0
  %982 = vmatpush2.bf16.msra.mxu0 0
  %983 = vmatprep.subr.bf16.mxu0 0
  %984 = vmatpush2.bf16.msra.mxu0 0
  %985 = vmatprep.subr.bf16.mxu0 0
  %986 = vmatpush2.bf16.msra.mxu0 0
  %987 = vmatprep.subr.bf16.mxu0 0
  %988 = vmatpush2.bf16.msra.mxu0 0
  %989 = vmatprep.mubr.bf16.mxu0 0
  %990 = vmatmul.mubr.bf16.gmra.mxu0 %v955
  %v991 = vpop.f32.mrf.mxu0
  %v992 = vadd.f32 0.0, %v991
  %v993 = vpop.f32.mrf.mxu0
  %v994 = vpop.f32.mrf.mxu0
  %v995 = vpop.f32.mrf.mxu0
  %996 = vdwg.mxu0
  %v997 = vadd.f32 %v258, %v992
  %v998 = vxor.u32 %v997, 2147483648
  %v999 = vmul.f32 %v998, 1.442695
  %v1000 = vpow.pop %v999
  %v1001 = vadd.f32 %v1000, 1.0
  %v1002 = vrcp.pop %v1001
  %v1003 = vmul.f32 1.0, %v1002
  %v1004 = vtanh.pop %v997
  %v1005 = vmul.f32 %v1003, %v943
  %1007 = vrot.lane.b32.xlu0 %v1004, 64
  %v1008 = vpop.permute.xlu0 %1007
  %v1010 = vmul.f32 %v1003, %v1008
  %1012 = vrot.lane.b32.xlu0 %v1010, 32
  %v1013 = vpop.permute.xlu0 %1012
  %v1015 = vadd.f32 %v1005, %v1013
  %v1016 = vtanh.pop %v1015
  %1018 = vrot.lane.b32.xlu0 %v1016, 64
  %v1019 = vpop.permute.xlu0 %1018
  %v1021 = vmul.f32 %v1003, %v1019
  %v1022 = vpack.c.bf16 %v877, %v877
  %1024 = vrot.lane.b32.xlu0 %v1022, 32
  %v1025 = vpop.permute.xlu0 %1024
  %v1027 = vsel %vm293, %v1025, 0
  %1029 = vmatprep.subr.bf16.mxu0 0
  %1030 = vmatpush1.bf16.msra.mxu0 0
  %1031 = vmatprep.subr.bf16.mxu0 0
  %1032 = vmatpush1.bf16.msra.mxu0 0
  %1033 = vmatprep.subr.bf16.mxu0 0
  %1034 = vmatpush1.bf16.msra.mxu0 0
  %1035 = vmatprep.subr.bf16.mxu0 0
  %1036 = vmatpush1.bf16.msra.mxu0 0
  %1037 = vmatprep.subr.bf16.mxu0 0
  %1038 = vmatpush1.bf16.msra.mxu0 0
  %1039 = vmatprep.subr.bf16.mxu0 0
  %1040 = vmatpush1.bf16.msra.mxu0 0
  %1041 = vmatprep.subr.bf16.mxu0 0
  %1042 = vmatpush1.bf16.msra.mxu0 %v290
  %1043 = vmatprep.subr.bf16.mxu0 0
  %1044 = vmatpush1.bf16.msra.mxu0 %v289
  %1045 = vmatprep.subr.bf16.mxu0 0
  %1046 = vmatpush2.bf16.msra.mxu0 0
  %1047 = vmatprep.subr.bf16.mxu0 0
  %1048 = vmatpush2.bf16.msra.mxu0 0
  %1049 = vmatprep.subr.bf16.mxu0 0
  %1050 = vmatpush2.bf16.msra.mxu0 0
  %1051 = vmatprep.subr.bf16.mxu0 0
  %1052 = vmatpush2.bf16.msra.mxu0 0
  %1053 = vmatprep.subr.bf16.mxu0 0
  %1054 = vmatpush2.bf16.msra.mxu0 0
  %1055 = vmatprep.subr.bf16.mxu0 0
  %1056 = vmatpush2.bf16.msra.mxu0 0
  %1057 = vmatprep.subr.bf16.mxu0 0
  %1058 = vmatpush2.bf16.msra.mxu0 0
  %1059 = vmatprep.subr.bf16.mxu0 0
  %1060 = vmatpush2.bf16.msra.mxu0 0
  %1061 = vmatprep.mubr.bf16.mxu0 0
  %1062 = vmatmul.mubr.bf16.gmra.mxu0 %v1027
  %v1063 = vpop.f32.mrf.mxu0
  %v1064 = vadd.f32 0.0, %v1063
  %v1065 = vpop.f32.mrf.mxu0
  %v1066 = vpop.f32.mrf.mxu0
  %v1067 = vpop.f32.mrf.mxu0
  %1068 = vdwg.mxu0
  %v1069 = vadd.f32 %v263, %v1064
  %v1070 = vxor.u32 %v1069, 2147483648
  %v1071 = vmul.f32 %v1070, 1.442695
  %v1072 = vpow.pop %v1071
  %v1073 = vadd.f32 %v1072, 1.0
  %v1074 = vrcp.pop %v1073
  %v1075 = vmul.f32 1.0, %v1074
  %v1076 = vtanh.pop %v1069
  %v1077 = vmul.f32 %v1075, %v865
  %1079 = vrot.lane.b32.xlu0 %v1076, 64
  %v1080 = vpop.permute.xlu0 %1079
  %v1082 = vmul.f32 %v1075, %v1080
  %1084 = vrot.lane.b32.xlu0 %v1082, 32
  %v1085 = vpop.permute.xlu0 %1084
  %v1087 = vadd.f32 %v1077, %v1085
  %v1088 = vtanh.pop %v1087
  %1090 = vrot.lane.b32.xlu0 %v1088, 64
  %v1091 = vpop.permute.xlu0 %1090
  %v1093 = vmul.f32 %v1075, %v1091
  %v1094 = vpack.c.bf16 %v1093, %v1093
  %1096 = vrot.lane.b32.xlu0 %v1094, 32
  %v1097 = vpop.permute.xlu0 %1096
  %v1099 = vsel %vm293, %v1097, 0
  %1101 = vmatprep.subr.bf16.mxu0 0
  %1102 = vmatpush1.bf16.msra.mxu0 0
  %1103 = vmatprep.subr.bf16.mxu0 0
  %1104 = vmatpush1.bf16.msra.mxu0 0
  %1105 = vmatprep.subr.bf16.mxu0 0
  %1106 = vmatpush1.bf16.msra.mxu0 0
  %1107 = vmatprep.subr.bf16.mxu0 0
  %1108 = vmatpush1.bf16.msra.mxu0 0
  %1109 = vmatprep.subr.bf16.mxu0 0
  %1110 = vmatpush1.bf16.msra.mxu0 0
  %1111 = vmatprep.subr.bf16.mxu0 0
  %1112 = vmatpush1.bf16.msra.mxu0 0
  %1113 = vmatprep.subr.bf16.mxu0 0
  %1114 = vmatpush1.bf16.msra.mxu0 %v290
  %1115 = vmatprep.subr.bf16.mxu0 0
  %1116 = vmatpush1.bf16.msra.mxu0 %v289
  %1117 = vmatprep.subr.bf16.mxu0 0
  %1118 = vmatpush2.bf16.msra.mxu0 0
  %1119 = vmatprep.subr.bf16.mxu0 0
  %1120 = vmatpush2.bf16.msra.mxu0 0
  %1121 = vmatprep.subr.bf16.mxu0 0
  %1122 = vmatpush2.bf16.msra.mxu0 0
  %1123 = vmatprep.subr.bf16.mxu0 0
  %1124 = vmatpush2.bf16.msra.mxu0 0
  %1125 = vmatprep.subr.bf16.mxu0 0
  %1126 = vmatpush2.bf16.msra.mxu0 0
  %1127 = vmatprep.subr.bf16.mxu0 0
  %1128 = vmatpush2.bf16.msra.mxu0 0
  %1129 = vmatprep.subr.bf16.mxu0 0
  %1130 = vmatpush2.bf16.msra.mxu0 0
  %1131 = vmatprep.subr.bf16.mxu0 0
  %1132 = vmatpush2.bf16.msra.mxu0 0
  %1133 = vmatprep.mubr.bf16.mxu0 0
  %1134 = vmatmul.mubr.bf16.gmra.mxu0 %v1099
  %v1135 = vpop.f32.mrf.mxu0
  %v1136 = vadd.f32 0.0, %v1135
  %v1137 = vpop.f32.mrf.mxu0
  %v1138 = vpop.f32.mrf.mxu0
  %v1139 = vpop.f32.mrf.mxu0
  %1140 = vdwg.mxu0
  %v1141 = vadd.f32 %v266, %v1136
  %v1142 = vxor.u32 %v1141, 2147483648
  %v1143 = vmul.f32 %v1142, 1.442695
  %v1144 = vpow.pop %v1143
  %v1145 = vadd.f32 %v1144, 1.0
  %v1146 = vrcp.pop %v1145
  %v1147 = vmul.f32 1.0, %v1146
  %v1148 = vtanh.pop %v1141
  %v1149 = vmul.f32 %v1147, %v1087
  %1151 = vrot.lane.b32.xlu0 %v1148, 64
  %v1152 = vpop.permute.xlu0 %1151
  %v1154 = vmul.f32 %v1147, %v1152
  %1156 = vrot.lane.b32.xlu0 %v1154, 32
  %v1157 = vpop.permute.xlu0 %1156
  %v1159 = vadd.f32 %v1149, %v1157
  %v1160 = vtanh.pop %v1159
  %1162 = vrot.lane.b32.xlu0 %v1160, 64
  %v1163 = vpop.permute.xlu0 %1162
  %v1165 = vmul.f32 %v1147, %v1163
  %v1166 = vpack.c.bf16 %v1165, %v1165
  %1168 = vrot.lane.b32.xlu0 %v1166, 32
  %v1169 = vpop.permute.xlu0 %1168
  %v1171 = vsel %vm293, %v1169, 0
  %1173 = vmatprep.subr.bf16.mxu0 0
  %1174 = vmatpush1.bf16.msra.mxu0 0
  %1175 = vmatprep.subr.bf16.mxu0 0
  %1176 = vmatpush1.bf16.msra.mxu0 0
  %1177 = vmatprep.subr.bf16.mxu0 0
  %1178 = vmatpush1.bf16.msra.mxu0 0
  %1179 = vmatprep.subr.bf16.mxu0 0
  %1180 = vmatpush1.bf16.msra.mxu0 0
  %1181 = vmatprep.subr.bf16.mxu0 0
  %1182 = vmatpush1.bf16.msra.mxu0 0
  %1183 = vmatprep.subr.bf16.mxu0 0
  %1184 = vmatpush1.bf16.msra.mxu0 0
  %1185 = vmatprep.subr.bf16.mxu0 0
  %1186 = vmatpush1.bf16.msra.mxu0 %v290
  %1187 = vmatprep.subr.bf16.mxu0 0
  %1188 = vmatpush1.bf16.msra.mxu0 %v289
  %1189 = vmatprep.subr.bf16.mxu0 0
  %1190 = vmatpush2.bf16.msra.mxu0 0
  %1191 = vmatprep.subr.bf16.mxu0 0
  %1192 = vmatpush2.bf16.msra.mxu0 0
  %1193 = vmatprep.subr.bf16.mxu0 0
  %1194 = vmatpush2.bf16.msra.mxu0 0
  %1195 = vmatprep.subr.bf16.mxu0 0
  %1196 = vmatpush2.bf16.msra.mxu0 0
  %1197 = vmatprep.subr.bf16.mxu0 0
  %1198 = vmatpush2.bf16.msra.mxu0 0
  %1199 = vmatprep.subr.bf16.mxu0 0
  %1200 = vmatpush2.bf16.msra.mxu0 0
  %1201 = vmatprep.subr.bf16.mxu0 0
  %1202 = vmatpush2.bf16.msra.mxu0 0
  %1203 = vmatprep.subr.bf16.mxu0 0
  %1204 = vmatpush2.bf16.msra.mxu0 0
  %1205 = vmatprep.mubr.bf16.mxu0 0
  %1206 = vmatmul.mubr.bf16.gmra.mxu0 %v1171
  %v1207 = vpop.f32.mrf.mxu0
  %v1208 = vadd.f32 0.0, %v1207
  %v1209 = vpop.f32.mrf.mxu0
  %v1210 = vpop.f32.mrf.mxu0
  %v1211 = vpop.f32.mrf.mxu0
  %1212 = vdwg.mxu0
  %v1213 = vadd.f32 %v271, %v1208
  %v1214 = vxor.u32 %v1213, 2147483648
  %v1215 = vmul.f32 %v1214, 1.442695
  %v1216 = vpow.pop %v1215
  %v1217 = vadd.f32 %v1216, 1.0
  %v1218 = vrcp.pop %v1217
  %v1219 = vmul.f32 1.0, %v1218
  %v1220 = vtanh.pop %v1213
  %v1221 = vmul.f32 %v1219, %v1159
  %1223 = vrot.lane.b32.xlu0 %v1220, 64
  %v1224 = vpop.permute.xlu0 %1223
  %v1226 = vmul.f32 %v1219, %v1224
  %1228 = vrot.lane.b32.xlu0 %v1226, 32
  %v1229 = vpop.permute.xlu0 %1228
  %v1231 = vadd.f32 %v1221, %v1229
  %v1232 = vtanh.pop %v1231
  %1234 = vrot.lane.b32.xlu0 %v1232, 64
  %v1235 = vpop.permute.xlu0 %1234
  %v1237 = vmul.f32 %v1219, %v1235
  %v1238 = vpack.c.bf16 %v1237, %v1237
  %1240 = vrot.lane.b32.xlu0 %v1238, 32
  %v1241 = vpop.permute.xlu0 %1240
  %v1243 = vsel %vm293, %v1241, 0
  %1245 = vmatprep.subr.bf16.mxu0 0
  %1246 = vmatpush1.bf16.msra.mxu0 0
  %1247 = vmatprep.subr.bf16.mxu0 0
  %1248 = vmatpush1.bf16.msra.mxu0 0
  %1249 = vmatprep.subr.bf16.mxu0 0
  %1250 = vmatpush1.bf16.msra.mxu0 0
  %1251 = vmatprep.subr.bf16.mxu0 0
  %1252 = vmatpush1.bf16.msra.mxu0 0
  %1253 = vmatprep.subr.bf16.mxu0 0
  %1254 = vmatpush1.bf16.msra.mxu0 0
  %1255 = vmatprep.subr.bf16.mxu0 0
  %1256 = vmatpush1.bf16.msra.mxu0 0
  %1257 = vmatprep.subr.bf16.mxu0 0
  %1258 = vmatpush1.bf16.msra.mxu0 %v290
  %1259 = vmatprep.subr.bf16.mxu0 0
  %1260 = vmatpush1.bf16.msra.mxu0 %v289
  %1261 = vmatprep.subr.bf16.mxu0 0
  %1262 = vmatpush2.bf16.msra.mxu0 0
  %1263 = vmatprep.subr.bf16.mxu0 0
  %1264 = vmatpush2.bf16.msra.mxu0 0
  %1265 = vmatprep.subr.bf16.mxu0 0
  %1266 = vmatpush2.bf16.msra.mxu0 0
  %1267 = vmatprep.subr.bf16.mxu0 0
  %1268 = vmatpush2.bf16.msra.mxu0 0
  %1269 = vmatprep.subr.bf16.mxu0 0
  %1270 = vmatpush2.bf16.msra.mxu0 0
  %1271 = vmatprep.subr.bf16.mxu0 0
  %1272 = vmatpush2.bf16.msra.mxu0 0
  %1273 = vmatprep.subr.bf16.mxu0 0
  %1274 = vmatpush2.bf16.msra.mxu0 0
  %1275 = vmatprep.subr.bf16.mxu0 0
  %1276 = vmatpush2.bf16.msra.mxu0 0
  %1277 = vmatprep.mubr.bf16.mxu0 0
  %1278 = vmatmul.mubr.bf16.gmra.mxu0 %v1243
  %v1279 = vpop.f32.mrf.mxu0
  %v1280 = vadd.f32 0.0, %v1279
  %v1281 = vpop.f32.mrf.mxu0
  %v1282 = vpop.f32.mrf.mxu0
  %v1283 = vpop.f32.mrf.mxu0
  %1284 = vdwg.mxu0
  %v1285 = vadd.f32 %v274, %v1280
  %v1286 = vxor.u32 %v1285, 2147483648
  %v1287 = vmul.f32 %v1286, 1.442695
  %v1288 = vpow.pop %v1287
  %v1289 = vadd.f32 %v1288, 1.0
  %v1290 = vrcp.pop %v1289
  %v1291 = vmul.f32 1.0, %v1290
  %v1292 = vtanh.pop %v1285
  %v1293 = vmul.f32 %v1291, %v1231
  %1295 = vrot.lane.b32.xlu0 %v1292, 64
  %v1296 = vpop.permute.xlu0 %1295
  %v1298 = vmul.f32 %v1291, %v1296
  %1300 = vrot.lane.b32.xlu0 %v1298, 32
  %v1301 = vpop.permute.xlu0 %1300
  %v1303 = vadd.f32 %v1293, %v1301
  %v1304 = vtanh.pop %v1303
  %1306 = vrot.lane.b32.xlu0 %v1304, 64
  %v1307 = vpop.permute.xlu0 %1306
  %v1309 = vmul.f32 %v1291, %v1307
  %v1312 = vunpack.c.l.s4 1966171168
  %v1313 = vunpack.c.0.s8 %v1312
  %v1314 = vlaneseq
  %v1315 = vshrl.u32 %v1314, 7
  %v1316 = vsub.s32 %v1313, %v1315
  %v1317 = vrot.slane %v386, %v1316
  %v1318 = vcombine.high %v1317, %v1317
  %v1320 = vunpack.c.l.s4 1966171168
  %v1321 = vunpack.c.0.s8 %v1320
  %v1322 = vlaneseq
  %v1323 = vshrl.u32 %v1322, 7
  %v1324 = vsub.s32 %v1321, %v1323
  %v1325 = vrot.slane %v1317, %v1324
  %v1327 = vunpack.c.l.s4 1966171168
  %v1328 = vunpack.c.0.s8 %v1327
  %v1329 = vlaneseq
  %v1330 = vshrl.u32 %v1329, 7
  %v1331 = vsub.s32 %v1328, %v1330
  %v1332 = vrot.slane %v1318, %v1331
  %v1337 = vunpack.c.l.s4 1966171168
  %v1338 = vunpack.c.0.s8 %v1337
  %v1339 = vlaneseq
  %v1340 = vshrl.u32 %v1339, 7
  %v1341 = vsub.s32 %v1338, %v1340
  %v1342 = vrot.slane %v484, %v1341
  %v1343 = vcombine.high %v1342, %v1342
  %v1345 = vunpack.c.l.s4 1966171168
  %v1346 = vunpack.c.0.s8 %v1345
  %v1347 = vlaneseq
  %v1348 = vshrl.u32 %v1347, 7
  %v1349 = vsub.s32 %v1346, %v1348
  %v1350 = vrot.slane %v1342, %v1349
  %v1352 = vunpack.c.l.s4 1966171168
  %v1353 = vunpack.c.0.s8 %v1352
  %v1354 = vlaneseq
  %v1355 = vshrl.u32 %v1354, 7
  %v1356 = vsub.s32 %v1353, %v1355
  %v1357 = vrot.slane %v1343, %v1356
  %v1360 = vunpack.c.l.s4 1966171168
  %v1361 = vunpack.c.0.s8 %v1360
  %v1362 = vlaneseq
  %v1363 = vshrl.u32 %v1362, 7
  %v1364 = vsub.s32 %v1361, %v1363
  %v1365 = vrot.slane %v582, %v1364
  %v1366 = vcombine.high %v1365, %v1365
  %v1368 = vunpack.c.l.s4 1966171168
  %v1369 = vunpack.c.0.s8 %v1368
  %v1370 = vlaneseq
  %v1371 = vshrl.u32 %v1370, 7
  %v1372 = vsub.s32 %v1369, %v1371
  %v1373 = vrot.slane %v1365, %v1372
  %v1375 = vunpack.c.l.s4 1966171168
  %v1376 = vunpack.c.0.s8 %v1375
  %v1377 = vlaneseq
  %v1378 = vshrl.u32 %v1377, 7
  %v1379 = vsub.s32 %v1376, %v1378
  %v1380 = vrot.slane %v1366, %v1379
  %v1383 = vunpack.c.l.s4 1966171168
  %v1384 = vunpack.c.0.s8 %v1383
  %v1385 = vlaneseq
  %v1386 = vshrl.u32 %v1385, 7
  %v1387 = vsub.s32 %v1384, %v1386
  %v1388 = vrot.slane %v680, %v1387
  %v1389 = vcombine.high %v1388, %v1388
  %v1391 = vunpack.c.l.s4 1966171168
  %v1392 = vunpack.c.0.s8 %v1391
  %v1393 = vlaneseq
  %v1394 = vshrl.u32 %v1393, 7
  %v1395 = vsub.s32 %v1392, %v1394
  %v1396 = vrot.slane %v1388, %v1395
  %v1398 = vunpack.c.l.s4 1966171168
  %v1399 = vunpack.c.0.s8 %v1398
  %v1400 = vlaneseq
  %v1401 = vshrl.u32 %v1400, 7
  %v1402 = vsub.s32 %v1399, %v1401
  %v1403 = vrot.slane %v1389, %v1402
  %v1406 = vunpack.c.l.s4 1966171168
  %v1407 = vunpack.c.0.s8 %v1406
  %v1408 = vlaneseq
  %v1409 = vshrl.u32 %v1408, 7
  %v1410 = vsub.s32 %v1407, %v1409
  %v1411 = vrot.slane %v778, %v1410
  %v1412 = vcombine.high %v1411, %v1411
  %v1414 = vunpack.c.l.s4 1966171168
  %v1415 = vunpack.c.0.s8 %v1414
  %v1416 = vlaneseq
  %v1417 = vshrl.u32 %v1416, 7
  %v1418 = vsub.s32 %v1415, %v1417
  %v1419 = vrot.slane %v1411, %v1418
  %v1421 = vunpack.c.l.s4 1966171168
  %v1422 = vunpack.c.0.s8 %v1421
  %v1423 = vlaneseq
  %v1424 = vshrl.u32 %v1423, 7
  %v1425 = vsub.s32 %v1422, %v1424
  %v1426 = vrot.slane %v1412, %v1425
  %v1429 = vunpack.c.l.s4 1966171168
  %v1430 = vunpack.c.0.s8 %v1429
  %v1431 = vlaneseq
  %v1432 = vshrl.u32 %v1431, 7
  %v1433 = vsub.s32 %v1430, %v1432
  %v1434 = vrot.slane %v876, %v1433
  %v1435 = vcombine.high %v1434, %v1434
  %v1437 = vunpack.c.l.s4 1966171168
  %v1438 = vunpack.c.0.s8 %v1437
  %v1439 = vlaneseq
  %v1440 = vshrl.u32 %v1439, 7
  %v1441 = vsub.s32 %v1438, %v1440
  %v1442 = vrot.slane %v1434, %v1441
  %v1444 = vunpack.c.l.s4 1966171168
  %v1445 = vunpack.c.0.s8 %v1444
  %v1446 = vlaneseq
  %v1447 = vshrl.u32 %v1446, 7
  %v1448 = vsub.s32 %v1445, %v1447
  %v1449 = vrot.slane %v1435, %v1448
  %v1452 = vunpack.c.l.s4 1966171168
  %v1453 = vunpack.c.0.s8 %v1452
  %v1454 = vlaneseq
  %v1455 = vshrl.u32 %v1454, 7
  %v1456 = vsub.s32 %v1453, %v1455
  %v1457 = vrot.slane %v949, %v1456
  %v1458 = vcombine.high %v1457, %v1457
  %v1460 = vunpack.c.l.s4 1966171168
  %v1461 = vunpack.c.0.s8 %v1460
  %v1462 = vlaneseq
  %v1463 = vshrl.u32 %v1462, 7
  %v1464 = vsub.s32 %v1461, %v1463
  %v1465 = vrot.slane %v1457, %v1464
  %v1467 = vunpack.c.l.s4 1966171168
  %v1468 = vunpack.c.0.s8 %v1467
  %v1469 = vlaneseq
  %v1470 = vshrl.u32 %v1469, 7
  %v1471 = vsub.s32 %v1468, %v1470
  %v1472 = vrot.slane %v1458, %v1471
  %v1475 = vunpack.c.l.s4 1966171168
  %v1476 = vunpack.c.0.s8 %v1475
  %v1477 = vlaneseq
  %v1478 = vshrl.u32 %v1477, 7
  %v1479 = vsub.s32 %v1476, %v1478
  %v1480 = vrot.slane %v1021, %v1479
  %v1481 = vcombine.high %v1480, %v1480
  %v1483 = vunpack.c.l.s4 1966171168
  %v1484 = vunpack.c.0.s8 %v1483
  %v1485 = vlaneseq
  %v1486 = vshrl.u32 %v1485, 7
  %v1487 = vsub.s32 %v1484, %v1486
  %v1488 = vrot.slane %v1480, %v1487
  %v1490 = vunpack.c.l.s4 1966171168
  %v1491 = vunpack.c.0.s8 %v1490
  %v1492 = vlaneseq
  %v1493 = vshrl.u32 %v1492, 7
  %v1494 = vsub.s32 %v1491, %v1493
  %v1495 = vrot.slane %v1481, %v1494
  %v1496 = vlaneseq
  %v1497 = vshrl.u32 %v1496, 7
  %v1498 = vsub.s32 0, %v1497
  %v1499 = vrot.slane %v1350, %v1498
  %v1500 = vlaneseq
  %v1501 = vshrl.u32 %v1500, 7
  %v1502 = vsub.s32 0, %v1501
  %v1503 = vrot.slane %v1357, %v1502
  %v1506 = vlaneseq
  %v1507 = vshrl.u32 %v1506, 7
  %v1508 = vsub.s32 0, %v1507
  %v1509 = vrot.slane %v1373, %v1508
  %v1510 = vlaneseq
  %v1511 = vshrl.u32 %v1510, 7
  %v1512 = vsub.s32 0, %v1511
  %v1513 = vrot.slane %v1380, %v1512
  %v1516 = vlaneseq
  %v1517 = vshrl.u32 %v1516, 7
  %v1518 = vsub.s32 0, %v1517
  %v1519 = vrot.slane %v1396, %v1518
  %v1520 = vlaneseq
  %v1521 = vshrl.u32 %v1520, 7
  %v1522 = vsub.s32 0, %v1521
  %v1523 = vrot.slane %v1403, %v1522
  %v1526 = vlaneseq
  %v1527 = vshrl.u32 %v1526, 7
  %v1528 = vsub.s32 0, %v1527
  %v1529 = vrot.slane %v1419, %v1528
  %v1530 = vlaneseq
  %v1531 = vshrl.u32 %v1530, 7
  %v1532 = vsub.s32 0, %v1531
  %v1533 = vrot.slane %v1426, %v1532
  %v1536 = vlaneseq
  %v1537 = vshrl.u32 %v1536, 7
  %v1538 = vsub.s32 0, %v1537
  %v1539 = vrot.slane %v1442, %v1538
  %v1540 = vlaneseq
  %v1541 = vshrl.u32 %v1540, 7
  %v1542 = vsub.s32 0, %v1541
  %v1543 = vrot.slane %v1449, %v1542
  %v1546 = vlaneseq
  %v1547 = vshrl.u32 %v1546, 7
  %v1548 = vsub.s32 0, %v1547
  %v1549 = vrot.slane %v1465, %v1548
  %v1550 = vlaneseq
  %v1551 = vshrl.u32 %v1550, 7
  %v1552 = vsub.s32 0, %v1551
  %v1553 = vrot.slane %v1472, %v1552
  %v1556 = vlaneseq
  %v1557 = vshrl.u32 %v1556, 7
  %v1558 = vsub.s32 0, %v1557
  %v1559 = vrot.slane %v1488, %v1558
  %v1560 = vlaneseq
  %v1561 = vshrl.u32 %v1560, 7
  %v1562 = vsub.s32 0, %v1561
  %v1563 = vrot.slane %v1495, %v1562
  %vm1566 = vcmask 1040384
  %v1567 = vsel %vm1566, %v1325, %v1499
  %v1568 = vsel %vm1566, %v1332, %v1503
  %vm1569 = vcmask 1041408
  %v1570 = vsel %vm1569, %v1567, %v1509
  %v1571 = vsel %vm1569, %v1568, %v1513
  %vm1572 = vcmask 1042432
  %v1573 = vsel %vm1572, %v1570, %v1519
  %v1574 = vsel %vm1572, %v1571, %v1523
  %vm1575 = vcmask 1043456
  %v1576 = vsel %vm1575, %v1573, %v1529
  %v1577 = vsel %vm1575, %v1574, %v1533
  %vm1578 = vcmask 1044480
  %v1579 = vsel %vm1578, %v1576, %v1539
  %v1580 = vsel %vm1578, %v1577, %v1543
  %vm1581 = vcmask 1045504
  %v1582 = vsel %vm1581, %v1579, %v1549
  %v1583 = vsel %vm1581, %v1580, %v1553
  %vm1584 = vcmask 1046528
  %v1585 = vsel %vm1584, %v1582, %v1559
  %v1586 = vsel %vm1584, %v1583, %v1563
  %v1589 = vlaneseq
  %v1590 = vshrl.u32 %v1589, 7
  %v1591 = vsub.s32 0, %v1590
  %v1592 = vrot.slane %v1325, %v1591
  %v1593 = vlaneseq
  %v1594 = vshrl.u32 %v1593, 7
  %v1595 = vsub.s32 0, %v1594
  %v1596 = vrot.slane %v1332, %v1595
  %v1599 = vsel %vm1566, %v1488, %v1549
  %v1600 = vsel %vm1566, %v1495, %v1553
  %v1601 = vsel %vm1569, %v1599, %v1539
  %v1602 = vsel %vm1569, %v1600, %v1543
  %v1603 = vsel %vm1572, %v1601, %v1529
  %v1604 = vsel %vm1572, %v1602, %v1533
  %v1605 = vsel %vm1575, %v1603, %v1519
  %v1606 = vsel %vm1575, %v1604, %v1523
  %v1607 = vsel %vm1578, %v1605, %v1509
  %v1608 = vsel %vm1578, %v1606, %v1513
  %v1609 = vsel %vm1581, %v1607, %v1499
  %v1610 = vsel %vm1581, %v1608, %v1503
  %v1611 = vsel %vm1584, %v1609, %v1592
  %v1612 = vsel %vm1584, %v1610, %v1596
  %1615 = vrot.lane.b32.xlu0 %v1585, 32
  %v1616 = vpop.permute.xlu0 %1615
  %1617 = vrot.lane.b32.xlu0 %v1586, 32
  %v1618 = vpop.permute.xlu0 %1617
  %1623 = vrot.lane.b32.xlu0 %v1611, 32
  %v1624 = vpop.permute.xlu0 %1623
  %1625 = vrot.lane.b32.xlu0 %v1612, 32
  %v1626 = vpop.permute.xlu0 %1625
  %vm1629 = vcmask 130048
  %v1630 = vsel %vm1629, %v1616, %v1624
  %v1631 = vsel %vm1629, %v1618, %v1626
  %v1634 = vunpack.c.l.s4 1966171168
  %v1635 = vunpack.c.0.s8 %v1634
  %v1636 = vlaneseq
  %v1637 = vshrl.u32 %v1636, 7
  %v1638 = vsub.s32 %v1635, %v1637
  %v1639 = vrot.slane %v1093, %v1638
  %v1640 = vcombine.high %v1639, %v1639
  %v1642 = vunpack.c.l.s4 1966171168
  %v1643 = vunpack.c.0.s8 %v1642
  %v1644 = vlaneseq
  %v1645 = vshrl.u32 %v1644, 7
  %v1646 = vsub.s32 %v1643, %v1645
  %v1647 = vrot.slane %v1639, %v1646
  %v1649 = vunpack.c.l.s4 1966171168
  %v1650 = vunpack.c.0.s8 %v1649
  %v1651 = vlaneseq
  %v1652 = vshrl.u32 %v1651, 7
  %v1653 = vsub.s32 %v1650, %v1652
  %v1654 = vrot.slane %v1640, %v1653
  %v1659 = vunpack.c.l.s4 1966171168
  %v1660 = vunpack.c.0.s8 %v1659
  %v1661 = vlaneseq
  %v1662 = vshrl.u32 %v1661, 7
  %v1663 = vsub.s32 %v1660, %v1662
  %v1664 = vrot.slane %v1165, %v1663
  %v1665 = vcombine.high %v1664, %v1664
  %v1667 = vunpack.c.l.s4 1966171168
  %v1668 = vunpack.c.0.s8 %v1667
  %v1669 = vlaneseq
  %v1670 = vshrl.u32 %v1669, 7
  %v1671 = vsub.s32 %v1668, %v1670
  %v1672 = vrot.slane %v1664, %v1671
  %v1674 = vunpack.c.l.s4 1966171168
  %v1675 = vunpack.c.0.s8 %v1674
  %v1676 = vlaneseq
  %v1677 = vshrl.u32 %v1676, 7
  %v1678 = vsub.s32 %v1675, %v1677
  %v1679 = vrot.slane %v1665, %v1678
  %v1682 = vunpack.c.l.s4 1966171168
  %v1683 = vunpack.c.0.s8 %v1682
  %v1684 = vlaneseq
  %v1685 = vshrl.u32 %v1684, 7
  %v1686 = vsub.s32 %v1683, %v1685
  %v1687 = vrot.slane %v1237, %v1686
  %v1688 = vcombine.high %v1687, %v1687
  %v1690 = vunpack.c.l.s4 1966171168
  %v1691 = vunpack.c.0.s8 %v1690
  %v1692 = vlaneseq
  %v1693 = vshrl.u32 %v1692, 7
  %v1694 = vsub.s32 %v1691, %v1693
  %v1695 = vrot.slane %v1687, %v1694
  %v1697 = vunpack.c.l.s4 1966171168
  %v1698 = vunpack.c.0.s8 %v1697
  %v1699 = vlaneseq
  %v1700 = vshrl.u32 %v1699, 7
  %v1701 = vsub.s32 %v1698, %v1700
  %v1702 = vrot.slane %v1688, %v1701
  %v1705 = vunpack.c.l.s4 1966171168
  %v1706 = vunpack.c.0.s8 %v1705
  %v1707 = vlaneseq
  %v1708 = vshrl.u32 %v1707, 7
  %v1709 = vsub.s32 %v1706, %v1708
  %v1710 = vrot.slane %v1309, %v1709
  %v1711 = vcombine.high %v1710, %v1710
  %v1713 = vunpack.c.l.s4 1966171168
  %v1714 = vunpack.c.0.s8 %v1713
  %v1715 = vlaneseq
  %v1716 = vshrl.u32 %v1715, 7
  %v1717 = vsub.s32 %v1714, %v1716
  %v1718 = vrot.slane %v1710, %v1717
  %v1720 = vunpack.c.l.s4 1966171168
  %v1721 = vunpack.c.0.s8 %v1720
  %v1722 = vlaneseq
  %v1723 = vshrl.u32 %v1722, 7
  %v1724 = vsub.s32 %v1721, %v1723
  %v1725 = vrot.slane %v1711, %v1724
  %v1726 = vlaneseq
  %v1727 = vshrl.u32 %v1726, 7
  %v1728 = vsub.s32 0, %v1727
  %v1729 = vrot.slane %v1672, %v1728
  %v1730 = vlaneseq
  %v1731 = vshrl.u32 %v1730, 7
  %v1732 = vsub.s32 0, %v1731
  %v1733 = vrot.slane %v1679, %v1732
  %v1736 = vlaneseq
  %v1737 = vshrl.u32 %v1736, 7
  %v1738 = vsub.s32 0, %v1737
  %v1739 = vrot.slane %v1695, %v1738
  %v1740 = vlaneseq
  %v1741 = vshrl.u32 %v1740, 7
  %v1742 = vsub.s32 0, %v1741
  %v1743 = vrot.slane %v1702, %v1742
  %v1746 = vlaneseq
  %v1747 = vshrl.u32 %v1746, 7
  %v1748 = vsub.s32 0, %v1747
  %v1749 = vrot.slane %v1718, %v1748
  %v1750 = vlaneseq
  %v1751 = vshrl.u32 %v1750, 7
  %v1752 = vsub.s32 0, %v1751
  %v1753 = vrot.slane %v1725, %v1752
  %v1756 = vsel %vm1566, %v1647, %v1729
  %v1757 = vsel %vm1566, %v1654, %v1733
  %v1758 = vsel %vm1569, %v1756, %v1739
  %v1759 = vsel %vm1569, %v1757, %v1743
  %v1760 = vsel %vm1572, %v1758, %v1749
  %v1761 = vsel %vm1572, %v1759, %v1753
  %v1764 = vlaneseq
  %v1765 = vshrl.u32 %v1764, 7
  %v1766 = vsub.s32 0, %v1765
  %v1767 = vrot.slane %v1647, %v1766
  %v1768 = vlaneseq
  %v1769 = vshrl.u32 %v1768, 7
  %v1770 = vsub.s32 0, %v1769
  %v1771 = vrot.slane %v1654, %v1770
  %v1774 = vsel %vm1566, %v1718, %v1739
  %v1775 = vsel %vm1566, %v1725, %v1743
  %v1776 = vsel %vm1569, %v1774, %v1729
  %v1777 = vsel %vm1569, %v1775, %v1733
  %v1778 = vsel %vm1572, %v1776, %v1767
  %v1779 = vsel %vm1572, %v1777, %v1771
  %1782 = vrot.lane.b32.xlu0 %v1760, 32
  %v1783 = vpop.permute.xlu0 %1782
  %1784 = vrot.lane.b32.xlu0 %v1761, 32
  %v1785 = vpop.permute.xlu0 %1784
  %1790 = vrot.lane.b32.xlu0 %v1778, 32
  %v1791 = vpop.permute.xlu0 %1790
  %1792 = vrot.lane.b32.xlu0 %v1779, 32
  %v1793 = vpop.permute.xlu0 %1792
  %v1796 = vsel %vm1629, %v1783, %v1791
  %v1797 = vsel %vm1629, %v1785, %v1793
  %v1800 = vunpack.c.l.s4 1966171168
  %v1801 = vunpack.c.0.s8 %v1800
  %v1802 = vlaneseq
  %v1803 = vshrl.u32 %v1802, 7
  %v1804 = vsub.s32 %v1801, %v1803
  %v1805 = vrot.slane %v387, %v1804
  %v1806 = vcombine.high %v1805, %v1805
  %v1808 = vunpack.c.l.s4 1966171168
  %v1809 = vunpack.c.0.s8 %v1808
  %v1810 = vlaneseq
  %v1811 = vshrl.u32 %v1810, 7
  %v1812 = vsub.s32 %v1809, %v1811
  %v1813 = vrot.slane %v1805, %v1812
  %v1815 = vunpack.c.l.s4 1966171168
  %v1816 = vunpack.c.0.s8 %v1815
  %v1817 = vlaneseq
  %v1818 = vshrl.u32 %v1817, 7
  %v1819 = vsub.s32 %v1816, %v1818
  %v1820 = vrot.slane %v1806, %v1819
  %v1825 = vunpack.c.l.s4 1966171168
  %v1826 = vunpack.c.0.s8 %v1825
  %v1827 = vlaneseq
  %v1828 = vshrl.u32 %v1827, 7
  %v1829 = vsub.s32 %v1826, %v1828
  %v1830 = vrot.slane %v485, %v1829
  %v1831 = vcombine.high %v1830, %v1830
  %v1833 = vunpack.c.l.s4 1966171168
  %v1834 = vunpack.c.0.s8 %v1833
  %v1835 = vlaneseq
  %v1836 = vshrl.u32 %v1835, 7
  %v1837 = vsub.s32 %v1834, %v1836
  %v1838 = vrot.slane %v1830, %v1837
  %v1840 = vunpack.c.l.s4 1966171168
  %v1841 = vunpack.c.0.s8 %v1840
  %v1842 = vlaneseq
  %v1843 = vshrl.u32 %v1842, 7
  %v1844 = vsub.s32 %v1841, %v1843
  %v1845 = vrot.slane %v1831, %v1844
  %v1848 = vunpack.c.l.s4 1966171168
  %v1849 = vunpack.c.0.s8 %v1848
  %v1850 = vlaneseq
  %v1851 = vshrl.u32 %v1850, 7
  %v1852 = vsub.s32 %v1849, %v1851
  %v1853 = vrot.slane %v583, %v1852
  %v1854 = vcombine.high %v1853, %v1853
  %v1856 = vunpack.c.l.s4 1966171168
  %v1857 = vunpack.c.0.s8 %v1856
  %v1858 = vlaneseq
  %v1859 = vshrl.u32 %v1858, 7
  %v1860 = vsub.s32 %v1857, %v1859
  %v1861 = vrot.slane %v1853, %v1860
  %v1863 = vunpack.c.l.s4 1966171168
  %v1864 = vunpack.c.0.s8 %v1863
  %v1865 = vlaneseq
  %v1866 = vshrl.u32 %v1865, 7
  %v1867 = vsub.s32 %v1864, %v1866
  %v1868 = vrot.slane %v1854, %v1867
  %v1871 = vunpack.c.l.s4 1966171168
  %v1872 = vunpack.c.0.s8 %v1871
  %v1873 = vlaneseq
  %v1874 = vshrl.u32 %v1873, 7
  %v1875 = vsub.s32 %v1872, %v1874
  %v1876 = vrot.slane %v681, %v1875
  %v1877 = vcombine.high %v1876, %v1876
  %v1879 = vunpack.c.l.s4 1966171168
  %v1880 = vunpack.c.0.s8 %v1879
  %v1881 = vlaneseq
  %v1882 = vshrl.u32 %v1881, 7
  %v1883 = vsub.s32 %v1880, %v1882
  %v1884 = vrot.slane %v1876, %v1883
  %v1886 = vunpack.c.l.s4 1966171168
  %v1887 = vunpack.c.0.s8 %v1886
  %v1888 = vlaneseq
  %v1889 = vshrl.u32 %v1888, 7
  %v1890 = vsub.s32 %v1887, %v1889
  %v1891 = vrot.slane %v1877, %v1890
  %v1894 = vunpack.c.l.s4 1966171168
  %v1895 = vunpack.c.0.s8 %v1894
  %v1896 = vlaneseq
  %v1897 = vshrl.u32 %v1896, 7
  %v1898 = vsub.s32 %v1895, %v1897
  %v1899 = vrot.slane %v779, %v1898
  %v1900 = vcombine.high %v1899, %v1899
  %v1902 = vunpack.c.l.s4 1966171168
  %v1903 = vunpack.c.0.s8 %v1902
  %v1904 = vlaneseq
  %v1905 = vshrl.u32 %v1904, 7
  %v1906 = vsub.s32 %v1903, %v1905
  %v1907 = vrot.slane %v1899, %v1906
  %v1909 = vunpack.c.l.s4 1966171168
  %v1910 = vunpack.c.0.s8 %v1909
  %v1911 = vlaneseq
  %v1912 = vshrl.u32 %v1911, 7
  %v1913 = vsub.s32 %v1910, %v1912
  %v1914 = vrot.slane %v1900, %v1913
  %v1917 = vunpack.c.l.s4 1966171168
  %v1918 = vunpack.c.0.s8 %v1917
  %v1919 = vlaneseq
  %v1920 = vshrl.u32 %v1919, 7
  %v1921 = vsub.s32 %v1918, %v1920
  %v1922 = vrot.slane %v877, %v1921
  %v1923 = vcombine.high %v1922, %v1922
  %v1925 = vunpack.c.l.s4 1966171168
  %v1926 = vunpack.c.0.s8 %v1925
  %v1927 = vlaneseq
  %v1928 = vshrl.u32 %v1927, 7
  %v1929 = vsub.s32 %v1926, %v1928
  %v1930 = vrot.slane %v1922, %v1929
  %v1932 = vunpack.c.l.s4 1966171168
  %v1933 = vunpack.c.0.s8 %v1932
  %v1934 = vlaneseq
  %v1935 = vshrl.u32 %v1934, 7
  %v1936 = vsub.s32 %v1933, %v1935
  %v1937 = vrot.slane %v1923, %v1936
  %v1938 = vlaneseq
  %v1939 = vshrl.u32 %v1938, 7
  %v1940 = vsub.s32 0, %v1939
  %v1941 = vrot.slane %v1838, %v1940
  %v1942 = vlaneseq
  %v1943 = vshrl.u32 %v1942, 7
  %v1944 = vsub.s32 0, %v1943
  %v1945 = vrot.slane %v1845, %v1944
  %v1948 = vlaneseq
  %v1949 = vshrl.u32 %v1948, 7
  %v1950 = vsub.s32 0, %v1949
  %v1951 = vrot.slane %v1861, %v1950
  %v1952 = vlaneseq
  %v1953 = vshrl.u32 %v1952, 7
  %v1954 = vsub.s32 0, %v1953
  %v1955 = vrot.slane %v1868, %v1954
  %v1958 = vlaneseq
  %v1959 = vshrl.u32 %v1958, 7
  %v1960 = vsub.s32 0, %v1959
  %v1961 = vrot.slane %v1884, %v1960
  %v1962 = vlaneseq
  %v1963 = vshrl.u32 %v1962, 7
  %v1964 = vsub.s32 0, %v1963
  %v1965 = vrot.slane %v1891, %v1964
  %v1968 = vlaneseq
  %v1969 = vshrl.u32 %v1968, 7
  %v1970 = vsub.s32 0, %v1969
  %v1971 = vrot.slane %v1907, %v1970
  %v1972 = vlaneseq
  %v1973 = vshrl.u32 %v1972, 7
  %v1974 = vsub.s32 0, %v1973
  %v1975 = vrot.slane %v1914, %v1974
  %v1978 = vlaneseq
  %v1979 = vshrl.u32 %v1978, 7
  %v1980 = vsub.s32 0, %v1979
  %v1981 = vrot.slane %v1930, %v1980
  %v1982 = vlaneseq
  %v1983 = vshrl.u32 %v1982, 7
  %v1984 = vsub.s32 0, %v1983
  %v1985 = vrot.slane %v1937, %v1984
  %v1988 = vsel %vm1566, %v1813, %v1941
  %v1989 = vsel %vm1566, %v1820, %v1945
  %v1990 = vsel %vm1569, %v1988, %v1951
  %v1991 = vsel %vm1569, %v1989, %v1955
  %v1992 = vsel %vm1572, %v1990, %v1961
  %v1993 = vsel %vm1572, %v1991, %v1965
  %v1994 = vsel %vm1575, %v1992, %v1971
  %v1995 = vsel %vm1575, %v1993, %v1975
  %v1996 = vsel %vm1578, %v1994, %v1981
  %v1997 = vsel %vm1578, %v1995, %v1985
  %v2000 = vlaneseq
  %v2001 = vshrl.u32 %v2000, 7
  %v2002 = vsub.s32 0, %v2001
  %v2003 = vrot.slane %v1813, %v2002
  %v2004 = vlaneseq
  %v2005 = vshrl.u32 %v2004, 7
  %v2006 = vsub.s32 0, %v2005
  %v2007 = vrot.slane %v1820, %v2006
  %v2010 = vsel %vm1566, %v1930, %v1971
  %v2011 = vsel %vm1566, %v1937, %v1975
  %v2012 = vsel %vm1569, %v2010, %v1961
  %v2013 = vsel %vm1569, %v2011, %v1965
  %v2014 = vsel %vm1572, %v2012, %v1951
  %v2015 = vsel %vm1572, %v2013, %v1955
  %v2016 = vsel %vm1575, %v2014, %v1941
  %v2017 = vsel %vm1575, %v2015, %v1945
  %v2018 = vsel %vm1578, %v2016, %v2003
  %v2019 = vsel %vm1578, %v2017, %v2007
  %2022 = vrot.lane.b32.xlu0 %v1996, 32
  %v2023 = vpop.permute.xlu0 %2022
  %2024 = vrot.lane.b32.xlu0 %v1997, 32
  %v2025 = vpop.permute.xlu0 %2024
  %2030 = vrot.lane.b32.xlu0 %v2018, 32
  %v2031 = vpop.permute.xlu0 %2030
  %2032 = vrot.lane.b32.xlu0 %v2019, 32
  %v2033 = vpop.permute.xlu0 %2032
  %v2036 = vsel %vm1629, %v2023, %v2031
  %v2037 = vsel %vm1629, %v2025, %v2033
  %v2040 = vrot.slane %v2036, 4
  %v2041 = vrot.slane %v2037, 4
  %v2044 = vsel %vm1575, %v1796, %v2040
  %v2045 = vsel %vm1575, %v1797, %v2041
  %v2046 = vld [vmem:[%s4] sm:$0xf]
  %v2047 = vld [vmem:[%s4 + $0x4] sm:$0xf]
  %v2048 = vld [vmem:[%s4 + $0x8] sm:$0xf]
  %v2049 = vld [vmem:[%s4 + $0xc] sm:$0xf]
  %v2050 = vld [vmem:[%s5] sm:$0xf]
  %v2051 = vld [vmem:[%s5 + $0x4] sm:$0xf]
  %v2052 = vld [vmem:[%s5 + $0x8] sm:$0xf]
  %v2053 = vld [vmem:[%s5 + $0xc] sm:$0xf]
  %v2054 = vld [vmem:[%s5 + $0x10] sm:$0xf]
  %v2055 = vld [vmem:[%s5 + $0x14] sm:$0xf]
  %v2056 = vld [vmem:[%s5 + $0x18] sm:$0xf]
  %v2057 = vld [vmem:[%s5 + $0x1c] sm:$0xf]
  %v2058 = vld [vmem:[%s7] sm:$0xf]
  %v2059 = vld [vmem:[%s7 + $0x4] sm:$0xf]
  %v2060 = vld [vmem:[%s7 + $0x8] sm:$0xf]
  %v2061 = vld [vmem:[%s7 + $0xc] sm:$0xf]
  %v2062 = vld [vmem:[%s7 + $0x10] sm:$0xf]
  %v2063 = vld [vmem:[%s7 + $0x14] sm:$0xf]
  %v2064 = vld [vmem:[%s7 + $0x18] sm:$0xf]
  %v2065 = vld [vmem:[%s7 + $0x1c] sm:$0xf]
  %v2066 = vld [vmem:[%s7 + $0x20] sm:$0xf]
  %v2067 = vld [vmem:[%s7 + $0x24] sm:$0xf]
  %v2068 = vld [vmem:[%s7 + $0x28] sm:$0xf]
  %v2069 = vld [vmem:[%s7 + $0x2c] sm:$0xf]
  %v2070 = vld [vmem:[%s7 + $0x30] sm:$0xf]
  %v2071 = vld [vmem:[%s7 + $0x34] sm:$0xf]
  %v2072 = vld [vmem:[%s7 + $0x38] sm:$0xf]
  %v2073 = vld [vmem:[%s7 + $0x3c] sm:$0xf]
  %v2074 = vld [vmem:[%s7 + $0x40] sm:$0xf]
  %v2075 = vld [vmem:[%s7 + $0x44] sm:$0xf]
  %v2076 = vld [vmem:[%s7 + $0x48] sm:$0xf]
  %v2077 = vld [vmem:[%s7 + $0x4c] sm:$0xf]
  %v2078 = vld [vmem:[%s7 + $0x50] sm:$0xf]
  %v2079 = vld [vmem:[%s7 + $0x54] sm:$0xf]
  %v2080 = vld [vmem:[%s7 + $0x58] sm:$0xf]
  %v2081 = vld [vmem:[%s7 + $0x5c] sm:$0xf]
  %v2082 = vld [vmem:[%s9] sm:$0xf]
  %v2083 = vld [vmem:[%s9 + $0x4] sm:$0xf]
  %v2084 = vld [vmem:[%s9 + $0x8] sm:$0xf]
  %v2085 = vld [vmem:[%s9 + $0xc] sm:$0xf]
  %v2086 = vld [vmem:[%s9 + $0x10] sm:$0xf]
  %v2087 = vld [vmem:[%s9 + $0x14] sm:$0xf]
  %v2088 = vld [vmem:[%s9 + $0x18] sm:$0xf]
  %v2089 = vld [vmem:[%s9 + $0x1c] sm:$0xf]
  %v2090 = vld [vmem:[%s9 + $0x20] sm:$0xf]
  %v2091 = vld [vmem:[%s9 + $0x24] sm:$0xf]
  %v2092 = vld [vmem:[%s9 + $0x28] sm:$0xf]
  %v2093 = vld [vmem:[%s9 + $0x2c] sm:$0xf]
  %v2094 = vld [vmem:[%s9 + $0x30] sm:$0xf]
  %v2095 = vld [vmem:[%s9 + $0x34] sm:$0xf]
  %v2096 = vld [vmem:[%s9 + $0x38] sm:$0xf]
  %v2097 = vld [vmem:[%s9 + $0x3c] sm:$0xf]
  %v2098 = vld [vmem:[%s9 + $0x40] sm:$0xf]
  %v2099 = vld [vmem:[%s9 + $0x44] sm:$0xf]
  %v2100 = vld [vmem:[%s9 + $0x48] sm:$0xf]
  %v2101 = vld [vmem:[%s9 + $0x4c] sm:$0xf]
  %v2102 = vld [vmem:[%s9 + $0x50] sm:$0xf]
  %v2103 = vld [vmem:[%s9 + $0x54] sm:$0xf]
  %v2104 = vld [vmem:[%s9 + $0x58] sm:$0xf]
  %v2105 = vld [vmem:[%s9 + $0x5c] sm:$0xf]
  %v2106 = vld [vmem:[%s9 + $0x60] sm:$0xf]
  %v2107 = vld [vmem:[%s9 + $0x64] sm:$0xf]
  %v2108 = vld [vmem:[%s9 + $0x68] sm:$0xf]
  %v2109 = vld [vmem:[%s9 + $0x6c] sm:$0xf]
  %v2110 = vld [vmem:[%s9 + $0x70] sm:$0xf]
  %v2111 = vld [vmem:[%s9 + $0x74] sm:$0xf]
  %v2112 = vld [vmem:[%s9 + $0x78] sm:$0xf]
  %v2113 = vld [vmem:[%s9 + $0x7c] sm:$0xf]
  %v2114 = vld [vmem:[%s9 + $0x80] sm:$0xf]
  %v2115 = vld [vmem:[%s9 + $0x84] sm:$0xf]
  %v2116 = vld [vmem:[%s9 + $0x88] sm:$0xf]
  %v2117 = vld [vmem:[%s9 + $0x8c] sm:$0xf]
  %v2118 = vld [vmem:[%s9 + $0x90] sm:$0xf]
  %v2119 = vld [vmem:[%s9 + $0x94] sm:$0xf]
  %v2120 = vld [vmem:[%s9 + $0x98] sm:$0xf]
  %v2121 = vld [vmem:[%s9 + $0x9c] sm:$0xf]
  %v2122 = vld [vmem:[%s6] sm:$0x1]
  %v2123 = vld [vmem:[%s8] sm:$0x1]
  %v2124 = vld [vmem:[%s10] sm:$0x1]
  %v2125 = vld [vmem:[%s11] sm:$0x1]
  %v2126 = vpack.c.bf16 %v1630, %v1630
  %v2127 = vpack.c.bf16 %v2040, %v2044
  %v2132 = vunpack.c.l.b16 %v2046
  %v2133 = vunpack.c.l.b16 %v2047
  %v2134 = vunpack.c.l.b16 %v2048
  %v2135 = vunpack.c.l.b16 %v2049
  %v2136 = vpack.c.b16 %v2133, %v2132
  %v2137 = vpack.c.b16 %v2135, %v2134
  %v2141 = vsel %vm293, %v2127, 0
  %2143 = vmatprep.subr.bf16.mxu0 0
  %2144 = vmatpush1.bf16.msra.mxu0 0
  %2145 = vmatprep.subr.bf16.mxu0 0
  %2146 = vmatpush1.bf16.msra.mxu0 0
  %2147 = vmatprep.subr.bf16.mxu0 0
  %2148 = vmatpush1.bf16.msra.mxu0 0
  %2149 = vmatprep.subr.bf16.mxu0 0
  %2150 = vmatpush1.bf16.msra.mxu0 0
  %2151 = vmatprep.subr.bf16.mxu0 0
  %2152 = vmatpush1.bf16.msra.mxu0 0
  %2153 = vmatprep.subr.bf16.mxu0 0
  %2154 = vmatpush1.bf16.msra.mxu0 0
  %2155 = vmatprep.subr.bf16.mxu0 0
  %2156 = vmatpush1.bf16.msra.mxu0 %v2137
  %2157 = vmatprep.subr.bf16.mxu0 0
  %2158 = vmatpush1.bf16.msra.mxu0 %v2136
  %2159 = vmatprep.subr.bf16.mxu0 0
  %2160 = vmatpush2.bf16.msra.mxu0 0
  %2161 = vmatprep.subr.bf16.mxu0 0
  %2162 = vmatpush2.bf16.msra.mxu0 0
  %2163 = vmatprep.subr.bf16.mxu0 0
  %2164 = vmatpush2.bf16.msra.mxu0 0
  %2165 = vmatprep.subr.bf16.mxu0 0
  %2166 = vmatpush2.bf16.msra.mxu0 0
  %2167 = vmatprep.subr.bf16.mxu0 0
  %2168 = vmatpush2.bf16.msra.mxu0 0
  %2169 = vmatprep.subr.bf16.mxu0 0
  %2170 = vmatpush2.bf16.msra.mxu0 0
  %2171 = vmatprep.subr.bf16.mxu0 0
  %2172 = vmatpush2.bf16.msra.mxu0 0
  %2173 = vmatprep.subr.bf16.mxu0 0
  %2174 = vmatpush2.bf16.msra.mxu0 0
  %2175 = vmatprep.mubr.bf16.mxu0 0
  %2176 = vmatmul.mubr.bf16.gmra.mxu0 %v2141
  %v2177 = vpop.f32.mrf.mxu0
  %v2178 = vadd.f32 0.0, %v2177
  %v2179 = vpop.f32.mrf.mxu0
  %v2180 = vpop.f32.mrf.mxu0
  %v2181 = vadd.f32 0.0, %v2180
  %v2182 = vpop.f32.mrf.mxu0
  %2183 = vdwg.mxu0
  %v2184 = vpack.c.bf16 %v2181, %v2178
  %v2186 = vsel %vm293, %v2184, 0
  %v2189 = vsel %vm293, %v2126, 0
  %2191 = vmatprep.subr.bf16.mxu0 0
  %2192 = vmatpush1.bf16.xpose.msra.mxu0 0
  %2193 = vmatprep.subr.bf16.mxu0 0
  %2194 = vmatpush1.bf16.xpose.msra.mxu0 0
  %2195 = vmatprep.subr.bf16.mxu0 0
  %2196 = vmatpush1.bf16.xpose.msra.mxu0 0
  %2197 = vmatprep.subr.bf16.mxu0 0
  %2198 = vmatpush1.bf16.xpose.msra.mxu0 0
  %2199 = vmatprep.subr.bf16.mxu0 0
  %2200 = vmatpush1.bf16.xpose.msra.mxu0 0
  %2201 = vmatprep.subr.bf16.mxu0 0
  %2202 = vmatpush1.bf16.xpose.msra.mxu0 0
  %2203 = vmatprep.subr.bf16.mxu0 0
  %2204 = vmatpush1.bf16.xpose.msra.mxu0 0
  %2205 = vmatprep.subr.bf16.mxu0 0
  %2206 = vmatpush1.bf16.xpose.msra.mxu0 %v2189
  %2207 = vmatprep.subr.bf16.mxu0 0
  %2208 = vmatpush2.bf16.xpose.msra.mxu0 0
  %2209 = vmatprep.subr.bf16.mxu0 0
  %2210 = vmatpush2.bf16.xpose.msra.mxu0 0
  %2211 = vmatprep.subr.bf16.mxu0 0
  %2212 = vmatpush2.bf16.xpose.msra.mxu0 0
  %2213 = vmatprep.subr.bf16.mxu0 0
  %2214 = vmatpush2.bf16.xpose.msra.mxu0 0
  %2215 = vmatprep.subr.bf16.mxu0 0
  %2216 = vmatpush2.bf16.xpose.msra.mxu0 0
  %2217 = vmatprep.subr.bf16.mxu0 0
  %2218 = vmatpush2.bf16.xpose.msra.mxu0 0
  %2219 = vmatprep.subr.bf16.mxu0 0
  %2220 = vmatpush2.bf16.xpose.msra.mxu0 0
  %2221 = vmatprep.subr.bf16.mxu0 0
  %2222 = vmatpush2.bf16.xpose.msra.mxu0 0
  %2223 = vmatprep.mubr.bf16.mxu0 0
  %2224 = vmatmul.mubr.bf16.gmra.mxu0 %v2186
  %v2225 = vpop.f32.mrf.mxu0
  %v2226 = vadd.f32 0.0, %v2225
  %v2227 = vpop.f32.mrf.mxu0
  %v2228 = vpop.f32.mrf.mxu0
  %v2229 = vadd.f32 0.0, %v2228
  %v2230 = vpop.f32.mrf.mxu0
  %2231 = vdwg.mxu0
  %v2232 = vmul.f32 %v2226, 0.31622776
  %v2233 = vmul.f32 %v2229, 0.31622776
  %vm2234 = vcmask 64512
  %v2235 = vsel %vm2234, %v2232, -inf
  %2236 = vmax.xlane.f32.xlu0 %v2235
  %v2237 = vpop.xlane.xlu0 %2236
  %vm2238 = vcmask 58368
  %v2239 = vsel %vm2238, %v2233, -inf
  %2240 = vmax.xlane.f32.xlu0 %v2239
  %v2241 = vpop.xlane.xlu0 %2240
  %v2242 = vsel %vm1569, %v2241, -inf
  %v2243 = vmax.f32 %v2237, %v2242
  %v2244 = vrot.slane %v2243, 4
  %v2245 = vmax.f32 %v2243, %v2244
  %v2246 = vrot.slane %v2245, 2
  %v2247 = vmax.f32 %v2245, %v2246
  %v2248 = vrot.slane %v2247, 1
  %v2249 = vmax.f32 %v2247, %v2248
  %v2250 = vsub.f32 %v2232, %v2249
  %v2251 = vsub.f32 %v2233, %v2249
  %v2252 = vmul.f32 %v2250, 1.442695
  %v2253 = vpow.pop %v2252
  %v2254 = vmul.f32 %v2251, 1.442695
  %v2255 = vpow.pop %v2254
  %v2256 = vsel %vm2234, %v2253, 0.0
  %2257 = vadd.xlane.f32.xlu0 %v2256
  %v2258 = vpop.xlane.xlu0 %2257
  %v2259 = vsel %vm2238, %v2255, 0.0
  %2260 = vadd.xlane.f32.xlu0 %v2259
  %v2261 = vpop.xlane.xlu0 %2260
  %v2262 = vsel %vm1569, %v2261, 0.0
  %v2263 = vadd.f32 %v2258, %v2262
  %v2264 = vrot.slane %v2263, 4
  %v2265 = vadd.f32 %v2263, %v2264
  %v2266 = vrot.slane %v2265, 2
  %v2267 = vadd.f32 %v2265, %v2266
  %v2268 = vrot.slane %v2267, 1
  %v2269 = vadd.f32 %v2267, %v2268
  %v2270 = vrcp.pop %v2269
  %v2271 = vmul.f32 %v2253, %v2270
  %v2272 = vmul.f32 %v2255, %v2270
  %v2273 = vpack.c.bf16 %v2272, %v2271
  %2274 = vxpose.xlu0.c.b16.start [1/8] %v2273, 128
  %2275 = vxpose.xlu0.c.b16.cont [2/8] 0, 128
  %2276 = vxpose.xlu0.c.b16.cont [3/8] 0, 128
  %2277 = vxpose.xlu0.c.b16.cont [4/8] 0, 128
  %2278 = vxpose.xlu0.c.b16.cont [5/8] 0, 128
  %2279 = vxpose.xlu0.c.b16.cont [6/8] 0, 128
  %2280 = vxpose.xlu0.c.b16.cont [7/8] 0, 128
  %2281 = vxpose.xlu0.c.b16.end [8/8] 0, 128
  %v2282 = vpop.trf.xlu0
  %v2283 = vpop.trf.xlu0
  %v2284 = vpop.trf.xlu0
  %v2285 = vpop.trf.xlu0
  %v2286 = vpop.trf.xlu0
  %v2287 = vpop.trf.xlu0
  %v2288 = vpop.trf.xlu0
  %v2289 = vpop.trf.xlu0
  %vm2290 = vcmask 80896
  %v2292 = vsel %vm2290, %v2282, 0
  %v2294 = vsel %vm1578, %v2127, 0
  %2296 = vmatprep.subr.bf16.mxu0 0
  %2297 = vmatpush1.bf16.msra.mxu0 0
  %2298 = vmatprep.subr.bf16.mxu0 0
  %2299 = vmatpush1.bf16.msra.mxu0 0
  %2300 = vmatprep.subr.bf16.mxu0 0
  %2301 = vmatpush1.bf16.msra.mxu0 0
  %2302 = vmatprep.subr.bf16.mxu0 0
  %2303 = vmatpush1.bf16.msra.mxu0 0
  %2304 = vmatprep.subr.bf16.mxu0 0
  %2305 = vmatpush1.bf16.msra.mxu0 0
  %2306 = vmatprep.subr.bf16.mxu0 0
  %2307 = vmatpush1.bf16.msra.mxu0 0
  %2308 = vmatprep.subr.bf16.mxu0 0
  %2309 = vmatpush1.bf16.msra.mxu0 0
  %2310 = vmatprep.subr.bf16.mxu0 0
  %2311 = vmatpush1.bf16.msra.mxu0 %v2294
  %2312 = vmatprep.subr.bf16.mxu0 0
  %2313 = vmatpush2.bf16.msra.mxu0 0
  %2314 = vmatprep.subr.bf16.mxu0 0
  %2315 = vmatpush2.bf16.msra.mxu0 0
  %2316 = vmatprep.subr.bf16.mxu0 0
  %2317 = vmatpush2.bf16.msra.mxu0 0
  %2318 = vmatprep.subr.bf16.mxu0 0
  %2319 = vmatpush2.bf16.msra.mxu0 0
  %2320 = vmatprep.subr.bf16.mxu0 0
  %2321 = vmatpush2.bf16.msra.mxu0 0
  %2322 = vmatprep.subr.bf16.mxu0 0
  %2323 = vmatpush2.bf16.msra.mxu0 0
  %2324 = vmatprep.subr.bf16.mxu0 0
  %2325 = vmatpush2.bf16.msra.mxu0 0
  %2326 = vmatprep.subr.bf16.mxu0 0
  %2327 = vmatpush2.bf16.msra.mxu0 0
  %2328 = vmatprep.mubr.bf16.mxu0 0
  %2329 = vmatmul.mubr.bf16.gmra.mxu0 %v2292
  %v2330 = vpop.f32.mrf.mxu0
  %v2331 = vadd.f32 0.0, %v2330
  %v2332 = vpop.f32.mrf.mxu0
  %v2333 = vpop.f32.mrf.mxu0
  %v2334 = vpop.f32.mrf.mxu0
  %2335 = vdwg.mxu0
  %2337 = vrot.lane.b32.xlu0 %v2331, 32
  %v2338 = vpop.permute.xlu0 %2337
  %v2340 = vsel %vm293, %v1630, %v2338
  %v2341 = vpack.c.bf16 %v2340, %v2340
  %v2343 = vlaneseq
  %v2344 = vshrl.u32 %v2343, 7
  %v2345 = vsub.s32 0, %v2344
  %v2346 = vrot.slane %v2122, %v2345
  %v2356 = vunpack.c.l.b16 %v2050
  %v2357 = vunpack.c.l.b16 %v2051
  %v2358 = vunpack.c.l.b16 %v2052
  %v2359 = vunpack.c.l.b16 %v2053
  %v2360 = vunpack.c.l.b16 %v2054
  %v2361 = vunpack.c.l.b16 %v2055
  %v2362 = vunpack.c.l.b16 %v2056
  %v2363 = vunpack.c.l.b16 %v2057
  %v2364 = vpack.c.b16 %v2357, %v2356
  %v2365 = vpack.c.b16 %v2359, %v2358
  %v2366 = vpack.c.b16 %v2361, %v2360
  %v2367 = vpack.c.b16 %v2363, %v2362
  %v2373 = vsel %vm144, %v2341, 0
  %2375 = vmatprep.subr.bf16.mxu0 0
  %2376 = vmatpush1.bf16.msra.mxu0 0
  %2377 = vmatprep.subr.bf16.mxu0 0
  %2378 = vmatpush1.bf16.msra.mxu0 0
  %2379 = vmatprep.subr.bf16.mxu0 0
  %2380 = vmatpush1.bf16.msra.mxu0 0
  %2381 = vmatprep.subr.bf16.mxu0 0
  %2382 = vmatpush1.bf16.msra.mxu0 0
  %2383 = vmatprep.subr.bf16.mxu0 0
  %2384 = vmatpush1.bf16.msra.mxu0 %v2367
  %2385 = vmatprep.subr.bf16.mxu0 0
  %2386 = vmatpush1.bf16.msra.mxu0 %v2366
  %2387 = vmatprep.subr.bf16.mxu0 0
  %2388 = vmatpush1.bf16.msra.mxu0 %v2365
  %2389 = vmatprep.subr.bf16.mxu0 0
  %2390 = vmatpush1.bf16.msra.mxu0 %v2364
  %2391 = vmatprep.subr.bf16.mxu0 0
  %2392 = vmatpush2.bf16.msra.mxu0 0
  %2393 = vmatprep.subr.bf16.mxu0 0
  %2394 = vmatpush2.bf16.msra.mxu0 0
  %2395 = vmatprep.subr.bf16.mxu0 0
  %2396 = vmatpush2.bf16.msra.mxu0 0
  %2397 = vmatprep.subr.bf16.mxu0 0
  %2398 = vmatpush2.bf16.msra.mxu0 0
  %2399 = vmatprep.subr.bf16.mxu0 0
  %2400 = vmatpush2.bf16.msra.mxu0 0
  %2401 = vmatprep.subr.bf16.mxu0 0
  %2402 = vmatpush2.bf16.msra.mxu0 0
  %2403 = vmatprep.subr.bf16.mxu0 0
  %2404 = vmatpush2.bf16.msra.mxu0 0
  %2405 = vmatprep.subr.bf16.mxu0 0
  %2406 = vmatpush2.bf16.msra.mxu0 0
  %2407 = vmatprep.mubr.bf16.mxu0 0
  %2408 = vmatmul.mubr.bf16.gmra.mxu0 %v2373
  %v2409 = vpop.f32.mrf.mxu0
  %v2410 = vadd.f32 %v2346, %v2409
  %v2411 = vpop.f32.mrf.mxu0
  %v2412 = vpop.f32.mrf.mxu0
  %v2413 = vpop.f32.mrf.mxu0
  %2414 = vdwg.mxu0
  %v2415 = vmax.f32 %v2410, 0.0
  %vm2416 = vcmask 195584
  %v2417 = vsel %vm2416, %v2415, -inf
  %v2418 = vrot.slane %v2417, 4
  %v2419 = vmax.f32 %v2417, %v2418
  %v2420 = vrot.slane %v2419, 2
  %v2421 = vmax.f32 %v2419, %v2420
  %v2422 = vrot.slane %v2421, 1
  %v2423 = vmax.f32 %v2421, %v2422
  %v2432 = vunpack.c.l.b16 %v2058
  %v2433 = vunpack.c.l.b16 %v2059
  %v2434 = vunpack.c.l.b16 %v2060
  %v2435 = vunpack.c.l.b16 %v2061
  %v2436 = vunpack.c.l.b16 %v2062
  %v2437 = vunpack.c.l.b16 %v2063
  %v2438 = vunpack.c.l.b16 %v2064
  %v2439 = vunpack.c.l.b16 %v2065
  %v2440 = vpack.c.b16 %v2433, %v2432
  %v2441 = vpack.c.b16 %v2435, %v2434
  %v2442 = vpack.c.b16 %v2437, %v2436
  %v2443 = vpack.c.b16 %v2439, %v2438
  %2448 = vmatprep.subr.bf16.mxu0 0
  %2449 = vmatpush1.bf16.msra.mxu0 0
  %2450 = vmatprep.subr.bf16.mxu0 0
  %2451 = vmatpush1.bf16.msra.mxu0 0
  %2452 = vmatprep.subr.bf16.mxu0 0
  %2453 = vmatpush1.bf16.msra.mxu0 0
  %2454 = vmatprep.subr.bf16.mxu0 0
  %2455 = vmatpush1.bf16.msra.mxu0 0
  %2456 = vmatprep.subr.bf16.mxu0 0
  %2457 = vmatpush1.bf16.msra.mxu0 %v2443
  %2458 = vmatprep.subr.bf16.mxu0 0
  %2459 = vmatpush1.bf16.msra.mxu0 %v2442
  %2460 = vmatprep.subr.bf16.mxu0 0
  %2461 = vmatpush1.bf16.msra.mxu0 %v2441
  %2462 = vmatprep.subr.bf16.mxu0 0
  %2463 = vmatpush1.bf16.msra.mxu0 %v2440
  %2464 = vmatprep.subr.bf16.mxu0 0
  %2465 = vmatpush2.bf16.msra.mxu0 0
  %2466 = vmatprep.subr.bf16.mxu0 0
  %2467 = vmatpush2.bf16.msra.mxu0 0
  %2468 = vmatprep.subr.bf16.mxu0 0
  %2469 = vmatpush2.bf16.msra.mxu0 0
  %2470 = vmatprep.subr.bf16.mxu0 0
  %2471 = vmatpush2.bf16.msra.mxu0 0
  %2472 = vmatprep.subr.bf16.mxu0 0
  %2473 = vmatpush2.bf16.msra.mxu0 0
  %2474 = vmatprep.subr.bf16.mxu0 0
  %2475 = vmatpush2.bf16.msra.mxu0 0
  %2476 = vmatprep.subr.bf16.mxu0 0
  %2477 = vmatpush2.bf16.msra.mxu0 0
  %2478 = vmatprep.subr.bf16.mxu0 0
  %2479 = vmatpush2.bf16.msra.mxu0 0
  %2480 = vmatprep.mubr.bf16.mxu0 0
  %2481 = vmatmul.mubr.bf16.gmra.mxu0 %v2373
  %v2482 = vpop.f32.mrf.mxu0
  %v2483 = vadd.f32 0.0, %v2482
  %v2484 = vpop.f32.mrf.mxu0
  %v2485 = vpop.f32.mrf.mxu0
  %v2486 = vpop.f32.mrf.mxu0
  %2487 = vdwg.mxu0
  %v2496 = vunpack.c.l.b16 %v2066
  %v2497 = vunpack.c.l.b16 %v2067
  %v2498 = vunpack.c.l.b16 %v2068
  %v2499 = vunpack.c.l.b16 %v2069
  %v2500 = vunpack.c.l.b16 %v2070
  %v2501 = vunpack.c.l.b16 %v2071
  %v2502 = vunpack.c.l.b16 %v2072
  %v2503 = vunpack.c.l.b16 %v2073
  %v2504 = vpack.c.b16 %v2497, %v2496
  %v2505 = vpack.c.b16 %v2499, %v2498
  %v2506 = vpack.c.b16 %v2501, %v2500
  %v2507 = vpack.c.b16 %v2503, %v2502
  %2512 = vmatprep.subr.bf16.mxu0 0
  %2513 = vmatpush1.bf16.msra.mxu0 0
  %2514 = vmatprep.subr.bf16.mxu0 0
  %2515 = vmatpush1.bf16.msra.mxu0 0
  %2516 = vmatprep.subr.bf16.mxu0 0
  %2517 = vmatpush1.bf16.msra.mxu0 0
  %2518 = vmatprep.subr.bf16.mxu0 0
  %2519 = vmatpush1.bf16.msra.mxu0 0
  %2520 = vmatprep.subr.bf16.mxu0 0
  %2521 = vmatpush1.bf16.msra.mxu0 %v2507
  %2522 = vmatprep.subr.bf16.mxu0 0
  %2523 = vmatpush1.bf16.msra.mxu0 %v2506
  %2524 = vmatprep.subr.bf16.mxu0 0
  %2525 = vmatpush1.bf16.msra.mxu0 %v2505
  %2526 = vmatprep.subr.bf16.mxu0 0
  %2527 = vmatpush1.bf16.msra.mxu0 %v2504
  %2528 = vmatprep.subr.bf16.mxu0 0
  %2529 = vmatpush2.bf16.msra.mxu0 0
  %2530 = vmatprep.subr.bf16.mxu0 0
  %2531 = vmatpush2.bf16.msra.mxu0 0
  %2532 = vmatprep.subr.bf16.mxu0 0
  %2533 = vmatpush2.bf16.msra.mxu0 0
  %2534 = vmatprep.subr.bf16.mxu0 0
  %2535 = vmatpush2.bf16.msra.mxu0 0
  %2536 = vmatprep.subr.bf16.mxu0 0
  %2537 = vmatpush2.bf16.msra.mxu0 0
  %2538 = vmatprep.subr.bf16.mxu0 0
  %2539 = vmatpush2.bf16.msra.mxu0 0
  %2540 = vmatprep.subr.bf16.mxu0 0
  %2541 = vmatpush2.bf16.msra.mxu0 0
  %2542 = vmatprep.subr.bf16.mxu0 0
  %2543 = vmatpush2.bf16.msra.mxu0 0
  %2544 = vmatprep.mubr.bf16.mxu0 0
  %2545 = vmatmul.mubr.bf16.gmra.mxu0 %v2373
  %v2546 = vpop.f32.mrf.mxu0
  %v2547 = vadd.f32 0.0, %v2546
  %v2548 = vpop.f32.mrf.mxu0
  %v2549 = vpop.f32.mrf.mxu0
  %v2550 = vpop.f32.mrf.mxu0
  %2551 = vdwg.mxu0
  %v2560 = vunpack.c.l.b16 %v2074
  %v2561 = vunpack.c.l.b16 %v2075
  %v2562 = vunpack.c.l.b16 %v2076
  %v2563 = vunpack.c.l.b16 %v2077
  %v2564 = vunpack.c.l.b16 %v2078
  %v2565 = vunpack.c.l.b16 %v2079
  %v2566 = vunpack.c.l.b16 %v2080
  %v2567 = vunpack.c.l.b16 %v2081
  %v2568 = vpack.c.b16 %v2561, %v2560
  %v2569 = vpack.c.b16 %v2563, %v2562
  %v2570 = vpack.c.b16 %v2565, %v2564
  %v2571 = vpack.c.b16 %v2567, %v2566
  %2576 = vmatprep.subr.bf16.mxu0 0
  %2577 = vmatpush1.bf16.msra.mxu0 0
  %2578 = vmatprep.subr.bf16.mxu0 0
  %2579 = vmatpush1.bf16.msra.mxu0 0
  %2580 = vmatprep.subr.bf16.mxu0 0
  %2581 = vmatpush1.bf16.msra.mxu0 0
  %2582 = vmatprep.subr.bf16.mxu0 0
  %2583 = vmatpush1.bf16.msra.mxu0 0
  %2584 = vmatprep.subr.bf16.mxu0 0
  %2585 = vmatpush1.bf16.msra.mxu0 %v2571
  %2586 = vmatprep.subr.bf16.mxu0 0
  %2587 = vmatpush1.bf16.msra.mxu0 %v2570
  %2588 = vmatprep.subr.bf16.mxu0 0
  %2589 = vmatpush1.bf16.msra.mxu0 %v2569
  %2590 = vmatprep.subr.bf16.mxu0 0
  %2591 = vmatpush1.bf16.msra.mxu0 %v2568
  %2592 = vmatprep.subr.bf16.mxu0 0
  %2593 = vmatpush2.bf16.msra.mxu0 0
  %2594 = vmatprep.subr.bf16.mxu0 0
  %2595 = vmatpush2.bf16.msra.mxu0 0
  %2596 = vmatprep.subr.bf16.mxu0 0
  %2597 = vmatpush2.bf16.msra.mxu0 0
  %2598 = vmatprep.subr.bf16.mxu0 0
  %2599 = vmatpush2.bf16.msra.mxu0 0
  %2600 = vmatprep.subr.bf16.mxu0 0
  %2601 = vmatpush2.bf16.msra.mxu0 0
  %2602 = vmatprep.subr.bf16.mxu0 0
  %2603 = vmatpush2.bf16.msra.mxu0 0
  %2604 = vmatprep.subr.bf16.mxu0 0
  %2605 = vmatpush2.bf16.msra.mxu0 0
  %2606 = vmatprep.subr.bf16.mxu0 0
  %2607 = vmatpush2.bf16.msra.mxu0 0
  %2608 = vmatprep.mubr.bf16.mxu0 0
  %2609 = vmatmul.mubr.bf16.gmra.mxu0 %v2373
  %v2610 = vpop.f32.mrf.mxu0
  %v2611 = vadd.f32 0.0, %v2610
  %v2612 = vpop.f32.mrf.mxu0
  %v2613 = vpop.f32.mrf.mxu0
  %v2614 = vpop.f32.mrf.mxu0
  %2615 = vdwg.mxu0
  %v2617 = vrot.slane %v2547, 1
  %v2619 = vadd.f32 %v2483, %v2617
  %v2621 = vrot.slane %v2611, 2
  %v2623 = vadd.f32 %v2619, %v2621
  %v2625 = vlaneseq
  %v2626 = vshrl.u32 %v2625, 7
  %v2627 = vsub.s32 0, %v2626
  %v2628 = vrot.slane %v2123, %v2627
  %v2630 = vadd.f32 %v2623, %v2628
  %v2631 = vmax.f32 %v2630, 0.0
  %vm2632 = vcmask 193536
  %v2633 = vsel %vm2632, %v2631, -inf
  %v2634 = vrot.slane %v2633, 4
  %v2635 = vmax.f32 %v2633, %v2634
  %v2636 = vrot.slane %v2635, 2
  %v2637 = vmax.f32 %v2635, %v2636
  %v2638 = vrot.slane %v2637, 1
  %v2639 = vmax.f32 %v2637, %v2638
  %v2640 = vmax.f32 %v2423, %v2639
  %v2649 = vunpack.c.l.b16 %v2082
  %v2650 = vunpack.c.l.b16 %v2083
  %v2651 = vunpack.c.l.b16 %v2084
  %v2652 = vunpack.c.l.b16 %v2085
  %v2653 = vunpack.c.l.b16 %v2086
  %v2654 = vunpack.c.l.b16 %v2087
  %v2655 = vunpack.c.l.b16 %v2088
  %v2656 = vunpack.c.l.b16 %v2089
  %v2657 = vpack.c.b16 %v2650, %v2649
  %v2658 = vpack.c.b16 %v2652, %v2651
  %v2659 = vpack.c.b16 %v2654, %v2653
  %v2660 = vpack.c.b16 %v2656, %v2655
  %2665 = vmatprep.subr.bf16.mxu0 0
  %2666 = vmatpush1.bf16.msra.mxu0 0
  %2667 = vmatprep.subr.bf16.mxu0 0
  %2668 = vmatpush1.bf16.msra.mxu0 0
  %2669 = vmatprep.subr.bf16.mxu0 0
  %2670 = vmatpush1.bf16.msra.mxu0 0
  %2671 = vmatprep.subr.bf16.mxu0 0
  %2672 = vmatpush1.bf16.msra.mxu0 0
  %2673 = vmatprep.subr.bf16.mxu0 0
  %2674 = vmatpush1.bf16.msra.mxu0 %v2660
  %2675 = vmatprep.subr.bf16.mxu0 0
  %2676 = vmatpush1.bf16.msra.mxu0 %v2659
  %2677 = vmatprep.subr.bf16.mxu0 0
  %2678 = vmatpush1.bf16.msra.mxu0 %v2658
  %2679 = vmatprep.subr.bf16.mxu0 0
  %2680 = vmatpush1.bf16.msra.mxu0 %v2657
  %2681 = vmatprep.subr.bf16.mxu0 0
  %2682 = vmatpush2.bf16.msra.mxu0 0
  %2683 = vmatprep.subr.bf16.mxu0 0
  %2684 = vmatpush2.bf16.msra.mxu0 0
  %2685 = vmatprep.subr.bf16.mxu0 0
  %2686 = vmatpush2.bf16.msra.mxu0 0
  %2687 = vmatprep.subr.bf16.mxu0 0
  %2688 = vmatpush2.bf16.msra.mxu0 0
  %2689 = vmatprep.subr.bf16.mxu0 0
  %2690 = vmatpush2.bf16.msra.mxu0 0
  %2691 = vmatprep.subr.bf16.mxu0 0
  %2692 = vmatpush2.bf16.msra.mxu0 0
  %2693 = vmatprep.subr.bf16.mxu0 0
  %2694 = vmatpush2.bf16.msra.mxu0 0
  %2695 = vmatprep.subr.bf16.mxu0 0
  %2696 = vmatpush2.bf16.msra.mxu0 0
  %2697 = vmatprep.mubr.bf16.mxu0 0
  %2698 = vmatmul.mubr.bf16.gmra.mxu0 %v2373
  %v2699 = vpop.f32.mrf.mxu0
  %v2700 = vadd.f32 0.0, %v2699
  %v2701 = vpop.f32.mrf.mxu0
  %v2702 = vpop.f32.mrf.mxu0
  %v2703 = vpop.f32.mrf.mxu0
  %2704 = vdwg.mxu0
  %v2713 = vunpack.c.l.b16 %v2090
  %v2714 = vunpack.c.l.b16 %v2091
  %v2715 = vunpack.c.l.b16 %v2092
  %v2716 = vunpack.c.l.b16 %v2093
  %v2717 = vunpack.c.l.b16 %v2094
  %v2718 = vunpack.c.l.b16 %v2095
  %v2719 = vunpack.c.l.b16 %v2096
  %v2720 = vunpack.c.l.b16 %v2097
  %v2721 = vpack.c.b16 %v2714, %v2713
  %v2722 = vpack.c.b16 %v2716, %v2715
  %v2723 = vpack.c.b16 %v2718, %v2717
  %v2724 = vpack.c.b16 %v2720, %v2719
  %2729 = vmatprep.subr.bf16.mxu0 0
  %2730 = vmatpush1.bf16.msra.mxu0 0
  %2731 = vmatprep.subr.bf16.mxu0 0
  %2732 = vmatpush1.bf16.msra.mxu0 0
  %2733 = vmatprep.subr.bf16.mxu0 0
  %2734 = vmatpush1.bf16.msra.mxu0 0
  %2735 = vmatprep.subr.bf16.mxu0 0
  %2736 = vmatpush1.bf16.msra.mxu0 0
  %2737 = vmatprep.subr.bf16.mxu0 0
  %2738 = vmatpush1.bf16.msra.mxu0 %v2724
  %2739 = vmatprep.subr.bf16.mxu0 0
  %2740 = vmatpush1.bf16.msra.mxu0 %v2723
  %2741 = vmatprep.subr.bf16.mxu0 0
  %2742 = vmatpush1.bf16.msra.mxu0 %v2722
  %2743 = vmatprep.subr.bf16.mxu0 0
  %2744 = vmatpush1.bf16.msra.mxu0 %v2721
  %2745 = vmatprep.subr.bf16.mxu0 0
  %2746 = vmatpush2.bf16.msra.mxu0 0
  %2747 = vmatprep.subr.bf16.mxu0 0
  %2748 = vmatpush2.bf16.msra.mxu0 0
  %2749 = vmatprep.subr.bf16.mxu0 0
  %2750 = vmatpush2.bf16.msra.mxu0 0
  %2751 = vmatprep.subr.bf16.mxu0 0
  %2752 = vmatpush2.bf16.msra.mxu0 0
  %2753 = vmatprep.subr.bf16.mxu0 0
  %2754 = vmatpush2.bf16.msra.mxu0 0
  %2755 = vmatprep.subr.bf16.mxu0 0
  %2756 = vmatpush2.bf16.msra.mxu0 0
  %2757 = vmatprep.subr.bf16.mxu0 0
  %2758 = vmatpush2.bf16.msra.mxu0 0
  %2759 = vmatprep.subr.bf16.mxu0 0
  %2760 = vmatpush2.bf16.msra.mxu0 0
  %2761 = vmatprep.mubr.bf16.mxu0 0
  %2762 = vmatmul.mubr.bf16.gmra.mxu0 %v2373
  %v2763 = vpop.f32.mrf.mxu0
  %v2764 = vadd.f32 0.0, %v2763
  %v2765 = vpop.f32.mrf.mxu0
  %v2766 = vpop.f32.mrf.mxu0
  %v2767 = vpop.f32.mrf.mxu0
  %2768 = vdwg.mxu0
  %v2777 = vunpack.c.l.b16 %v2098
  %v2778 = vunpack.c.l.b16 %v2099
  %v2779 = vunpack.c.l.b16 %v2100
  %v2780 = vunpack.c.l.b16 %v2101
  %v2781 = vunpack.c.l.b16 %v2102
  %v2782 = vunpack.c.l.b16 %v2103
  %v2783 = vunpack.c.l.b16 %v2104
  %v2784 = vunpack.c.l.b16 %v2105
  %v2785 = vpack.c.b16 %v2778, %v2777
  %v2786 = vpack.c.b16 %v2780, %v2779
  %v2787 = vpack.c.b16 %v2782, %v2781
  %v2788 = vpack.c.b16 %v2784, %v2783
  %2793 = vmatprep.subr.bf16.mxu0 0
  %2794 = vmatpush1.bf16.msra.mxu0 0
  %2795 = vmatprep.subr.bf16.mxu0 0
  %2796 = vmatpush1.bf16.msra.mxu0 0
  %2797 = vmatprep.subr.bf16.mxu0 0
  %2798 = vmatpush1.bf16.msra.mxu0 0
  %2799 = vmatprep.subr.bf16.mxu0 0
  %2800 = vmatpush1.bf16.msra.mxu0 0
  %2801 = vmatprep.subr.bf16.mxu0 0
  %2802 = vmatpush1.bf16.msra.mxu0 %v2788
  %2803 = vmatprep.subr.bf16.mxu0 0
  %2804 = vmatpush1.bf16.msra.mxu0 %v2787
  %2805 = vmatprep.subr.bf16.mxu0 0
  %2806 = vmatpush1.bf16.msra.mxu0 %v2786
  %2807 = vmatprep.subr.bf16.mxu0 0
  %2808 = vmatpush1.bf16.msra.mxu0 %v2785
  %2809 = vmatprep.subr.bf16.mxu0 0
  %2810 = vmatpush2.bf16.msra.mxu0 0
  %2811 = vmatprep.subr.bf16.mxu0 0
  %2812 = vmatpush2.bf16.msra.mxu0 0
  %2813 = vmatprep.subr.bf16.mxu0 0
  %2814 = vmatpush2.bf16.msra.mxu0 0
  %2815 = vmatprep.subr.bf16.mxu0 0
  %2816 = vmatpush2.bf16.msra.mxu0 0
  %2817 = vmatprep.subr.bf16.mxu0 0
  %2818 = vmatpush2.bf16.msra.mxu0 0
  %2819 = vmatprep.subr.bf16.mxu0 0
  %2820 = vmatpush2.bf16.msra.mxu0 0
  %2821 = vmatprep.subr.bf16.mxu0 0
  %2822 = vmatpush2.bf16.msra.mxu0 0
  %2823 = vmatprep.subr.bf16.mxu0 0
  %2824 = vmatpush2.bf16.msra.mxu0 0
  %2825 = vmatprep.mubr.bf16.mxu0 0
  %2826 = vmatmul.mubr.bf16.gmra.mxu0 %v2373
  %v2827 = vpop.f32.mrf.mxu0
  %v2828 = vadd.f32 0.0, %v2827
  %v2829 = vpop.f32.mrf.mxu0
  %v2830 = vpop.f32.mrf.mxu0
  %v2831 = vpop.f32.mrf.mxu0
  %2832 = vdwg.mxu0
  %v2841 = vunpack.c.l.b16 %v2106
  %v2842 = vunpack.c.l.b16 %v2107
  %v2843 = vunpack.c.l.b16 %v2108
  %v2844 = vunpack.c.l.b16 %v2109
  %v2845 = vunpack.c.l.b16 %v2110
  %v2846 = vunpack.c.l.b16 %v2111
  %v2847 = vunpack.c.l.b16 %v2112
  %v2848 = vunpack.c.l.b16 %v2113
  %v2849 = vpack.c.b16 %v2842, %v2841
  %v2850 = vpack.c.b16 %v2844, %v2843
  %v2851 = vpack.c.b16 %v2846, %v2845
  %v2852 = vpack.c.b16 %v2848, %v2847
  %2857 = vmatprep.subr.bf16.mxu0 0
  %2858 = vmatpush1.bf16.msra.mxu0 0
  %2859 = vmatprep.subr.bf16.mxu0 0
  %2860 = vmatpush1.bf16.msra.mxu0 0
  %2861 = vmatprep.subr.bf16.mxu0 0
  %2862 = vmatpush1.bf16.msra.mxu0 0
  %2863 = vmatprep.subr.bf16.mxu0 0
  %2864 = vmatpush1.bf16.msra.mxu0 0
  %2865 = vmatprep.subr.bf16.mxu0 0
  %2866 = vmatpush1.bf16.msra.mxu0 %v2852
  %2867 = vmatprep.subr.bf16.mxu0 0
  %2868 = vmatpush1.bf16.msra.mxu0 %v2851
  %2869 = vmatprep.subr.bf16.mxu0 0
  %2870 = vmatpush1.bf16.msra.mxu0 %v2850
  %2871 = vmatprep.subr.bf16.mxu0 0
  %2872 = vmatpush1.bf16.msra.mxu0 %v2849
  %2873 = vmatprep.subr.bf16.mxu0 0
  %2874 = vmatpush2.bf16.msra.mxu0 0
  %2875 = vmatprep.subr.bf16.mxu0 0
  %2876 = vmatpush2.bf16.msra.mxu0 0
  %2877 = vmatprep.subr.bf16.mxu0 0
  %2878 = vmatpush2.bf16.msra.mxu0 0
  %2879 = vmatprep.subr.bf16.mxu0 0
  %2880 = vmatpush2.bf16.msra.mxu0 0
  %2881 = vmatprep.subr.bf16.mxu0 0
  %2882 = vmatpush2.bf16.msra.mxu0 0
  %2883 = vmatprep.subr.bf16.mxu0 0
  %2884 = vmatpush2.bf16.msra.mxu0 0
  %2885 = vmatprep.subr.bf16.mxu0 0
  %2886 = vmatpush2.bf16.msra.mxu0 0
  %2887 = vmatprep.subr.bf16.mxu0 0
  %2888 = vmatpush2.bf16.msra.mxu0 0
  %2889 = vmatprep.mubr.bf16.mxu0 0
  %2890 = vmatmul.mubr.bf16.gmra.mxu0 %v2373
  %v2891 = vpop.f32.mrf.mxu0
  %v2892 = vadd.f32 0.0, %v2891
  %v2893 = vpop.f32.mrf.mxu0
  %v2894 = vpop.f32.mrf.mxu0
  %v2895 = vpop.f32.mrf.mxu0
  %2896 = vdwg.mxu0
  %v2905 = vunpack.c.l.b16 %v2114
  %v2906 = vunpack.c.l.b16 %v2115
  %v2907 = vunpack.c.l.b16 %v2116
  %v2908 = vunpack.c.l.b16 %v2117
  %v2909 = vunpack.c.l.b16 %v2118
  %v2910 = vunpack.c.l.b16 %v2119
  %v2911 = vunpack.c.l.b16 %v2120
  %v2912 = vunpack.c.l.b16 %v2121
  %v2913 = vpack.c.b16 %v2906, %v2905
  %v2914 = vpack.c.b16 %v2908, %v2907
  %v2915 = vpack.c.b16 %v2910, %v2909
  %v2916 = vpack.c.b16 %v2912, %v2911
  %2921 = vmatprep.subr.bf16.mxu0 0
  %2922 = vmatpush1.bf16.msra.mxu0 0
  %2923 = vmatprep.subr.bf16.mxu0 0
  %2924 = vmatpush1.bf16.msra.mxu0 0
  %2925 = vmatprep.subr.bf16.mxu0 0
  %2926 = vmatpush1.bf16.msra.mxu0 0
  %2927 = vmatprep.subr.bf16.mxu0 0
  %2928 = vmatpush1.bf16.msra.mxu0 0
  %2929 = vmatprep.subr.bf16.mxu0 0
  %2930 = vmatpush1.bf16.msra.mxu0 %v2916
  %2931 = vmatprep.subr.bf16.mxu0 0
  %2932 = vmatpush1.bf16.msra.mxu0 %v2915
  %2933 = vmatprep.subr.bf16.mxu0 0
  %2934 = vmatpush1.bf16.msra.mxu0 %v2914
  %2935 = vmatprep.subr.bf16.mxu0 0
  %2936 = vmatpush1.bf16.msra.mxu0 %v2913
  %2937 = vmatprep.subr.bf16.mxu0 0
  %2938 = vmatpush2.bf16.msra.mxu0 0
  %2939 = vmatprep.subr.bf16.mxu0 0
  %2940 = vmatpush2.bf16.msra.mxu0 0
  %2941 = vmatprep.subr.bf16.mxu0 0
  %2942 = vmatpush2.bf16.msra.mxu0 0
  %2943 = vmatprep.subr.bf16.mxu0 0
  %2944 = vmatpush2.bf16.msra.mxu0 0
  %2945 = vmatprep.subr.bf16.mxu0 0
  %2946 = vmatpush2.bf16.msra.mxu0 0
  %2947 = vmatprep.subr.bf16.mxu0 0
  %2948 = vmatpush2.bf16.msra.mxu0 0
  %2949 = vmatprep.subr.bf16.mxu0 0
  %2950 = vmatpush2.bf16.msra.mxu0 0
  %2951 = vmatprep.subr.bf16.mxu0 0
  %2952 = vmatpush2.bf16.msra.mxu0 0
  %2953 = vmatprep.mubr.bf16.mxu0 0
  %2954 = vmatmul.mubr.bf16.gmra.mxu0 %v2373
  %v2955 = vpop.f32.mrf.mxu0
  %v2956 = vadd.f32 0.0, %v2955
  %v2957 = vpop.f32.mrf.mxu0
  %v2958 = vpop.f32.mrf.mxu0
  %v2959 = vpop.f32.mrf.mxu0
  %2960 = vdwg.mxu0
  %v2962 = vrot.slane %v2764, 1
  %v2964 = vadd.f32 %v2700, %v2962
  %v2966 = vrot.slane %v2828, 2
  %v2968 = vadd.f32 %v2964, %v2966
  %v2970 = vrot.slane %v2892, 3
  %v2972 = vadd.f32 %v2968, %v2970
  %v2974 = vrot.slane %v2956, 4
  %v2976 = vadd.f32 %v2972, %v2974
  %v2978 = vlaneseq
  %v2979 = vshrl.u32 %v2978, 7
  %v2980 = vsub.s32 0, %v2979
  %v2981 = vrot.slane %v2124, %v2980
  %v2983 = vadd.f32 %v2976, %v2981
  %v2984 = vmax.f32 %v2983, 0.0
  %vm2985 = vcmask 191488
  %v2986 = vsel %vm2985, %v2984, -inf
  %v2987 = vrot.slane %v2986, 4
  %v2988 = vmax.f32 %v2986, %v2987
  %v2989 = vrot.slane %v2988, 2
  %v2990 = vmax.f32 %v2988, %v2989
  %v2991 = vrot.slane %v2990, 1
  %v2992 = vmax.f32 %v2990, %v2991
  %v2993 = vmax.f32 %v2640, %v2992
  %v2994 = vmul.f32 %v2993, %v2125
  %vm2995 = vcmask 188416
  %v2996 = vsel %vm2995, %v2994, 0.0
  %2997 = vadd.xlane.f32.xlu0 %v2996
  %v2998 = vpop.xlane.xlu0 %2997
  %v2999 = vpack.c.bf16 %v1631, %v1631
  %v3000 = vpack.c.bf16 %v2041, %v2045
  %v3002 = vsel %vm293, %v3000, 0
  %3004 = vmatprep.subr.bf16.mxu0 0
  %3005 = vmatpush1.bf16.msra.mxu0 0
  %3006 = vmatprep.subr.bf16.mxu0 0
  %3007 = vmatpush1.bf16.msra.mxu0 0
  %3008 = vmatprep.subr.bf16.mxu0 0
  %3009 = vmatpush1.bf16.msra.mxu0 0
  %3010 = vmatprep.subr.bf16.mxu0 0
  %3011 = vmatpush1.bf16.msra.mxu0 0
  %3012 = vmatprep.subr.bf16.mxu0 0
  %3013 = vmatpush1.bf16.msra.mxu0 0
  %3014 = vmatprep.subr.bf16.mxu0 0
  %3015 = vmatpush1.bf16.msra.mxu0 0
  %3016 = vmatprep.subr.bf16.mxu0 0
  %3017 = vmatpush1.bf16.msra.mxu0 %v2137
  %3018 = vmatprep.subr.bf16.mxu0 0
  %3019 = vmatpush1.bf16.msra.mxu0 %v2136
  %3020 = vmatprep.subr.bf16.mxu0 0
  %3021 = vmatpush2.bf16.msra.mxu0 0
  %3022 = vmatprep.subr.bf16.mxu0 0
  %3023 = vmatpush2.bf16.msra.mxu0 0
  %3024 = vmatprep.subr.bf16.mxu0 0
  %3025 = vmatpush2.bf16.msra.mxu0 0
  %3026 = vmatprep.subr.bf16.mxu0 0
  %3027 = vmatpush2.bf16.msra.mxu0 0
  %3028 = vmatprep.subr.bf16.mxu0 0
  %3029 = vmatpush2.bf16.msra.mxu0 0
  %3030 = vmatprep.subr.bf16.mxu0 0
  %3031 = vmatpush2.bf16.msra.mxu0 0
  %3032 = vmatprep.subr.bf16.mxu0 0
  %3033 = vmatpush2.bf16.msra.mxu0 0
  %3034 = vmatprep.subr.bf16.mxu0 0
  %3035 = vmatpush2.bf16.msra.mxu0 0
  %3036 = vmatprep.mubr.bf16.mxu0 0
  %3037 = vmatmul.mubr.bf16.gmra.mxu0 %v3002
  %v3038 = vpop.f32.mrf.mxu0
  %v3039 = vadd.f32 0.0, %v3038
  %v3040 = vpop.f32.mrf.mxu0
  %v3041 = vpop.f32.mrf.mxu0
  %v3042 = vadd.f32 0.0, %v3041
  %v3043 = vpop.f32.mrf.mxu0
  %3044 = vdwg.mxu0
  %v3045 = vpack.c.bf16 %v3042, %v3039
  %v3047 = vsel %vm293, %v3045, 0
  %v3050 = vsel %vm293, %v2999, 0
  %3052 = vmatprep.subr.bf16.mxu0 0
  %3053 = vmatpush1.bf16.xpose.msra.mxu0 0
  %3054 = vmatprep.subr.bf16.mxu0 0
  %3055 = vmatpush1.bf16.xpose.msra.mxu0 0
  %3056 = vmatprep.subr.bf16.mxu0 0
  %3057 = vmatpush1.bf16.xpose.msra.mxu0 0
  %3058 = vmatprep.subr.bf16.mxu0 0
  %3059 = vmatpush1.bf16.xpose.msra.mxu0 0
  %3060 = vmatprep.subr.bf16.mxu0 0
  %3061 = vmatpush1.bf16.xpose.msra.mxu0 0
  %3062 = vmatprep.subr.bf16.mxu0 0
  %3063 = vmatpush1.bf16.xpose.msra.mxu0 0
  %3064 = vmatprep.subr.bf16.mxu0 0
  %3065 = vmatpush1.bf16.xpose.msra.mxu0 0
  %3066 = vmatprep.subr.bf16.mxu0 0
  %3067 = vmatpush1.bf16.xpose.msra.mxu0 %v3050
  %3068 = vmatprep.subr.bf16.mxu0 0
  %3069 = vmatpush2.bf16.xpose.msra.mxu0 0
  %3070 = vmatprep.subr.bf16.mxu0 0
  %3071 = vmatpush2.bf16.xpose.msra.mxu0 0
  %3072 = vmatprep.subr.bf16.mxu0 0
  %3073 = vmatpush2.bf16.xpose.msra.mxu0 0
  %3074 = vmatprep.subr.bf16.mxu0 0
  %3075 = vmatpush2.bf16.xpose.msra.mxu0 0
  %3076 = vmatprep.subr.bf16.mxu0 0
  %3077 = vmatpush2.bf16.xpose.msra.mxu0 0
  %3078 = vmatprep.subr.bf16.mxu0 0
  %3079 = vmatpush2.bf16.xpose.msra.mxu0 0
  %3080 = vmatprep.subr.bf16.mxu0 0
  %3081 = vmatpush2.bf16.xpose.msra.mxu0 0
  %3082 = vmatprep.subr.bf16.mxu0 0
  %3083 = vmatpush2.bf16.xpose.msra.mxu0 0
  %3084 = vmatprep.mubr.bf16.mxu0 0
  %3085 = vmatmul.mubr.bf16.gmra.mxu0 %v3047
  %v3086 = vpop.f32.mrf.mxu0
  %v3087 = vadd.f32 0.0, %v3086
  %v3088 = vpop.f32.mrf.mxu0
  %v3089 = vpop.f32.mrf.mxu0
  %v3090 = vadd.f32 0.0, %v3089
  %v3091 = vpop.f32.mrf.mxu0
  %3092 = vdwg.mxu0
  %v3093 = vmul.f32 %v3087, 0.31622776
  %v3094 = vmul.f32 %v3090, 0.31622776
  %v3095 = vsel %vm2234, %v3093, -inf
  %3096 = vmax.xlane.f32.xlu0 %v3095
  %v3097 = vpop.xlane.xlu0 %3096
  %v3098 = vsel %vm2238, %v3094, -inf
  %3099 = vmax.xlane.f32.xlu0 %v3098
  %v3100 = vpop.xlane.xlu0 %3099
  %v3101 = vsel %vm1569, %v3100, -inf
  %v3102 = vmax.f32 %v3097, %v3101
  %v3103 = vrot.slane %v3102, 4
  %v3104 = vmax.f32 %v3102, %v3103
  %v3105 = vrot.slane %v3104, 2
  %v3106 = vmax.f32 %v3104, %v3105
  %v3107 = vrot.slane %v3106, 1
  %v3108 = vmax.f32 %v3106, %v3107
  %v3109 = vsub.f32 %v3093, %v3108
  %v3110 = vsub.f32 %v3094, %v3108
  %v3111 = vmul.f32 %v3109, 1.442695
  %v3112 = vpow.pop %v3111
  %v3113 = vmul.f32 %v3110, 1.442695
  %v3114 = vpow.pop %v3113
  %v3115 = vsel %vm2234, %v3112, 0.0
  %3116 = vadd.xlane.f32.xlu0 %v3115
  %v3117 = vpop.xlane.xlu0 %3116
  %v3118 = vsel %vm2238, %v3114, 0.0
  %3119 = vadd.xlane.f32.xlu0 %v3118
  %v3120 = vpop.xlane.xlu0 %3119
  %v3121 = vsel %vm1569, %v3120, 0.0
  %v3122 = vadd.f32 %v3117, %v3121
  %v3123 = vrot.slane %v3122, 4
  %v3124 = vadd.f32 %v3122, %v3123
  %v3125 = vrot.slane %v3124, 2
  %v3126 = vadd.f32 %v3124, %v3125
  %v3127 = vrot.slane %v3126, 1
  %v3128 = vadd.f32 %v3126, %v3127
  %v3129 = vrcp.pop %v3128
  %v3130 = vmul.f32 %v3112, %v3129
  %v3131 = vmul.f32 %v3114, %v3129
  %v3132 = vpack.c.bf16 %v3131, %v3130
  %3133 = vxpose.xlu0.c.b16.start [1/8] %v3132, 128
  %3134 = vxpose.xlu0.c.b16.cont [2/8] 0, 128
  %3135 = vxpose.xlu0.c.b16.cont [3/8] 0, 128
  %3136 = vxpose.xlu0.c.b16.cont [4/8] 0, 128
  %3137 = vxpose.xlu0.c.b16.cont [5/8] 0, 128
  %3138 = vxpose.xlu0.c.b16.cont [6/8] 0, 128
  %3139 = vxpose.xlu0.c.b16.cont [7/8] 0, 128
  %3140 = vxpose.xlu0.c.b16.end [8/8] 0, 128
  %v3141 = vpop.trf.xlu0
  %v3142 = vpop.trf.xlu0
  %v3143 = vpop.trf.xlu0
  %v3144 = vpop.trf.xlu0
  %v3145 = vpop.trf.xlu0
  %v3146 = vpop.trf.xlu0
  %v3147 = vpop.trf.xlu0
  %v3148 = vpop.trf.xlu0
  %v3150 = vsel %vm2290, %v3141, 0
  %v3152 = vsel %vm1578, %v3000, 0
  %3154 = vmatprep.subr.bf16.mxu0 0
  %3155 = vmatpush1.bf16.msra.mxu0 0
  %3156 = vmatprep.subr.bf16.mxu0 0
  %3157 = vmatpush1.bf16.msra.mxu0 0
  %3158 = vmatprep.subr.bf16.mxu0 0
  %3159 = vmatpush1.bf16.msra.mxu0 0
  %3160 = vmatprep.subr.bf16.mxu0 0
  %3161 = vmatpush1.bf16.msra.mxu0 0
  %3162 = vmatprep.subr.bf16.mxu0 0
  %3163 = vmatpush1.bf16.msra.mxu0 0
  %3164 = vmatprep.subr.bf16.mxu0 0
  %3165 = vmatpush1.bf16.msra.mxu0 0
  %3166 = vmatprep.subr.bf16.mxu0 0
  %3167 = vmatpush1.bf16.msra.mxu0 0
  %3168 = vmatprep.subr.bf16.mxu0 0
  %3169 = vmatpush1.bf16.msra.mxu0 %v3152
  %3170 = vmatprep.subr.bf16.mxu0 0
  %3171 = vmatpush2.bf16.msra.mxu0 0
  %3172 = vmatprep.subr.bf16.mxu0 0
  %3173 = vmatpush2.bf16.msra.mxu0 0
  %3174 = vmatprep.subr.bf16.mxu0 0
  %3175 = vmatpush2.bf16.msra.mxu0 0
  %3176 = vmatprep.subr.bf16.mxu0 0
  %3177 = vmatpush2.bf16.msra.mxu0 0
  %3178 = vmatprep.subr.bf16.mxu0 0
  %3179 = vmatpush2.bf16.msra.mxu0 0
  %3180 = vmatprep.subr.bf16.mxu0 0
  %3181 = vmatpush2.bf16.msra.mxu0 0
  %3182 = vmatprep.subr.bf16.mxu0 0
  %3183 = vmatpush2.bf16.msra.mxu0 0
  %3184 = vmatprep.subr.bf16.mxu0 0
  %3185 = vmatpush2.bf16.msra.mxu0 0
  %3186 = vmatprep.mubr.bf16.mxu0 0
  %3187 = vmatmul.mubr.bf16.gmra.mxu0 %v3150
  %v3188 = vpop.f32.mrf.mxu0
  %v3189 = vadd.f32 0.0, %v3188
  %v3190 = vpop.f32.mrf.mxu0
  %v3191 = vpop.f32.mrf.mxu0
  %v3192 = vpop.f32.mrf.mxu0
  %3193 = vdwg.mxu0
  %3195 = vrot.lane.b32.xlu0 %v3189, 32
  %v3196 = vpop.permute.xlu0 %3195
  %v3198 = vsel %vm293, %v1631, %v3196
  %v3199 = vpack.c.bf16 %v3198, %v3198
  %v3201 = vsel %vm144, %v3199, 0
  %3203 = vmatprep.subr.bf16.mxu0 0
  %3204 = vmatpush1.bf16.msra.mxu0 0
  %3205 = vmatprep.subr.bf16.mxu0 0
  %3206 = vmatpush1.bf16.msra.mxu0 0
  %3207 = vmatprep.subr.bf16.mxu0 0
  %3208 = vmatpush1.bf16.msra.mxu0 0
  %3209 = vmatprep.subr.bf16.mxu0 0
  %3210 = vmatpush1.bf16.msra.mxu0 0
  %3211 = vmatprep.subr.bf16.mxu0 0
  %3212 = vmatpush1.bf16.msra.mxu0 %v2367
  %3213 = vmatprep.subr.bf16.mxu0 0
  %3214 = vmatpush1.bf16.msra.mxu0 %v2366
  %3215 = vmatprep.subr.bf16.mxu0 0
  %3216 = vmatpush1.bf16.msra.mxu0 %v2365
  %3217 = vmatprep.subr.bf16.mxu0 0
  %3218 = vmatpush1.bf16.msra.mxu0 %v2364
  %3219 = vmatprep.subr.bf16.mxu0 0
  %3220 = vmatpush2.bf16.msra.mxu0 0
  %3221 = vmatprep.subr.bf16.mxu0 0
  %3222 = vmatpush2.bf16.msra.mxu0 0
  %3223 = vmatprep.subr.bf16.mxu0 0
  %3224 = vmatpush2.bf16.msra.mxu0 0
  %3225 = vmatprep.subr.bf16.mxu0 0
  %3226 = vmatpush2.bf16.msra.mxu0 0
  %3227 = vmatprep.subr.bf16.mxu0 0
  %3228 = vmatpush2.bf16.msra.mxu0 0
  %3229 = vmatprep.subr.bf16.mxu0 0
  %3230 = vmatpush2.bf16.msra.mxu0 0
  %3231 = vmatprep.subr.bf16.mxu0 0
  %3232 = vmatpush2.bf16.msra.mxu0 0
  %3233 = vmatprep.subr.bf16.mxu0 0
  %3234 = vmatpush2.bf16.msra.mxu0 0
  %3235 = vmatprep.mubr.bf16.mxu0 0
  %3236 = vmatmul.mubr.bf16.gmra.mxu0 %v3201
  %v3237 = vpop.f32.mrf.mxu0
  %v3238 = vadd.f32 %v2346, %v3237
  %v3239 = vpop.f32.mrf.mxu0
  %v3240 = vpop.f32.mrf.mxu0
  %v3241 = vpop.f32.mrf.mxu0
  %3242 = vdwg.mxu0
  %v3243 = vmax.f32 %v3238, 0.0
  %v3244 = vsel %vm2416, %v3243, -inf
  %v3245 = vrot.slane %v3244, 4
  %v3246 = vmax.f32 %v3244, %v3245
  %v3247 = vrot.slane %v3246, 2
  %v3248 = vmax.f32 %v3246, %v3247
  %v3249 = vrot.slane %v3248, 1
  %v3250 = vmax.f32 %v3248, %v3249
  %3251 = vmatprep.subr.bf16.mxu0 0
  %3252 = vmatpush1.bf16.msra.mxu0 0
  %3253 = vmatprep.subr.bf16.mxu0 0
  %3254 = vmatpush1.bf16.msra.mxu0 0
  %3255 = vmatprep.subr.bf16.mxu0 0
  %3256 = vmatpush1.bf16.msra.mxu0 0
  %3257 = vmatprep.subr.bf16.mxu0 0
  %3258 = vmatpush1.bf16.msra.mxu0 0
  %3259 = vmatprep.subr.bf16.mxu0 0
  %3260 = vmatpush1.bf16.msra.mxu0 %v2443
  %3261 = vmatprep.subr.bf16.mxu0 0
  %3262 = vmatpush1.bf16.msra.mxu0 %v2442
  %3263 = vmatprep.subr.bf16.mxu0 0
  %3264 = vmatpush1.bf16.msra.mxu0 %v2441
  %3265 = vmatprep.subr.bf16.mxu0 0
  %3266 = vmatpush1.bf16.msra.mxu0 %v2440
  %3267 = vmatprep.subr.bf16.mxu0 0
  %3268 = vmatpush2.bf16.msra.mxu0 0
  %3269 = vmatprep.subr.bf16.mxu0 0
  %3270 = vmatpush2.bf16.msra.mxu0 0
  %3271 = vmatprep.subr.bf16.mxu0 0
  %3272 = vmatpush2.bf16.msra.mxu0 0
  %3273 = vmatprep.subr.bf16.mxu0 0
  %3274 = vmatpush2.bf16.msra.mxu0 0
  %3275 = vmatprep.subr.bf16.mxu0 0
  %3276 = vmatpush2.bf16.msra.mxu0 0
  %3277 = vmatprep.subr.bf16.mxu0 0
  %3278 = vmatpush2.bf16.msra.mxu0 0
  %3279 = vmatprep.subr.bf16.mxu0 0
  %3280 = vmatpush2.bf16.msra.mxu0 0
  %3281 = vmatprep.subr.bf16.mxu0 0
  %3282 = vmatpush2.bf16.msra.mxu0 0
  %3283 = vmatprep.mubr.bf16.mxu0 0
  %3284 = vmatmul.mubr.bf16.gmra.mxu0 %v3201
  %v3285 = vpop.f32.mrf.mxu0
  %v3286 = vadd.f32 0.0, %v3285
  %v3287 = vpop.f32.mrf.mxu0
  %v3288 = vpop.f32.mrf.mxu0
  %v3289 = vpop.f32.mrf.mxu0
  %3290 = vdwg.mxu0
  %3291 = vmatprep.subr.bf16.mxu0 0
  %3292 = vmatpush1.bf16.msra.mxu0 0
  %3293 = vmatprep.subr.bf16.mxu0 0
  %3294 = vmatpush1.bf16.msra.mxu0 0
  %3295 = vmatprep.subr.bf16.mxu0 0
  %3296 = vmatpush1.bf16.msra.mxu0 0
  %3297 = vmatprep.subr.bf16.mxu0 0
  %3298 = vmatpush1.bf16.msra.mxu0 0
  %3299 = vmatprep.subr.bf16.mxu0 0
  %3300 = vmatpush1.bf16.msra.mxu0 %v2507
  %3301 = vmatprep.subr.bf16.mxu0 0
  %3302 = vmatpush1.bf16.msra.mxu0 %v2506
  %3303 = vmatprep.subr.bf16.mxu0 0
  %3304 = vmatpush1.bf16.msra.mxu0 %v2505
  %3305 = vmatprep.subr.bf16.mxu0 0
  %3306 = vmatpush1.bf16.msra.mxu0 %v2504
  %3307 = vmatprep.subr.bf16.mxu0 0
  %3308 = vmatpush2.bf16.msra.mxu0 0
  %3309 = vmatprep.subr.bf16.mxu0 0
  %3310 = vmatpush2.bf16.msra.mxu0 0
  %3311 = vmatprep.subr.bf16.mxu0 0
  %3312 = vmatpush2.bf16.msra.mxu0 0
  %3313 = vmatprep.subr.bf16.mxu0 0
  %3314 = vmatpush2.bf16.msra.mxu0 0
  %3315 = vmatprep.subr.bf16.mxu0 0
  %3316 = vmatpush2.bf16.msra.mxu0 0
  %3317 = vmatprep.subr.bf16.mxu0 0
  %3318 = vmatpush2.bf16.msra.mxu0 0
  %3319 = vmatprep.subr.bf16.mxu0 0
  %3320 = vmatpush2.bf16.msra.mxu0 0
  %3321 = vmatprep.subr.bf16.mxu0 0
  %3322 = vmatpush2.bf16.msra.mxu0 0
  %3323 = vmatprep.mubr.bf16.mxu0 0
  %3324 = vmatmul.mubr.bf16.gmra.mxu0 %v3201
  %v3325 = vpop.f32.mrf.mxu0
  %v3326 = vadd.f32 0.0, %v3325
  %v3327 = vpop.f32.mrf.mxu0
  %v3328 = vpop.f32.mrf.mxu0
  %v3329 = vpop.f32.mrf.mxu0
  %3330 = vdwg.mxu0
  %3331 = vmatprep.subr.bf16.mxu0 0
  %3332 = vmatpush1.bf16.msra.mxu0 0
  %3333 = vmatprep.subr.bf16.mxu0 0
  %3334 = vmatpush1.bf16.msra.mxu0 0
  %3335 = vmatprep.subr.bf16.mxu0 0
  %3336 = vmatpush1.bf16.msra.mxu0 0
  %3337 = vmatprep.subr.bf16.mxu0 0
  %3338 = vmatpush1.bf16.msra.mxu0 0
  %3339 = vmatprep.subr.bf16.mxu0 0
  %3340 = vmatpush1.bf16.msra.mxu0 %v2571
  %3341 = vmatprep.subr.bf16.mxu0 0
  %3342 = vmatpush1.bf16.msra.mxu0 %v2570
  %3343 = vmatprep.subr.bf16.mxu0 0
  %3344 = vmatpush1.bf16.msra.mxu0 %v2569
  %3345 = vmatprep.subr.bf16.mxu0 0
  %3346 = vmatpush1.bf16.msra.mxu0 %v2568
  %3347 = vmatprep.subr.bf16.mxu0 0
  %3348 = vmatpush2.bf16.msra.mxu0 0
  %3349 = vmatprep.subr.bf16.mxu0 0
  %3350 = vmatpush2.bf16.msra.mxu0 0
  %3351 = vmatprep.subr.bf16.mxu0 0
  %3352 = vmatpush2.bf16.msra.mxu0 0
  %3353 = vmatprep.subr.bf16.mxu0 0
  %3354 = vmatpush2.bf16.msra.mxu0 0
  %3355 = vmatprep.subr.bf16.mxu0 0
  %3356 = vmatpush2.bf16.msra.mxu0 0
  %3357 = vmatprep.subr.bf16.mxu0 0
  %3358 = vmatpush2.bf16.msra.mxu0 0
  %3359 = vmatprep.subr.bf16.mxu0 0
  %3360 = vmatpush2.bf16.msra.mxu0 0
  %3361 = vmatprep.subr.bf16.mxu0 0
  %3362 = vmatpush2.bf16.msra.mxu0 0
  %3363 = vmatprep.mubr.bf16.mxu0 0
  %3364 = vmatmul.mubr.bf16.gmra.mxu0 %v3201
  %v3365 = vpop.f32.mrf.mxu0
  %v3366 = vadd.f32 0.0, %v3365
  %v3367 = vpop.f32.mrf.mxu0
  %v3368 = vpop.f32.mrf.mxu0
  %v3369 = vpop.f32.mrf.mxu0
  %3370 = vdwg.mxu0
  %v3372 = vrot.slane %v3326, 1
  %v3374 = vadd.f32 %v3286, %v3372
  %v3376 = vrot.slane %v3366, 2
  %v3378 = vadd.f32 %v3374, %v3376
  %v3379 = vadd.f32 %v3378, %v2628
  %v3380 = vmax.f32 %v3379, 0.0
  %v3381 = vsel %vm2632, %v3380, -inf
  %v3382 = vrot.slane %v3381, 4
  %v3383 = vmax.f32 %v3381, %v3382
  %v3384 = vrot.slane %v3383, 2
  %v3385 = vmax.f32 %v3383, %v3384
  %v3386 = vrot.slane %v3385, 1
  %v3387 = vmax.f32 %v3385, %v3386
  %v3388 = vmax.f32 %v3250, %v3387
  %3389 = vmatprep.subr.bf16.mxu0 0
  %3390 = vmatpush1.bf16.msra.mxu0 0
  %3391 = vmatprep.subr.bf16.mxu0 0
  %3392 = vmatpush1.bf16.msra.mxu0 0
  %3393 = vmatprep.subr.bf16.mxu0 0
  %3394 = vmatpush1.bf16.msra.mxu0 0
  %3395 = vmatprep.subr.bf16.mxu0 0
  %3396 = vmatpush1.bf16.msra.mxu0 0
  %3397 = vmatprep.subr.bf16.mxu0 0
  %3398 = vmatpush1.bf16.msra.mxu0 %v2660
  %3399 = vmatprep.subr.bf16.mxu0 0
  %3400 = vmatpush1.bf16.msra.mxu0 %v2659
  %3401 = vmatprep.subr.bf16.mxu0 0
  %3402 = vmatpush1.bf16.msra.mxu0 %v2658
  %3403 = vmatprep.subr.bf16.mxu0 0
  %3404 = vmatpush1.bf16.msra.mxu0 %v2657
  %3405 = vmatprep.subr.bf16.mxu0 0
  %3406 = vmatpush2.bf16.msra.mxu0 0
  %3407 = vmatprep.subr.bf16.mxu0 0
  %3408 = vmatpush2.bf16.msra.mxu0 0
  %3409 = vmatprep.subr.bf16.mxu0 0
  %3410 = vmatpush2.bf16.msra.mxu0 0
  %3411 = vmatprep.subr.bf16.mxu0 0
  %3412 = vmatpush2.bf16.msra.mxu0 0
  %3413 = vmatprep.subr.bf16.mxu0 0
  %3414 = vmatpush2.bf16.msra.mxu0 0
  %3415 = vmatprep.subr.bf16.mxu0 0
  %3416 = vmatpush2.bf16.msra.mxu0 0
  %3417 = vmatprep.subr.bf16.mxu0 0
  %3418 = vmatpush2.bf16.msra.mxu0 0
  %3419 = vmatprep.subr.bf16.mxu0 0
  %3420 = vmatpush2.bf16.msra.mxu0 0
  %3421 = vmatprep.mubr.bf16.mxu0 0
  %3422 = vmatmul.mubr.bf16.gmra.mxu0 %v3201
  %v3423 = vpop.f32.mrf.mxu0
  %v3424 = vadd.f32 0.0, %v3423
  %v3425 = vpop.f32.mrf.mxu0
  %v3426 = vpop.f32.mrf.mxu0
  %v3427 = vpop.f32.mrf.mxu0
  %3428 = vdwg.mxu0
  %3429 = vmatprep.subr.bf16.mxu0 0
  %3430 = vmatpush1.bf16.msra.mxu0 0
  %3431 = vmatprep.subr.bf16.mxu0 0
  %3432 = vmatpush1.bf16.msra.mxu0 0
  %3433 = vmatprep.subr.bf16.mxu0 0
  %3434 = vmatpush1.bf16.msra.mxu0 0
  %3435 = vmatprep.subr.bf16.mxu0 0
  %3436 = vmatpush1.bf16.msra.mxu0 0
  %3437 = vmatprep.subr.bf16.mxu0 0
  %3438 = vmatpush1.bf16.msra.mxu0 %v2724
  %3439 = vmatprep.subr.bf16.mxu0 0
  %3440 = vmatpush1.bf16.msra.mxu0 %v2723
  %3441 = vmatprep.subr.bf16.mxu0 0
  %3442 = vmatpush1.bf16.msra.mxu0 %v2722
  %3443 = vmatprep.subr.bf16.mxu0 0
  %3444 = vmatpush1.bf16.msra.mxu0 %v2721
  %3445 = vmatprep.subr.bf16.mxu0 0
  %3446 = vmatpush2.bf16.msra.mxu0 0
  %3447 = vmatprep.subr.bf16.mxu0 0
  %3448 = vmatpush2.bf16.msra.mxu0 0
  %3449 = vmatprep.subr.bf16.mxu0 0
  %3450 = vmatpush2.bf16.msra.mxu0 0
  %3451 = vmatprep.subr.bf16.mxu0 0
  %3452 = vmatpush2.bf16.msra.mxu0 0
  %3453 = vmatprep.subr.bf16.mxu0 0
  %3454 = vmatpush2.bf16.msra.mxu0 0
  %3455 = vmatprep.subr.bf16.mxu0 0
  %3456 = vmatpush2.bf16.msra.mxu0 0
  %3457 = vmatprep.subr.bf16.mxu0 0
  %3458 = vmatpush2.bf16.msra.mxu0 0
  %3459 = vmatprep.subr.bf16.mxu0 0
  %3460 = vmatpush2.bf16.msra.mxu0 0
  %3461 = vmatprep.mubr.bf16.mxu0 0
  %3462 = vmatmul.mubr.bf16.gmra.mxu0 %v3201
  %v3463 = vpop.f32.mrf.mxu0
  %v3464 = vadd.f32 0.0, %v3463
  %v3465 = vpop.f32.mrf.mxu0
  %v3466 = vpop.f32.mrf.mxu0
  %v3467 = vpop.f32.mrf.mxu0
  %3468 = vdwg.mxu0
  %3469 = vmatprep.subr.bf16.mxu0 0
  %3470 = vmatpush1.bf16.msra.mxu0 0
  %3471 = vmatprep.subr.bf16.mxu0 0
  %3472 = vmatpush1.bf16.msra.mxu0 0
  %3473 = vmatprep.subr.bf16.mxu0 0
  %3474 = vmatpush1.bf16.msra.mxu0 0
  %3475 = vmatprep.subr.bf16.mxu0 0
  %3476 = vmatpush1.bf16.msra.mxu0 0
  %3477 = vmatprep.subr.bf16.mxu0 0
  %3478 = vmatpush1.bf16.msra.mxu0 %v2788
  %3479 = vmatprep.subr.bf16.mxu0 0
  %3480 = vmatpush1.bf16.msra.mxu0 %v2787
  %3481 = vmatprep.subr.bf16.mxu0 0
  %3482 = vmatpush1.bf16.msra.mxu0 %v2786
  %3483 = vmatprep.subr.bf16.mxu0 0
  %3484 = vmatpush1.bf16.msra.mxu0 %v2785
  %3485 = vmatprep.subr.bf16.mxu0 0
  %3486 = vmatpush2.bf16.msra.mxu0 0
  %3487 = vmatprep.subr.bf16.mxu0 0
  %3488 = vmatpush2.bf16.msra.mxu0 0
  %3489 = vmatprep.subr.bf16.mxu0 0
  %3490 = vmatpush2.bf16.msra.mxu0 0
  %3491 = vmatprep.subr.bf16.mxu0 0
  %3492 = vmatpush2.bf16.msra.mxu0 0
  %3493 = vmatprep.subr.bf16.mxu0 0
  %3494 = vmatpush2.bf16.msra.mxu0 0
  %3495 = vmatprep.subr.bf16.mxu0 0
  %3496 = vmatpush2.bf16.msra.mxu0 0
  %3497 = vmatprep.subr.bf16.mxu0 0
  %3498 = vmatpush2.bf16.msra.mxu0 0
  %3499 = vmatprep.subr.bf16.mxu0 0
  %3500 = vmatpush2.bf16.msra.mxu0 0
  %3501 = vmatprep.mubr.bf16.mxu0 0
  %3502 = vmatmul.mubr.bf16.gmra.mxu0 %v3201
  %v3503 = vpop.f32.mrf.mxu0
  %v3504 = vadd.f32 0.0, %v3503
  %v3505 = vpop.f32.mrf.mxu0
  %v3506 = vpop.f32.mrf.mxu0
  %v3507 = vpop.f32.mrf.mxu0
  %3508 = vdwg.mxu0
  %3509 = vmatprep.subr.bf16.mxu0 0
  %3510 = vmatpush1.bf16.msra.mxu0 0
  %3511 = vmatprep.subr.bf16.mxu0 0
  %3512 = vmatpush1.bf16.msra.mxu0 0
  %3513 = vmatprep.subr.bf16.mxu0 0
  %3514 = vmatpush1.bf16.msra.mxu0 0
  %3515 = vmatprep.subr.bf16.mxu0 0
  %3516 = vmatpush1.bf16.msra.mxu0 0
  %3517 = vmatprep.subr.bf16.mxu0 0
  %3518 = vmatpush1.bf16.msra.mxu0 %v2852
  %3519 = vmatprep.subr.bf16.mxu0 0
  %3520 = vmatpush1.bf16.msra.mxu0 %v2851
  %3521 = vmatprep.subr.bf16.mxu0 0
  %3522 = vmatpush1.bf16.msra.mxu0 %v2850
  %3523 = vmatprep.subr.bf16.mxu0 0
  %3524 = vmatpush1.bf16.msra.mxu0 %v2849
  %3525 = vmatprep.subr.bf16.mxu0 0
  %3526 = vmatpush2.bf16.msra.mxu0 0
  %3527 = vmatprep.subr.bf16.mxu0 0
  %3528 = vmatpush2.bf16.msra.mxu0 0
  %3529 = vmatprep.subr.bf16.mxu0 0
  %3530 = vmatpush2.bf16.msra.mxu0 0
  %3531 = vmatprep.subr.bf16.mxu0 0
  %3532 = vmatpush2.bf16.msra.mxu0 0
  %3533 = vmatprep.subr.bf16.mxu0 0
  %3534 = vmatpush2.bf16.msra.mxu0 0
  %3535 = vmatprep.subr.bf16.mxu0 0
  %3536 = vmatpush2.bf16.msra.mxu0 0
  %3537 = vmatprep.subr.bf16.mxu0 0
  %3538 = vmatpush2.bf16.msra.mxu0 0
  %3539 = vmatprep.subr.bf16.mxu0 0
  %3540 = vmatpush2.bf16.msra.mxu0 0
  %3541 = vmatprep.mubr.bf16.mxu0 0
  %3542 = vmatmul.mubr.bf16.gmra.mxu0 %v3201
  %v3543 = vpop.f32.mrf.mxu0
  %v3544 = vadd.f32 0.0, %v3543
  %v3545 = vpop.f32.mrf.mxu0
  %v3546 = vpop.f32.mrf.mxu0
  %v3547 = vpop.f32.mrf.mxu0
  %3548 = vdwg.mxu0
  %3549 = vmatprep.subr.bf16.mxu0 0
  %3550 = vmatpush1.bf16.msra.mxu0 0
  %3551 = vmatprep.subr.bf16.mxu0 0
  %3552 = vmatpush1.bf16.msra.mxu0 0
  %3553 = vmatprep.subr.bf16.mxu0 0
  %3554 = vmatpush1.bf16.msra.mxu0 0
  %3555 = vmatprep.subr.bf16.mxu0 0
  %3556 = vmatpush1.bf16.msra.mxu0 0
  %3557 = vmatprep.subr.bf16.mxu0 0
  %3558 = vmatpush1.bf16.msra.mxu0 %v2916
  %3559 = vmatprep.subr.bf16.mxu0 0
  %3560 = vmatpush1.bf16.msra.mxu0 %v2915
  %3561 = vmatprep.subr.bf16.mxu0 0
  %3562 = vmatpush1.bf16.msra.mxu0 %v2914
  %3563 = vmatprep.subr.bf16.mxu0 0
  %3564 = vmatpush1.bf16.msra.mxu0 %v2913
  %3565 = vmatprep.subr.bf16.mxu0 0
  %3566 = vmatpush2.bf16.msra.mxu0 0
  %3567 = vmatprep.subr.bf16.mxu0 0
  %3568 = vmatpush2.bf16.msra.mxu0 0
  %3569 = vmatprep.subr.bf16.mxu0 0
  %3570 = vmatpush2.bf16.msra.mxu0 0
  %3571 = vmatprep.subr.bf16.mxu0 0
  %3572 = vmatpush2.bf16.msra.mxu0 0
  %3573 = vmatprep.subr.bf16.mxu0 0
  %3574 = vmatpush2.bf16.msra.mxu0 0
  %3575 = vmatprep.subr.bf16.mxu0 0
  %3576 = vmatpush2.bf16.msra.mxu0 0
  %3577 = vmatprep.subr.bf16.mxu0 0
  %3578 = vmatpush2.bf16.msra.mxu0 0
  %3579 = vmatprep.subr.bf16.mxu0 0
  %3580 = vmatpush2.bf16.msra.mxu0 0
  %3581 = vmatprep.mubr.bf16.mxu0 0
  %3582 = vmatmul.mubr.bf16.gmra.mxu0 %v3201
  %v3583 = vpop.f32.mrf.mxu0
  %v3584 = vadd.f32 0.0, %v3583
  %v3585 = vpop.f32.mrf.mxu0
  %v3586 = vpop.f32.mrf.mxu0
  %v3587 = vpop.f32.mrf.mxu0
  %3588 = vdwg.mxu0
  %v3590 = vrot.slane %v3464, 1
  %v3592 = vadd.f32 %v3424, %v3590
  %v3594 = vrot.slane %v3504, 2
  %v3596 = vadd.f32 %v3592, %v3594
  %v3598 = vrot.slane %v3544, 3
  %v3600 = vadd.f32 %v3596, %v3598
  %v3602 = vrot.slane %v3584, 4
  %v3604 = vadd.f32 %v3600, %v3602
  %v3605 = vadd.f32 %v3604, %v2981
  %v3606 = vmax.f32 %v3605, 0.0
  %v3607 = vsel %vm2985, %v3606, -inf
  %v3608 = vrot.slane %v3607, 4
  %v3609 = vmax.f32 %v3607, %v3608
  %v3610 = vrot.slane %v3609, 2
  %v3611 = vmax.f32 %v3609, %v3610
  %v3612 = vrot.slane %v3611, 1
  %v3613 = vmax.f32 %v3611, %v3612
  %v3614 = vmax.f32 %v3388, %v3613
  %v3615 = vmul.f32 %v3614, %v2125
  %v3616 = vsel %vm2995, %v3615, 0.0
  %3617 = vadd.xlane.f32.xlu0 %v3616
  %v3618 = vpop.xlane.xlu0 %3617
  %v3620 = vrot.slane %v3618, 7
  %v3622 = vsel %vm1566, %v2998, %v3620
  %vm3623 = vcmask 1024
  %3624 = vst.msk [vmem:[%s12] sm:$0x3] %vm3623, %v3622
  // Predicated region
  $region50: #{forward.1} parent=0 // pred_check
    _
  $region51: #{forward.1} parent=0 // pred_check_branch
    %3626 = sbr.rel (0) target = $region53
  $region52: #{forward.1} parent=0 // pred_region
    _
  $region53: #{forward.1} parent=0 // pred_fallthru
    _
  // Predicated region
  $region54: #{forward.1} parent=0 // pred_check
    _
  $region55: #{forward.1} parent=0 // pred_check_branch
    %3628 = sbr.rel (0) target = $region57
  $region56: #{forward.1} parent=0 // pred_region
    _
  $region57: #{forward.1} parent=0 // pred_fallthru
    _

</llo_original>
